<compile_context>
chip_gen: v5e
topology: v5e:2x2
jax: 0.10.0
libtpu: 0.0.40
codegen_flags: <defaults>
</compile_context>

<pallas_src>
import functools
import jax
import jax.numpy as jnp
from jax.experimental import pallas as pl
from jax.experimental.pallas import tpu as pltpu


def graph_conv_kernel(xrep_ref, x_ref, src_ref, dst_ref, ef_ref,
                      w1_ref, w2_ref, w3_ref, root_ref, ssum_ref, vecs_ref,
                      out_ref, acc_ref, deg_ref, *,
                      f_out, h1, h2, fio, n_nodes, neg_slope, eps):
    et = pl.program_id(0)
    cdt = xrep_ref.dtype                 # compute dtype for the big MXU operands (f32 or bf16)
    f32 = jnp.float32
    te = src_ref.shape[0]                # static edge-tile size

    @pl.when(et == 0)
    def _init():
        acc_ref[...] = jnp.zeros_like(acc_ref)
        deg_ref[...] = jnp.zeros_like(deg_ref)

    # packed per-feature row vectors: rows = [b1, b2, b3, bias, gamma, beta], zero-padded lanes
    b1 = vecs_ref[0:1, :h1]
    b2 = vecs_ref[1:2, :h2]
    b3 = vecs_ref[2:3, :fio]

    # ---- edge MLP on this E tile (f32; contraction dims are tiny, bf16 buys nothing) ----
    h = jax.nn.sigmoid(jnp.dot(ef_ref[...], w1_ref[...], preferred_element_type=f32) + b1)
    h = jax.nn.sigmoid(jnp.dot(h, w2_ref[...], preferred_element_type=f32) + b2)
    w = jnp.dot(h, w3_ref[...], preferred_element_type=f32) + b3            # (TE, fio)

    # ---- in-kernel gather: one-hot(src) @ x_rep -> lane-repeated x[src]  (TE, fio) ----
    src = src_ref[...]                                                      # (TE, 1) int32
    lane_n = jax.lax.broadcasted_iota(jnp.int32, (te, n_nodes), 1)
    oh_src = (lane_n == src).astype(cdt)                                    # (TE, N) exact 0/1
    rep = jnp.dot(oh_src, xrep_ref[...], preferred_element_type=f32)        # (TE, fio)

    # ---- per-edge messages, collapsed to f_out per tile ----
    prod = (rep * w).astype(cdt)                                            # (TE, fio)
    m = jnp.dot(prod, ssum_ref[...], preferred_element_type=f32)            # (TE, f_out)

    # ---- in-kernel scatter: one-hot(dst); padded edges have dst = -1 -> all-zero column ----
    dst = dst_ref[...]                                                      # (1, TE) int32
    sub_n = jax.lax.broadcasted_iota(jnp.int32, (n_nodes, te), 0)
    oh_dst_b = (sub_n == dst)                                               # (N, TE) bool
    acc_ref[...] += jnp.dot(oh_dst_b.astype(cdt), m.astype(cdt),
                            preferred_element_type=f32)                     # raw sums (N, f_out)
    deg_ref[...] += jnp.sum(oh_dst_b.astype(f32), axis=1, keepdims=True)    # per-node in-degree

    # ---- epilogue on the last E tile ----
    @pl.when(et == pl.num_programs(0) - 1)
    def _finalize():
        bias = vecs_ref[3:4, :f_out]
        gamma = vecs_ref[4:5, :f_out]
        beta = vecs_ref[5:6, :f_out]

        inv_deg = 1.0 / jnp.maximum(deg_ref[...], 1.0)          # f32-exact mean normalization
        out = acc_ref[...] * inv_deg
        out = out + jnp.dot(x_ref[...], root_ref[...], preferred_element_type=f32) + bias
        out = jnp.where(out >= 0, out, neg_slope * out)          # LeakyReLU(0.01)

        # BatchNorm1d over nodes (training-mode biased stats): two independent XLU
        # cross-sublane sums, var = E[x^2] - mean^2 (no serial mean->center->var chain).
        inv_n = 1.0 / n_nodes
        mean = jnp.sum(out, axis=0, keepdims=True) * inv_n
        var = jnp.sum(out * out, axis=0, keepdims=True) * inv_n - mean * mean
        out_ref[...] = ((out - mean) * jax.lax.rsqrt(var + eps) * gamma
                        + beta).astype(out_ref.dtype)


def _round_up(v, m):
    return -(-v // m) * m


def _choose_tile_e(E, N):
    # budget the two transient (tile_e, N) / (N, tile_e) one-hot slabs to ~8 MiB of f32
    cap = max(128, ((8 << 20) // (8 * max(N, 1))) // 128 * 128)
    te = max(128, min(1024, cap))
    single = _round_up(max(E, 1), 128)          # whole padded edge set in one tile if it fits
    return single if single <= te else te


def _vmem_limit_bytes(N, tile_e, e_dim, f_in, f_out, fio, h1, h2, vw):
    stream = 4 * tile_e * (e_dim + 2)                                  # ef + src + dst per tile
    resident = 4 * (N * fio + N * f_in + e_dim * h1 + h1 * h2 + h2 * fio
                    + f_in * f_out + fio * f_out + 6 * vw)
    scratch = 4 * (N * f_out + N)
    transient = 4 * tile_e * (2 * N + 2 * fio + f_out + h1 + h2)       # one-hots + MLP temps
    need = resident + 2 * stream + scratch + transient                 # double-buffered streams
    try:
        phys = pltpu.get_tpu_info().vmem_capacity_bytes                # 128 MiB v5e/v6e, 64 v7x
    except Exception:
        phys = 64 << 20
    cap = max(int(phys * 0.75), 32 << 20)
    return int(min(max(4 * need, 32 << 20), cap))


def graph_conv(x, edge_index, edge_features, params, *, tile_e=None,
               compute_dtype=jnp.float32, neg_slope=0.01, eps=1e-5):
    N, f_in = x.shape
    E, e_dim = edge_features.shape
    f_out = params["root"].shape[1]
    h1 = params["w1"].shape[1]
    h2 = params["w2"].shape[1]
    fio = f_in * f_out
    cdt = compute_dtype

    # ---- XLA-side glue: pad the edge dimension, no dense scatter / no gathered x[src] ----
    if tile_e is None:
        tile_e = _choose_tile_e(E, N)
    num_tiles = -(-E // tile_e)
    e_pad = num_tiles * tile_e
    pad = e_pad - E
    src = jnp.concatenate([edge_index[0].astype(jnp.int32), jnp.zeros((pad,), jnp.int32)])
    dst = jnp.concatenate([edge_index[1].astype(jnp.int32),
                           jnp.full((pad,), -1, jnp.int32)])        # -1 => padded edge (masked)
    ef = jnp.concatenate([edge_features.astype(jnp.float32),
                          jnp.zeros((pad, e_dim), jnp.float32)], axis=0)
    src_col = src.reshape(e_pad, 1)                                  # streamed (tile_e, 1)
    dst_row = dst.reshape(1, e_pad)                                  # streamed (1, tile_e)

    # lane-repeated node features, read ONCE as a tiny resident input: x_rep[:, k*f_out+j]=x[:,k]
    x_rep = jnp.repeat(x.astype(jnp.float32), f_out, axis=1)         # (N, fio)
    # collapse matrix (built once, resident): ssum[c, j] = 1 iff c % f_out == j
    ssum = (jnp.arange(fio)[:, None] % f_out == jnp.arange(f_out)[None, :]).astype(cdt)

    # pack the six tiny row-vectors into one VMEM array: rows [b1, b2, b3, bias, gamma, beta]
    vw = max(h1, h2, fio, f_out)
    def _row(v):
        return jnp.pad(v.astype(jnp.float32), ((0, 0), (0, vw - v.shape[1])))
    vecs = jnp.concatenate([_row(params["b1"]), _row(params["b2"]), _row(params["b3"]),
                            _row(params["bias"]), _row(params["gamma"]), _row(params["beta"])],
                           axis=0)                                   # (6, vw)

    kernel = functools.partial(graph_conv_kernel, f_out=f_out, h1=h1, h2=h2, fio=fio,
                               n_nodes=N, neg_slope=neg_slope, eps=eps)

    resident = lambda shape: pl.BlockSpec(shape, lambda e: (0, 0))
    grid_spec = pltpu.PrefetchScalarGridSpec(
        num_scalar_prefetch=0,
        grid=(num_tiles,),
        in_specs=[
            resident((N, fio)),                                  # x_rep      (resident)
            resident((N, f_in)),                                 # x          (resident)
            pl.BlockSpec((tile_e, 1), lambda e: (e, 0)),         # src indices (streamed)
            pl.BlockSpec((1, tile_e), lambda e: (0, e)),         # dst indices (streamed)
            pl.BlockSpec((tile_e, e_dim), lambda e: (e, 0)),     # edge_features (streamed)
            resident((e_dim, h1)),                               # w1
            resident((h1, h2)),                                  # w2
            resident((h2, fio)),                                 # w3
            resident((f_in, f_out)),                             # root
            resident((fio, f_out)),                              # ssum collapse matrix
            resident((6, vw)),                                   # packed bias/affine vectors
        ],
        out_specs=pl.BlockSpec((N, f_out), lambda e: (0, 0)),    # resident output
        scratch_shapes=[pltpu.VMEM((N, f_out), jnp.float32),     # f32 sum accumulator
                        pltpu.VMEM((N, 1), jnp.float32)],        # f32 degree counter
    )

    out = pl.pallas_call(
        kernel,
        out_shape=jax.ShapeDtypeStruct((N, f_out), jnp.float32),
        grid_spec=grid_spec,
        compiler_params=pltpu.CompilerParams(
            dimension_semantics=("arbitrary",),      # E axis is a reduction into resident output
            vmem_limit_bytes=_vmem_limit_bytes(N, tile_e, e_dim, f_in, f_out, fio, h1, h2, vw)),
    )(x_rep.astype(cdt), x.astype(jnp.float32), src_col, dst_row, ef,
      params["w1"].astype(jnp.float32), params["w2"].astype(jnp.float32),
      params["w3"].astype(jnp.float32), params["root"].astype(jnp.float32),
      ssum, vecs)
    # TODO(synk): for v7x megacore, add a 'parallel' graph-batch grid axis (output laid out as
    #             (N, G*f_out) for lane-dense unmasked stores) and tile nodes for very large N,
    #             where the resident x_rep / (N, tile_e) one-hots no longer fit a node block.
    return out, edge_index, edge_features


def graph_conv_ref(x, edge_index, edge_features, params, *, neg_slope=0.01, eps=1e-5):
    # pure-JAX f32 reference (matches the PyTorch module's forward)
    N, f_in = x.shape
    f_out = params["root"].shape[1]
    h = jax.nn.sigmoid(edge_features @ params["w1"] + params["b1"])
    h = jax.nn.sigmoid(h @ params["w2"] + params["b2"])
    w = (h @ params["w3"] + params["b3"]).reshape(-1, f_in, f_out)
    msg = jnp.einsum("ek,eko->eo", x[edge_index[0]], w)
    onehot = (edge_index[1][None, :] == jnp.arange(N)[:, None]).astype(jnp.float32)
    agg = (onehot / jnp.maximum(onehot.sum(1, keepdims=True), 1.0)) @ msg
    out = agg + x @ params["root"] + params["bias"]
    out = jnp.where(out >= 0, out, neg_slope * out)
    mean = out.mean(0, keepdims=True)
    var = ((out - mean) ** 2).mean(0, keepdims=True)
    return (out - mean) * jax.lax.rsqrt(var + eps) * params["gamma"] + params["beta"]


def init_params(key, edge_dim, f_in, f_out, hidden=(32, 64)):
    ks = jax.random.split(key, 8)
    h1, h2 = hidden
    return {
        "w1": jax.random.normal(ks[0], (edge_dim, h1), jnp.float32) * 0.2,
        "b1": jax.random.normal(ks[1], (1, h1), jnp.float32) * 0.05,
        "w2": jax.random.normal(ks[2], (h1, h2), jnp.float32) * 0.2,
        "b2": jax.random.normal(ks[3], (1, h2), jnp.float32) * 0.05,
        "w3": jax.random.normal(ks[4], (h2, f_in * f_out), jnp.float32) * 0.2,
        "b3": jax.random.normal(ks[5], (1, f_in * f_out), jnp.float32) * 0.05,
        "root": jax.random.normal(ks[6], (f_in, f_out), jnp.float32) * 0.2,
        "bias": jax.random.normal(ks[7], (1, f_out), jnp.float32) * 0.05,
        "gamma": jnp.ones((1, f_out), jnp.float32),
        "beta": jnp.zeros((1, f_out), jnp.float32),
    }


if __name__ == "__main__":
    key = jax.random.PRNGKey(0)
    k_x, k_e, k_ei, k_p = jax.random.split(key, 4)

    N, E = 32, 300                       # nodes, edges (single 384-edge tile inside the wrapper)
    edge_dim, f_in, f_out = 6, 4, 8      # edge_feature_dim, node_in_dim, node_out_dim

    x = jax.random.normal(k_x, (N, f_in), jnp.float32)
    edge_features = jax.random.normal(k_e, (E, edge_dim), jnp.float32)
    edge_index = jax.random.randint(k_ei, (2, E), 0, N, dtype=jnp.int32)
    params = init_params(k_p, edge_dim, f_in, f_out)

    ref = graph_conv_ref(x, edge_index, edge_features, params)

    # f32 compute path: exact module semantics, tight check.
    out, ei, ef = graph_conv(x, edge_index, edge_features, params, compute_dtype=jnp.float32)
    jax.block_until_ready(out)
    assert jnp.allclose(out, ref, atol=1e-3, rtol=1e-3), "f32 kernel mismatch vs JAX reference"

    # bf16 MXU fast path (exact 0/1 one-hots, f32 accumulation, f32 mean/BatchNorm): loose
    # sanity bound on the BatchNorm-normalized (unit-variance) output.
    out_bf16, _, _ = graph_conv(x, edge_index, edge_features, params, compute_dtype=jnp.bfloat16)
    jax.block_until_ready(out_bf16)
    assert jnp.allclose(out_bf16, ref, atol=0.2, rtol=0.0), "bf16 kernel deviates too far"

    print("KERNEL_OK")
</pallas_src>

<mosaic_0001>
module attributes {stable_mosaic.version = 11 : i64} {
  func.func @graph_conv_kernel(%arg0: i32, %arg1: memref<32x32xf32, #tpu.memory_space<vmem>>, %arg2: memref<32x4xf32, #tpu.memory_space<vmem>>, %arg3: memref<384x1xi32, #tpu.memory_space<vmem>>, %arg4: memref<1x384xi32, #tpu.memory_space<vmem>>, %arg5: memref<384x6xf32, #tpu.memory_space<vmem>>, %arg6: memref<6x32xf32, #tpu.memory_space<vmem>>, %arg7: memref<32x64xf32, #tpu.memory_space<vmem>>, %arg8: memref<64x32xf32, #tpu.memory_space<vmem>>, %arg9: memref<4x8xf32, #tpu.memory_space<vmem>>, %arg10: memref<32x8xf32, #tpu.memory_space<vmem>>, %arg11: memref<6x64xf32, #tpu.memory_space<vmem>>, %arg12: memref<32x8xf32, #tpu.memory_space<vmem>>, %arg13: memref<32x8xf32, #tpu.memory_space<vmem>>, %arg14: memref<32x1xf32, #tpu.memory_space<vmem>>) attributes {dimension_semantics = [#tpu.dimension_semantics<arbitrary>], iteration_bounds = array<i64: 1>, scalar_prefetch = 0 : i64, scratch_operands = 2 : i64, tpu.core_type = #tpu.core_type<tc>, window_params = [{pipeline_mode = #tpu.pipeline_mode<synchronous>, transform_indices = @transform_0, window_bounds = array<i64: 32, 32>}, {pipeline_mode = #tpu.pipeline_mode<synchronous>, transform_indices = @transform_1, window_bounds = array<i64: 32, 4>}, {transform_indices = @transform_2, window_bounds = array<i64: 384, 1>}, {transform_indices = @transform_3, window_bounds = array<i64: 1, 384>}, {transform_indices = @transform_4, window_bounds = array<i64: 384, 6>}, {pipeline_mode = #tpu.pipeline_mode<synchronous>, transform_indices = @transform_5, window_bounds = array<i64: 6, 32>}, {pipeline_mode = #tpu.pipeline_mode<synchronous>, transform_indices = @transform_6, window_bounds = array<i64: 32, 64>}, {pipeline_mode = #tpu.pipeline_mode<synchronous>, transform_indices = @transform_7, window_bounds = array<i64: 64, 32>}, {pipeline_mode = #tpu.pipeline_mode<synchronous>, transform_indices = @transform_8, window_bounds = array<i64: 4, 8>}, {pipeline_mode = #tpu.pipeline_mode<synchronous>, transform_indices = @transform_9, window_bounds = array<i64: 32, 8>}, {pipeline_mode = #tpu.pipeline_mode<synchronous>, transform_indices = @transform_10, window_bounds = array<i64: 6, 64>}, {pipeline_mode = #tpu.pipeline_mode<synchronous>, transform_indices = @transform_11, window_bounds = array<i64: 32, 8>}]} {
    %c0_i32 = arith.constant 0 : i32
    %0 = arith.cmpi eq, %arg0, %c0_i32 : i32
    %1 = arith.extui %0 : i1 to i32
    %c0_i32_0 = arith.constant 0 : i32
    %2 = arith.cmpi ne, %1, %c0_i32_0 : i32
    scf.if %2 {
      %cst_38 = arith.constant 0.000000e+00 : f32
      %60 = vector.broadcast %cst_38 : f32 to vector<32x8xf32>
      %c0_39 = arith.constant 0 : index
      %c0_40 = arith.constant 0 : index
      %61 = vector.load %arg13[%c0_39, %c0_40] : memref<32x8xf32, #tpu.memory_space<vmem>>, vector<32x8xf32>
      tpu.vector_store %arg13[%c0_39, %c0_40], %60 {strides = array<i32>} : memref<32x8xf32, #tpu.memory_space<vmem>>, vector<32x8xf32>,
      %cst_41 = arith.constant 0.000000e+00 : f32
      %62 = vector.broadcast %cst_41 : f32 to vector<32x1xf32>
      %c0_42 = arith.constant 0 : index
      %c0_43 = arith.constant 0 : index
      %63 = vector.load %arg14[%c0_42, %c0_43] : memref<32x1xf32, #tpu.memory_space<vmem>>, vector<32x1xf32>
      tpu.vector_store %arg14[%c0_42, %c0_43], %62 {strides = array<i32>} : memref<32x1xf32, #tpu.memory_space<vmem>>, vector<32x1xf32>,
    } else {
    }
    %c0 = arith.constant 0 : index
    %c0_1 = arith.constant 0 : index
    %3 = vector.load %arg11[%c0, %c0_1] : memref<6x64xf32, #tpu.memory_space<vmem>>, vector<1x32xf32>
    %c1 = arith.constant 1 : index
    %c0_2 = arith.constant 0 : index
    %4 = vector.load %arg11[%c1, %c0_2] : memref<6x64xf32, #tpu.memory_space<vmem>>, vector<1x64xf32>
    %c2 = arith.constant 2 : index
    %c0_3 = arith.constant 0 : index
    %5 = vector.load %arg11[%c2, %c0_3] : memref<6x64xf32, #tpu.memory_space<vmem>>, vector<1x32xf32>
    %c0_4 = arith.constant 0 : index
    %c0_5 = arith.constant 0 : index
    %6 = vector.load %arg5[%c0_4, %c0_5] : memref<384x6xf32, #tpu.memory_space<vmem>>, vector<384x6xf32>
    %c0_6 = arith.constant 0 : index
    %c0_7 = arith.constant 0 : index
    %7 = vector.load %arg6[%c0_6, %c0_7] : memref<6x32xf32, #tpu.memory_space<vmem>>, vector<6x32xf32>
    %cst = arith.constant dense<0.000000e+00> : vector<384x32xf32>
    %8 = tpu.matmul %6, %7, %cst {dimension_numbers = #tpu.dot_dimension_numbers<[1], [0], [0], [1], [0, 0, 1, 1], [], []>} : vector<384x6xf32>, vector<6x32xf32>, vector<384x32xf32> -> vector<384x32xf32>
    %9 = vector.broadcast %3 : vector<1x32xf32> to vector<384x32xf32>
    %10 = arith.addf %8, %9 : vector<384x32xf32>
    %11 = arith.negf %10 : vector<384x32xf32>
    %12 = math.exp %11 : vector<384x32xf32>
    %cst_8 = arith.constant 1.000000e+00 : f32
    %13 = vector.broadcast %cst_8 : f32 to vector<384x32xf32>
    %14 = arith.addf %13, %12 : vector<384x32xf32>
    %15 = arith.divf %13, %14 : vector<384x32xf32>
    %c0_9 = arith.constant 0 : index
    %c0_10 = arith.constant 0 : index
    %16 = vector.load %arg7[%c0_9, %c0_10] : memref<32x64xf32, #tpu.memory_space<vmem>>, vector<32x64xf32>
    %cst_11 = arith.constant dense<0.000000e+00> : vector<384x64xf32>
    %17 = tpu.matmul %15, %16, %cst_11 {dimension_numbers = #tpu.dot_dimension_numbers<[1], [0], [0], [1], [0, 0, 1, 1], [], []>} : vector<384x32xf32>, vector<32x64xf32>, vector<384x64xf32> -> vector<384x64xf32>
    %18 = vector.broadcast %4 : vector<1x64xf32> to vector<384x64xf32>
    %19 = arith.addf %17, %18 : vector<384x64xf32>
    %20 = arith.negf %19 : vector<384x64xf32>
    %21 = math.exp %20 : vector<384x64xf32>
    %cst_12 = arith.constant 1.000000e+00 : f32
    %22 = vector.broadcast %cst_12 : f32 to vector<384x64xf32>
    %23 = arith.addf %22, %21 : vector<384x64xf32>
    %24 = arith.divf %22, %23 : vector<384x64xf32>
    %c0_13 = arith.constant 0 : index
    %c0_14 = arith.constant 0 : index
    %25 = vector.load %arg8[%c0_13, %c0_14] : memref<64x32xf32, #tpu.memory_space<vmem>>, vector<64x32xf32>
    %cst_15 = arith.constant dense<0.000000e+00> : vector<384x32xf32>
    %26 = tpu.matmul %24, %25, %cst_15 {dimension_numbers = #tpu.dot_dimension_numbers<[1], [0], [0], [1], [0, 0, 1, 1], [], []>} : vector<384x64xf32>, vector<64x32xf32>, vector<384x32xf32> -> vector<384x32xf32>
    %27 = vector.broadcast %5 : vector<1x32xf32> to vector<384x32xf32>
    %28 = arith.addf %26, %27 : vector<384x32xf32>
    %c0_16 = arith.constant 0 : index
    %c0_17 = arith.constant 0 : index
    %29 = vector.load %arg3[%c0_16, %c0_17] : memref<384x1xi32, #tpu.memory_space<vmem>>, vector<384x1xi32>
    %30 = tpu.iota {dimensions = array<i32: 1>} : vector<384x32xi32>
    %31 = vector.broadcast %29 : vector<384x1xi32> to vector<384x32xi32>
    %32 = arith.cmpi eq, %30, %31 : vector<384x32xi32>
    %33 = arith.extui %32 : vector<384x32xi1> to vector<384x32xi32>
    %34 = arith.sitofp %33 : vector<384x32xi32> to vector<384x32xf32>
    %c0_18 = arith.constant 0 : index
    %c0_19 = arith.constant 0 : index
    %35 = vector.load %arg1[%c0_18, %c0_19] : memref<32x32xf32, #tpu.memory_space<vmem>>, vector<32x32xf32>
    %cst_20 = arith.constant dense<0.000000e+00> : vector<384x32xf32>
    %36 = tpu.matmul %34, %35, %cst_20 {dimension_numbers = #tpu.dot_dimension_numbers<[1], [0], [0], [1], [0, 0, 1, 1], [], []>} : vector<384x32xf32>, vector<32x32xf32>, vector<384x32xf32> -> vector<384x32xf32>
    %37 = arith.mulf %36, %28 : vector<384x32xf32>
    %c0_21 = arith.constant 0 : index
    %c0_22 = arith.constant 0 : index
    %38 = vector.load %arg10[%c0_21, %c0_22] : memref<32x8xf32, #tpu.memory_space<vmem>>, vector<32x8xf32>
    %cst_23 = arith.constant dense<0.000000e+00> : vector<384x8xf32>
    %39 = tpu.matmul %37, %38, %cst_23 {dimension_numbers = #tpu.dot_dimension_numbers<[1], [0], [0], [1], [0, 0, 1, 1], [], []>} : vector<384x32xf32>, vector<32x8xf32>, vector<384x8xf32> -> vector<384x8xf32>
    %c0_24 = arith.constant 0 : index
    %c0_25 = arith.constant 0 : index
    %40 = vector.load %arg4[%c0_24, %c0_25] : memref<1x384xi32, #tpu.memory_space<vmem>>, vector<1x384xi32>
    %41 = tpu.iota {dimensions = array<i32: 0>} : vector<32x384xi32>
    %42 = vector.broadcast %40 : vector<1x384xi32> to vector<32x384xi32>
    %43 = arith.cmpi eq, %41, %42 : vector<32x384xi32>
    %c0_26 = arith.constant 0 : index
    %c0_27 = arith.constant 0 : index
    %44 = vector.load %arg13[%c0_26, %c0_27] : memref<32x8xf32, #tpu.memory_space<vmem>>, vector<32x8xf32>
    %45 = arith.extui %43 : vector<32x384xi1> to vector<32x384xi32>
    %46 = arith.sitofp %45 : vector<32x384xi32> to vector<32x384xf32>
    %cst_28 = arith.constant dense<0.000000e+00> : vector<32x8xf32>
    %47 = tpu.matmul %46, %39, %cst_28 {dimension_numbers = #tpu.dot_dimension_numbers<[1], [0], [0], [1], [0, 0, 1, 1], [], []>} : vector<32x384xf32>, vector<384x8xf32>, vector<32x8xf32> -> vector<32x8xf32>
    %48 = arith.addf %44, %47 : vector<32x8xf32>
    %c0_29 = arith.constant 0 : index
    %c0_30 = arith.constant 0 : index
    %49 = vector.load %arg13[%c0_29, %c0_30] : memref<32x8xf32, #tpu.memory_space<vmem>>, vector<32x8xf32>
    tpu.vector_store %arg13[%c0_29, %c0_30], %48 {strides = array<i32>} : memref<32x8xf32, #tpu.memory_space<vmem>>, vector<32x8xf32>,
    %c0_31 = arith.constant 0 : index
    %c0_32 = arith.constant 0 : index
    %50 = vector.load %arg14[%c0_31, %c0_32] : memref<32x1xf32, #tpu.memory_space<vmem>>, vector<32x1xf32>
    %51 = arith.extui %43 : vector<32x384xi1> to vector<32x384xi32>
    %52 = arith.sitofp %51 : vector<32x384xi32> to vector<32x384xf32>
    %cst_33 = arith.constant dense<0.000000e+00> : vector<32xf32>
    %53 = vector.multi_reduction <add>, %52, %cst_33 [1] : vector<32x384xf32> to vector<32xf32>
    %54 = vector.shape_cast %53 : vector<32xf32> to vector<32x1xf32>
    %55 = arith.addf %50, %54 : vector<32x1xf32>
    %c0_34 = arith.constant 0 : index
    %c0_35 = arith.constant 0 : index
    %56 = vector.load %arg14[%c0_34, %c0_35] : memref<32x1xf32, #tpu.memory_space<vmem>>, vector<32x1xf32>
    tpu.vector_store %arg14[%c0_34, %c0_35], %55 {strides = array<i32>} : memref<32x1xf32, #tpu.memory_space<vmem>>, vector<32x1xf32>,
    %c0_i32_36 = arith.constant 0 : i32
    %57 = arith.cmpi eq, %arg0, %c0_i32_36 : i32
    %58 = arith.extui %57 : i1 to i32
    %c0_i32_37 = arith.constant 0 : i32
    %59 = arith.cmpi ne, %58, %c0_i32_37 : i32
    scf.if %59 {
      %c3 = arith.constant 3 : index
      %c0_38 = arith.constant 0 : index
      %60 = vector.load %arg11[%c3, %c0_38] : memref<6x64xf32, #tpu.memory_space<vmem>>, vector<1x8xf32>
      %c4 = arith.constant 4 : index
      %c0_39 = arith.constant 0 : index
      %61 = vector.load %arg11[%c4, %c0_39] : memref<6x64xf32, #tpu.memory_space<vmem>>, vector<1x8xf32>
      %c5 = arith.constant 5 : index
      %c0_40 = arith.constant 0 : index
      %62 = vector.load %arg11[%c5, %c0_40] : memref<6x64xf32, #tpu.memory_space<vmem>>, vector<1x8xf32>
      %c0_41 = arith.constant 0 : index
      %c0_42 = arith.constant 0 : index
      %63 = vector.load %arg14[%c0_41, %c0_42] : memref<32x1xf32, #tpu.memory_space<vmem>>, vector<32x1xf32>
      %cst_43 = arith.constant 1.000000e+00 : f32
      %64 = vector.broadcast %cst_43 : f32 to vector<32x1xf32>
      %65 = arith.maximumf %63, %64 : vector<32x1xf32>
      %cst_44 = arith.constant 1.000000e+00 : f32
      %66 = vector.broadcast %cst_44 : f32 to vector<32x1xf32>
      %67 = arith.divf %66, %65 : vector<32x1xf32>
      %c0_45 = arith.constant 0 : index
      %c0_46 = arith.constant 0 : index
      %68 = vector.load %arg13[%c0_45, %c0_46] : memref<32x8xf32, #tpu.memory_space<vmem>>, vector<32x8xf32>
      %69 = vector.broadcast %67 : vector<32x1xf32> to vector<32x8xf32>
      %70 = arith.mulf %68, %69 : vector<32x8xf32>
      %c0_47 = arith.constant 0 : index
      %c0_48 = arith.constant 0 : index
      %71 = vector.load %arg2[%c0_47, %c0_48] : memref<32x4xf32, #tpu.memory_space<vmem>>, vector<32x4xf32>
      %c0_49 = arith.constant 0 : index
      %c0_50 = arith.constant 0 : index
      %72 = vector.load %arg9[%c0_49, %c0_50] : memref<4x8xf32, #tpu.memory_space<vmem>>, vector<4x8xf32>
      %cst_51 = arith.constant dense<0.000000e+00> : vector<32x8xf32>
      %73 = tpu.matmul %71, %72, %cst_51 {dimension_numbers = #tpu.dot_dimension_numbers<[1], [0], [0], [1], [0, 0, 1, 1], [], []>} : vector<32x4xf32>, vector<4x8xf32>, vector<32x8xf32> -> vector<32x8xf32>
      %74 = arith.addf %70, %73 : vector<32x8xf32>
      %75 = vector.broadcast %60 : vector<1x8xf32> to vector<32x8xf32>
      %76 = arith.addf %74, %75 : vector<32x8xf32>
      %cst_52 = arith.constant 0.000000e+00 : f32
      %77 = vector.broadcast %cst_52 : f32 to vector<32x8xf32>
      %78 = arith.cmpf oge, %76, %77 : vector<32x8xf32>
      %cst_53 = arith.constant 0.00999999977 : f32
      %79 = vector.broadcast %cst_53 : f32 to vector<32x8xf32>
      %80 = arith.mulf %79, %76 : vector<32x8xf32>
      %81 = arith.select %78, %76, %80 : vector<32x8xi1>, vector<32x8xf32>
      %cst_54 = arith.constant dense<0.000000e+00> : vector<8xf32>
      %82 = vector.multi_reduction <add>, %81, %cst_54 [0] : vector<32x8xf32> to vector<8xf32>
      %83 = vector.shape_cast %82 : vector<8xf32> to vector<1x8xf32>
      %cst_55 = arith.constant 3.125000e-02 : f32
      %84 = vector.broadcast %cst_55 : f32 to vector<1x8xf32>
      %85 = arith.mulf %83, %84 : vector<1x8xf32>
      %86 = arith.mulf %81, %81 : vector<32x8xf32>
      %cst_56 = arith.constant dense<0.000000e+00> : vector<8xf32>
      %87 = vector.multi_reduction <add>, %86, %cst_56 [0] : vector<32x8xf32> to vector<8xf32>
      %88 = vector.shape_cast %87 : vector<8xf32> to vector<1x8xf32>
      %cst_57 = arith.constant 3.125000e-02 : f32
      %89 = vector.broadcast %cst_57 : f32 to vector<1x8xf32>
      %90 = arith.mulf %88, %89 : vector<1x8xf32>
      %91 = arith.mulf %85, %85 : vector<1x8xf32>
      %92 = arith.subf %90, %91 : vector<1x8xf32>
      %93 = vector.broadcast %85 : vector<1x8xf32> to vector<32x8xf32>
      %94 = arith.subf %81, %93 : vector<32x8xf32>
      %cst_58 = arith.constant 9.99999974E-6 : f32
      %95 = vector.broadcast %cst_58 : f32 to vector<1x8xf32>
      %96 = arith.addf %92, %95 : vector<1x8xf32>
      %97 = math.rsqrt %96 : vector<1x8xf32>
      %98 = vector.broadcast %97 : vector<1x8xf32> to vector<32x8xf32>
      %99 = arith.mulf %94, %98 : vector<32x8xf32>
      %100 = vector.broadcast %61 : vector<1x8xf32> to vector<32x8xf32>
      %101 = arith.mulf %99, %100 : vector<32x8xf32>
      %102 = vector.broadcast %62 : vector<1x8xf32> to vector<32x8xf32>
      %103 = arith.addf %101, %102 : vector<32x8xf32>
      %c0_59 = arith.constant 0 : index
      %c0_60 = arith.constant 0 : index
      %104 = vector.load %arg12[%c0_59, %c0_60] : memref<32x8xf32, #tpu.memory_space<vmem>>, vector<32x8xf32>
      tpu.vector_store %arg12[%c0_59, %c0_60], %103 {strides = array<i32>} : memref<32x8xf32, #tpu.memory_space<vmem>>, vector<32x8xf32>,
    } else {
    }
    return
  }
  func.func @transform_0(%arg0: i32) -> (i32, i32) {
    %c0_i32 = arith.constant 0 : i32
    %c0_i32_0 = arith.constant 0 : i32
    %c0_i32_1 = arith.constant 0 : i32
    return %c0_i32, %c0_i32_0 : i32, i32
  }
  func.func @transform_1(%arg0: i32) -> (i32, i32) {
    %c0_i32 = arith.constant 0 : i32
    %c0_i32_0 = arith.constant 0 : i32
    %c0_i32_1 = arith.constant 0 : i32
    return %c0_i32, %c0_i32_0 : i32, i32
  }
  func.func @transform_2(%arg0: i32) -> (i32, i32) {
    %c0_i32 = arith.constant 0 : i32
    %c0_i32_0 = arith.constant 0 : i32
    return %arg0, %c0_i32 : i32, i32
  }
  func.func @transform_3(%arg0: i32) -> (i32, i32) {
    %c0_i32 = arith.constant 0 : i32
    %c0_i32_0 = arith.constant 0 : i32
    return %c0_i32, %arg0 : i32, i32
  }
  func.func @transform_4(%arg0: i32) -> (i32, i32) {
    %c0_i32 = arith.constant 0 : i32
    %c0_i32_0 = arith.constant 0 : i32
    return %arg0, %c0_i32 : i32, i32
  }
  func.func @transform_5(%arg0: i32) -> (i32, i32) {
    %c0_i32 = arith.constant 0 : i32
    %c0_i32_0 = arith.constant 0 : i32
    %c0_i32_1 = arith.constant 0 : i32
    return %c0_i32, %c0_i32_0 : i32, i32
  }
  func.func @transform_6(%arg0: i32) -> (i32, i32) {
    %c0_i32 = arith.constant 0 : i32
    %c0_i32_0 = arith.constant 0 : i32
    %c0_i32_1 = arith.constant 0 : i32
    return %c0_i32, %c0_i32_0 : i32, i32
  }
  func.func @transform_7(%arg0: i32) -> (i32, i32) {
    %c0_i32 = arith.constant 0 : i32
    %c0_i32_0 = arith.constant 0 : i32
    %c0_i32_1 = arith.constant 0 : i32
    return %c0_i32, %c0_i32_0 : i32, i32
  }
  func.func @transform_8(%arg0: i32) -> (i32, i32) {
    %c0_i32 = arith.constant 0 : i32
    %c0_i32_0 = arith.constant 0 : i32
    %c0_i32_1 = arith.constant 0 : i32
    return %c0_i32, %c0_i32_0 : i32, i32
  }
  func.func @transform_9(%arg0: i32) -> (i32, i32) {
    %c0_i32 = arith.constant 0 : i32
    %c0_i32_0 = arith.constant 0 : i32
    %c0_i32_1 = arith.constant 0 : i32
    return %c0_i32, %c0_i32_0 : i32, i32
  }
  func.func @transform_10(%arg0: i32) -> (i32, i32) {
    %c0_i32 = arith.constant 0 : i32
    %c0_i32_0 = arith.constant 0 : i32
    %c0_i32_1 = arith.constant 0 : i32
    return %c0_i32, %c0_i32_0 : i32, i32
  }
  func.func @transform_11(%arg0: i32) -> (i32, i32) {
    %c0_i32 = arith.constant 0 : i32
    %c0_i32_0 = arith.constant 0 : i32
    %c0_i32_1 = arith.constant 0 : i32
    return %c0_i32, %c0_i32_0 : i32, i32
  }
}

</mosaic_0001>

<llo_original>
// kernel: tpu_custom_call.1
$region0: #{tpu_custom_call.1}
  #allocation0 [shape = 'u32[]', space=smem, size = 0x4, offset = 0x4, fixed_abs, tag = 'smem constant byte address 0x4 - core index']
  #allocation1 [shape = 'u32[72,128]{1,0:T(1,128)}', space=vmem, size = 0x9000, scoped, tag = 'internal scratch']
  #allocation2 [shape = 'f32[32,8]{1,0:T(8,128)}', space=vmem, size = 0x4000, scoped, tag = 'scratch operand']
  #allocation3 [shape = 'f32[32,1]{1,0:T(8,128)}', space=vmem, size = 0x4000, scoped, tag = 'scratch operand']
  %s0 = inlined_call_operand.vmem [shape: f32[32,32], index: 0, kind: input, shape index: {}]
  %s1 = inlined_call_operand.vmem [shape: f32[32,4], index: 1, kind: input, shape index: {}]
  %s2 = inlined_call_operand.vmem [shape: s32[384,1], index: 2, kind: input, shape index: {}]
  %s3 = inlined_call_operand.vmem [shape: s32[1,384], index: 3, kind: input, shape index: {}]
  %s4 = inlined_call_operand.vmem [shape: f32[384,6], index: 4, kind: input, shape index: {}]
  %s5 = inlined_call_operand.vmem [shape: f32[6,32], index: 5, kind: input, shape index: {}]
  %s6 = inlined_call_operand.vmem [shape: f32[32,64], index: 6, kind: input, shape index: {}]
  %s7 = inlined_call_operand.vmem [shape: f32[64,32], index: 7, kind: input, shape index: {}]
  %s8 = inlined_call_operand.vmem [shape: f32[4,8], index: 8, kind: input, shape index: {}]
  %s9 = inlined_call_operand.vmem [shape: f32[32,8], index: 9, kind: input, shape index: {}]
  %s10 = inlined_call_operand.vmem [shape: f32[6,64], index: 10, kind: input, shape index: {}]
  %s11 = inlined_call_operand.vmem [shape: f32[32,8], index: 11, kind: output, shape index: {}]
  %s12 = sld [smem:[#allocation0]]
  $region62: #{tpu_custom_call.1} parent=0
    _
  %s14 = ssub.s32 1, %s12
  %s15 = scalar_select 0, %s14, %s12
  // Predicated region
  $region2: #{tpu_custom_call.1} parent=0 // pred_check
    _
  $region3: #{tpu_custom_call.1} parent=0 // pred_check_branch
    %17 = sbr.rel (0) target = $region5
  $region4: #{tpu_custom_call.1} parent=0 // pred_region
    _
  $region5: #{tpu_custom_call.1} parent=0 // pred_fallthru
    _
  // Predicated region
  $region6: #{tpu_custom_call.1} parent=0 // pred_check
    _
  $region7: #{tpu_custom_call.1} parent=0 // pred_check_branch
    %19 = sbr.rel (0) target = $region9
  $region8: #{tpu_custom_call.1} parent=0 // pred_region
    _
  $region9: #{tpu_custom_call.1} parent=0 // pred_fallthru
    _
  // Predicated region
  $region10: #{tpu_custom_call.1} parent=0 // pred_check
    _
  $region11: #{tpu_custom_call.1} parent=0 // pred_check_branch
    %21 = sbr.rel (0) target = $region13
  $region12: #{tpu_custom_call.1} parent=0 // pred_region
    _
  $region13: #{tpu_custom_call.1} parent=0 // pred_fallthru
    _
  // Predicated region
  $region14: #{tpu_custom_call.1} parent=0 // pred_check
    _
  $region15: #{tpu_custom_call.1} parent=0 // pred_check_branch
    %23 = sbr.rel (0) target = $region17
  $region16: #{tpu_custom_call.1} parent=0 // pred_region
    _
  $region17: #{tpu_custom_call.1} parent=0 // pred_fallthru
    _
  // Predicated region
  $region18: #{tpu_custom_call.1} parent=0 // pred_check
    _
  $region19: #{tpu_custom_call.1} parent=0 // pred_check_branch
    %25 = sbr.rel (0) target = $region21
  $region20: #{tpu_custom_call.1} parent=0 // pred_region
    _
  $region21: #{tpu_custom_call.1} parent=0 // pred_fallthru
    _
  // Predicated region
  $region22: #{tpu_custom_call.1} parent=0 // pred_check
    _
  $region23: #{tpu_custom_call.1} parent=0 // pred_check_branch
    %27 = sbr.rel (0) target = $region25
  $region24: #{tpu_custom_call.1} parent=0 // pred_region
    _
  $region25: #{tpu_custom_call.1} parent=0 // pred_fallthru
    _
  // Predicated region
  $region26: #{tpu_custom_call.1} parent=0 // pred_check
    _
  $region27: #{tpu_custom_call.1} parent=0 // pred_check_branch
    %29 = sbr.rel (0) target = $region29
  $region28: #{tpu_custom_call.1} parent=0 // pred_region
    _
  $region29: #{tpu_custom_call.1} parent=0 // pred_fallthru
    _
  // Predicated region
  $region30: #{tpu_custom_call.1} parent=0 // pred_check
    _
  $region31: #{tpu_custom_call.1} parent=0 // pred_check_branch
    %31 = sbr.rel (0) target = $region33
  $region32: #{tpu_custom_call.1} parent=0 // pred_region
    _
  $region33: #{tpu_custom_call.1} parent=0 // pred_fallthru
    _
  // Predicated region
  $region34: #{tpu_custom_call.1} parent=0 // pred_check
    _
  $region35: #{tpu_custom_call.1} parent=0 // pred_check_branch
    %33 = sbr.rel (0) target = $region37
  $region36: #{tpu_custom_call.1} parent=0 // pred_region
    _
  $region37: #{tpu_custom_call.1} parent=0 // pred_fallthru
    _
  // Predicated region
  $region38: #{tpu_custom_call.1} parent=0 // pred_check
    _
  $region39: #{tpu_custom_call.1} parent=0 // pred_check_branch
    %35 = sbr.rel (0) target = $region41
  $region40: #{tpu_custom_call.1} parent=0 // pred_region
    _
  $region41: #{tpu_custom_call.1} parent=0 // pred_fallthru
    _
  // Predicated region
  $region42: #{tpu_custom_call.1} parent=0 // pred_check
    _
  $region43: #{tpu_custom_call.1} parent=0 // pred_check_branch
    %37 = sbr.rel (0) target = $region45
  $region44: #{tpu_custom_call.1} parent=0 // pred_region
    _
  $region45: #{tpu_custom_call.1} parent=0 // pred_fallthru
    _
  %p38 = scmp.eq.s32.totalorder 0, 0
  // Predicated region
  $region46: #{tpu_custom_call.1} parent=0 // pred_check
    %p39 = pneg %p38
  $region47: #{tpu_custom_call.1} parent=0 // pred_check_branch
    %41 = sbr.rel (%p39) target = $region49
  $region48: #{tpu_custom_call.1} parent=0 // pred_region
    %vm42 = vcmask 64512
    %43 = vst.msk [vmem:[#allocation2] sm:$0xff] %vm42, 0.0
    %44 = vst.msk [vmem:[#allocation2 + $0x8] sm:$0xff] %vm42, 0.0
    %45 = vst.msk [vmem:[#allocation2 + $0x10] sm:$0xff] %vm42, 0.0
    %46 = vst.msk [vmem:[#allocation2 + $0x18] sm:$0xff] %vm42, 0.0
    %vm47 = vcmask 7168
    %48 = vst.msk [vmem:[#allocation3] sm:$0xff] %vm47, 0.0
    %49 = vst.msk [vmem:[#allocation3 + $0x8] sm:$0xff] %vm47, 0.0
    %50 = vst.msk [vmem:[#allocation3 + $0x10] sm:$0xff] %vm47, 0.0
    %51 = vst.msk [vmem:[#allocation3 + $0x18] sm:$0xff] %vm47, 0.0
  $region49: #{tpu_custom_call.1} parent=0 // pred_fallthru
    _
  %v52 = vld [vmem:[%s10] sm:$0x1]
  %v53 = vld [vmem:[%s10 + $0x1] sm:$0x1]
  %v54 = vld [vmem:[%s10 + $0x2] sm:$0x1]
  %v55 = vld [vmem:[%s4] sm:$0xff]
  %v56 = vld [vmem:[%s4 + $0x8] sm:$0xff]
  %v57 = vld [vmem:[%s4 + $0x10] sm:$0xff]
  %v58 = vld [vmem:[%s4 + $0x18] sm:$0xff]
  %v59 = vld [vmem:[%s4 + $0x20] sm:$0xff]
  %v60 = vld [vmem:[%s4 + $0x28] sm:$0xff]
  %v61 = vld [vmem:[%s4 + $0x30] sm:$0xff]
  %v62 = vld [vmem:[%s4 + $0x38] sm:$0xff]
  %v63 = vld [vmem:[%s4 + $0x40] sm:$0xff]
  %v64 = vld [vmem:[%s4 + $0x48] sm:$0xff]
  %v65 = vld [vmem:[%s4 + $0x50] sm:$0xff]
  %v66 = vld [vmem:[%s4 + $0x58] sm:$0xff]
  %v67 = vld [vmem:[%s4 + $0x60] sm:$0xff]
  %v68 = vld [vmem:[%s4 + $0x68] sm:$0xff]
  %v69 = vld [vmem:[%s4 + $0x70] sm:$0xff]
  %v70 = vld [vmem:[%s4 + $0x78] sm:$0xff]
  %v71 = vld [vmem:[%s4 + $0x80] sm:$0xff]
  %v72 = vld [vmem:[%s4 + $0x88] sm:$0xff]
  %v73 = vld [vmem:[%s4 + $0x90] sm:$0xff]
  %v74 = vld [vmem:[%s4 + $0x98] sm:$0xff]
  %v75 = vld [vmem:[%s4 + $0xa0] sm:$0xff]
  %v76 = vld [vmem:[%s4 + $0xa8] sm:$0xff]
  %v77 = vld [vmem:[%s4 + $0xb0] sm:$0xff]
  %v78 = vld [vmem:[%s4 + $0xb8] sm:$0xff]
  %v79 = vld [vmem:[%s4 + $0xc0] sm:$0xff]
  %v80 = vld [vmem:[%s4 + $0xc8] sm:$0xff]
  %v81 = vld [vmem:[%s4 + $0xd0] sm:$0xff]
  %v82 = vld [vmem:[%s4 + $0xd8] sm:$0xff]
  %v83 = vld [vmem:[%s4 + $0xe0] sm:$0xff]
  %v84 = vld [vmem:[%s4 + $0xe8] sm:$0xff]
  %v85 = vld [vmem:[%s4 + $0xf0] sm:$0xff]
  %v86 = vld [vmem:[%s4 + $0xf8] sm:$0xff]
  %v87 = vld [vmem:[%s4 + $0x100] sm:$0xff]
  %v88 = vld [vmem:[%s4 + $0x108] sm:$0xff]
  %v89 = vld [vmem:[%s4 + $0x110] sm:$0xff]
  %v90 = vld [vmem:[%s4 + $0x118] sm:$0xff]
  %v91 = vld [vmem:[%s4 + $0x120] sm:$0xff]
  %v92 = vld [vmem:[%s4 + $0x128] sm:$0xff]
  %v93 = vld [vmem:[%s4 + $0x130] sm:$0xff]
  %v94 = vld [vmem:[%s4 + $0x138] sm:$0xff]
  %v95 = vld [vmem:[%s4 + $0x140] sm:$0xff]
  %v96 = vld [vmem:[%s4 + $0x148] sm:$0xff]
  %v97 = vld [vmem:[%s4 + $0x150] sm:$0xff]
  %v98 = vld [vmem:[%s4 + $0x158] sm:$0xff]
  %v99 = vld [vmem:[%s4 + $0x160] sm:$0xff]
  %v100 = vld [vmem:[%s4 + $0x168] sm:$0xff]
  %v101 = vld [vmem:[%s4 + $0x170] sm:$0xff]
  %v102 = vld [vmem:[%s4 + $0x178] sm:$0xff]
  %v103 = vld [vmem:[%s5] sm:$0x3f]
  %v104 = vperm.slane %v52, 0
  %vm105 = vcmask 48128
  %v107 = vsel %vm105, %v55, 0
  %v110 = vsel %vm105, %v56, 0
  %v113 = vsel %vm105, %v57, 0
  %v116 = vsel %vm105, %v58, 0
  %v119 = vsel %vm105, %v59, 0
  %v122 = vsel %vm105, %v60, 0
  %v125 = vsel %vm105, %v61, 0
  %v128 = vsel %vm105, %v62, 0
  %v131 = vsel %vm105, %v63, 0
  %v134 = vsel %vm105, %v64, 0
  %v137 = vsel %vm105, %v65, 0
  %v140 = vsel %vm105, %v66, 0
  %v143 = vsel %vm105, %v67, 0
  %v146 = vsel %vm105, %v68, 0
  %v149 = vsel %vm105, %v69, 0
  %v152 = vsel %vm105, %v70, 0
  %v155 = vsel %vm105, %v71, 0
  %v158 = vsel %vm105, %v72, 0
  %v161 = vsel %vm105, %v73, 0
  %v164 = vsel %vm105, %v74, 0
  %v167 = vsel %vm105, %v75, 0
  %v170 = vsel %vm105, %v76, 0
  %v173 = vsel %vm105, %v77, 0
  %v176 = vsel %vm105, %v78, 0
  %v179 = vsel %vm105, %v79, 0
  %v182 = vsel %vm105, %v80, 0
  %v185 = vsel %vm105, %v81, 0
  %v188 = vsel %vm105, %v82, 0
  %v191 = vsel %vm105, %v83, 0
  %v194 = vsel %vm105, %v84, 0
  %v197 = vsel %vm105, %v85, 0
  %v200 = vsel %vm105, %v86, 0
  %v203 = vsel %vm105, %v87, 0
  %v206 = vsel %vm105, %v88, 0
  %v209 = vsel %vm105, %v89, 0
  %v212 = vsel %vm105, %v90, 0
  %v215 = vsel %vm105, %v91, 0
  %v218 = vsel %vm105, %v92, 0
  %v221 = vsel %vm105, %v93, 0
  %v224 = vsel %vm105, %v94, 0
  %v227 = vsel %vm105, %v95, 0
  %v230 = vsel %vm105, %v96, 0
  %v233 = vsel %vm105, %v97, 0
  %v236 = vsel %vm105, %v98, 0
  %v239 = vsel %vm105, %v99, 0
  %v242 = vsel %vm105, %v100, 0
  %v245 = vsel %vm105, %v101, 0
  %v248 = vsel %vm105, %v102, 0
  %vm250 = vcmask 1045504
  %v252 = vsel %vm250, %v103, 0
  %254 = vmatpush.msra.mxu0 0.0
  %255 = vmatpush.msra.mxu0 0.0
  %256 = vmatpush.msra.mxu0 0.0
  %257 = vmatpush.msra.mxu0 0.0
  %258 = vmatpush.msra.mxu0 0.0
  %259 = vmatpush.msra.mxu0 0.0
  %260 = vmatpush.msra.mxu0 0.0
  %261 = vmatpush.msra.mxu0 0.0
  %262 = vmatpush.msra.mxu0 0.0
  %263 = vmatpush.msra.mxu0 0.0
  %264 = vmatpush.msra.mxu0 0.0
  %265 = vmatpush.msra.mxu0 0.0
  %266 = vmatpush.msra.mxu0 0.0
  %267 = vmatpush.msra.mxu0 0.0
  %268 = vmatpush.msra.mxu0 0.0
  %269 = vmatpush.msra.mxu0 %v252
  %270 = vmatmul.f32.gmra.mxu0 %v107
  %v271 = vpop.f32.mrf.mxu0
  %v272 = vadd.f32 %v104, %v271
  %273 = vmatmul.f32.gmra.mxu0 %v110
  %v274 = vpop.f32.mrf.mxu0
  %v275 = vadd.f32 %v104, %v274
  %276 = vmatmul.f32.gmra.mxu0 %v113
  %v277 = vpop.f32.mrf.mxu0
  %v278 = vadd.f32 %v104, %v277
  %279 = vmatmul.f32.gmra.mxu0 %v116
  %v280 = vpop.f32.mrf.mxu0
  %v281 = vadd.f32 %v104, %v280
  %282 = vmatmul.f32.gmra.mxu0 %v119
  %v283 = vpop.f32.mrf.mxu0
  %v284 = vadd.f32 %v104, %v283
  %285 = vmatmul.f32.gmra.mxu0 %v122
  %v286 = vpop.f32.mrf.mxu0
  %v287 = vadd.f32 %v104, %v286
  %288 = vmatmul.f32.gmra.mxu0 %v125
  %v289 = vpop.f32.mrf.mxu0
  %v290 = vadd.f32 %v104, %v289
  %291 = vmatmul.f32.gmra.mxu0 %v128
  %v292 = vpop.f32.mrf.mxu0
  %v293 = vadd.f32 %v104, %v292
  %294 = vmatmul.f32.gmra.mxu0 %v131
  %v295 = vpop.f32.mrf.mxu0
  %v296 = vadd.f32 %v104, %v295
  %297 = vmatmul.f32.gmra.mxu0 %v134
  %v298 = vpop.f32.mrf.mxu0
  %v299 = vadd.f32 %v104, %v298
  %300 = vmatmul.f32.gmra.mxu0 %v137
  %v301 = vpop.f32.mrf.mxu0
  %v302 = vadd.f32 %v104, %v301
  %303 = vmatmul.f32.gmra.mxu0 %v140
  %v304 = vpop.f32.mrf.mxu0
  %v305 = vadd.f32 %v104, %v304
  %306 = vmatmul.f32.gmra.mxu0 %v143
  %v307 = vpop.f32.mrf.mxu0
  %v308 = vadd.f32 %v104, %v307
  %309 = vmatmul.f32.gmra.mxu0 %v146
  %v310 = vpop.f32.mrf.mxu0
  %v311 = vadd.f32 %v104, %v310
  %312 = vmatmul.f32.gmra.mxu0 %v149
  %v313 = vpop.f32.mrf.mxu0
  %v314 = vadd.f32 %v104, %v313
  %315 = vmatmul.f32.gmra.mxu0 %v152
  %v316 = vpop.f32.mrf.mxu0
  %v317 = vadd.f32 %v104, %v316
  %318 = vmatmul.f32.gmra.mxu0 %v155
  %v319 = vpop.f32.mrf.mxu0
  %v320 = vadd.f32 %v104, %v319
  %321 = vmatmul.f32.gmra.mxu0 %v158
  %v322 = vpop.f32.mrf.mxu0
  %v323 = vadd.f32 %v104, %v322
  %324 = vmatmul.f32.gmra.mxu0 %v161
  %v325 = vpop.f32.mrf.mxu0
  %v326 = vadd.f32 %v104, %v325
  %327 = vmatmul.f32.gmra.mxu0 %v164
  %v328 = vpop.f32.mrf.mxu0
  %v329 = vadd.f32 %v104, %v328
  %330 = vmatmul.f32.gmra.mxu0 %v167
  %v331 = vpop.f32.mrf.mxu0
  %v332 = vadd.f32 %v104, %v331
  %333 = vmatmul.f32.gmra.mxu0 %v170
  %v334 = vpop.f32.mrf.mxu0
  %v335 = vadd.f32 %v104, %v334
  %336 = vmatmul.f32.gmra.mxu0 %v173
  %v337 = vpop.f32.mrf.mxu0
  %v338 = vadd.f32 %v104, %v337
  %339 = vmatmul.f32.gmra.mxu0 %v176
  %v340 = vpop.f32.mrf.mxu0
  %v341 = vadd.f32 %v104, %v340
  %342 = vmatmul.f32.gmra.mxu0 %v179
  %v343 = vpop.f32.mrf.mxu0
  %v344 = vadd.f32 %v104, %v343
  %345 = vmatmul.f32.gmra.mxu0 %v182
  %v346 = vpop.f32.mrf.mxu0
  %v347 = vadd.f32 %v104, %v346
  %348 = vmatmul.f32.gmra.mxu0 %v185
  %v349 = vpop.f32.mrf.mxu0
  %v350 = vadd.f32 %v104, %v349
  %351 = vmatmul.f32.gmra.mxu0 %v188
  %v352 = vpop.f32.mrf.mxu0
  %v353 = vadd.f32 %v104, %v352
  %354 = vmatmul.f32.gmra.mxu0 %v191
  %v355 = vpop.f32.mrf.mxu0
  %v356 = vadd.f32 %v104, %v355
  %357 = vmatmul.f32.gmra.mxu0 %v194
  %v358 = vpop.f32.mrf.mxu0
  %v359 = vadd.f32 %v104, %v358
  %360 = vmatmul.f32.gmra.mxu0 %v197
  %v361 = vpop.f32.mrf.mxu0
  %v362 = vadd.f32 %v104, %v361
  %363 = vmatmul.f32.gmra.mxu0 %v200
  %v364 = vpop.f32.mrf.mxu0
  %v365 = vadd.f32 %v104, %v364
  %366 = vmatmul.f32.gmra.mxu0 %v203
  %v367 = vpop.f32.mrf.mxu0
  %v368 = vadd.f32 %v104, %v367
  %369 = vmatmul.f32.gmra.mxu0 %v206
  %v370 = vpop.f32.mrf.mxu0
  %v371 = vadd.f32 %v104, %v370
  %372 = vmatmul.f32.gmra.mxu0 %v209
  %v373 = vpop.f32.mrf.mxu0
  %v374 = vadd.f32 %v104, %v373
  %375 = vmatmul.f32.gmra.mxu0 %v212
  %v376 = vpop.f32.mrf.mxu0
  %v377 = vadd.f32 %v104, %v376
  %378 = vmatmul.f32.gmra.mxu0 %v215
  %v379 = vpop.f32.mrf.mxu0
  %v380 = vadd.f32 %v104, %v379
  %381 = vmatmul.f32.gmra.mxu0 %v218
  %v382 = vpop.f32.mrf.mxu0
  %v383 = vadd.f32 %v104, %v382
  %384 = vmatmul.f32.gmra.mxu0 %v221
  %v385 = vpop.f32.mrf.mxu0
  %v386 = vadd.f32 %v104, %v385
  %387 = vmatmul.f32.gmra.mxu0 %v224
  %v388 = vpop.f32.mrf.mxu0
  %v389 = vadd.f32 %v104, %v388
  %390 = vmatmul.f32.gmra.mxu0 %v227
  %v391 = vpop.f32.mrf.mxu0
  %v392 = vadd.f32 %v104, %v391
  %393 = vmatmul.f32.gmra.mxu0 %v230
  %v394 = vpop.f32.mrf.mxu0
  %v395 = vadd.f32 %v104, %v394
  %396 = vmatmul.f32.gmra.mxu0 %v233
  %v397 = vpop.f32.mrf.mxu0
  %v398 = vadd.f32 %v104, %v397
  %399 = vmatmul.f32.gmra.mxu0 %v236
  %v400 = vpop.f32.mrf.mxu0
  %v401 = vadd.f32 %v104, %v400
  %402 = vmatmul.f32.gmra.mxu0 %v239
  %v403 = vpop.f32.mrf.mxu0
  %v404 = vadd.f32 %v104, %v403
  %405 = vmatmul.f32.gmra.mxu0 %v242
  %v406 = vpop.f32.mrf.mxu0
  %v407 = vadd.f32 %v104, %v406
  %408 = vmatmul.f32.gmra.mxu0 %v245
  %v409 = vpop.f32.mrf.mxu0
  %v410 = vadd.f32 %v104, %v409
  %411 = vmatmul.f32.gmra.mxu0 %v248
  %v412 = vpop.f32.mrf.mxu0
  %v413 = vadd.f32 %v104, %v412
  %414 = vdwg.mxu0
  %v415 = vxor.u32 %v272, 2147483648
  %v416 = vxor.u32 %v275, 2147483648
  %v417 = vxor.u32 %v278, 2147483648
  %v418 = vxor.u32 %v281, 2147483648
  %v419 = vxor.u32 %v284, 2147483648
  %v420 = vxor.u32 %v287, 2147483648
  %v421 = vxor.u32 %v290, 2147483648
  %v422 = vxor.u32 %v293, 2147483648
  %v423 = vxor.u32 %v296, 2147483648
  %v424 = vxor.u32 %v299, 2147483648
  %v425 = vxor.u32 %v302, 2147483648
  %v426 = vxor.u32 %v305, 2147483648
  %v427 = vxor.u32 %v308, 2147483648
  %v428 = vxor.u32 %v311, 2147483648
  %v429 = vxor.u32 %v314, 2147483648
  %v430 = vxor.u32 %v317, 2147483648
  %v431 = vxor.u32 %v320, 2147483648
  %v432 = vxor.u32 %v323, 2147483648
  %v433 = vxor.u32 %v326, 2147483648
  %v434 = vxor.u32 %v329, 2147483648
  %v435 = vxor.u32 %v332, 2147483648
  %v436 = vxor.u32 %v335, 2147483648
  %v437 = vxor.u32 %v338, 2147483648
  %v438 = vxor.u32 %v341, 2147483648
  %v439 = vxor.u32 %v344, 2147483648
  %v440 = vxor.u32 %v347, 2147483648
  %v441 = vxor.u32 %v350, 2147483648
  %v442 = vxor.u32 %v353, 2147483648
  %v443 = vxor.u32 %v356, 2147483648
  %v444 = vxor.u32 %v359, 2147483648
  %v445 = vxor.u32 %v362, 2147483648
  %v446 = vxor.u32 %v365, 2147483648
  %v447 = vxor.u32 %v368, 2147483648
  %v448 = vxor.u32 %v371, 2147483648
  %v449 = vxor.u32 %v374, 2147483648
  %v450 = vxor.u32 %v377, 2147483648
  %v451 = vxor.u32 %v380, 2147483648
  %v452 = vxor.u32 %v383, 2147483648
  %v453 = vxor.u32 %v386, 2147483648
  %v454 = vxor.u32 %v389, 2147483648
  %v455 = vxor.u32 %v392, 2147483648
  %v456 = vxor.u32 %v395, 2147483648
  %v457 = vxor.u32 %v398, 2147483648
  %v458 = vxor.u32 %v401, 2147483648
  %v459 = vxor.u32 %v404, 2147483648
  %v460 = vxor.u32 %v407, 2147483648
  %v461 = vxor.u32 %v410, 2147483648
  %v462 = vxor.u32 %v413, 2147483648
  %v463 = vmul.f32 %v415, 1.442695
  %v464 = vpow.pop %v463
  %v465 = vmul.f32 %v416, 1.442695
  %v466 = vpow.pop %v465
  %v467 = vmul.f32 %v417, 1.442695
  %v468 = vpow.pop %v467
  %v469 = vmul.f32 %v418, 1.442695
  %v470 = vpow.pop %v469
  %v471 = vmul.f32 %v419, 1.442695
  %v472 = vpow.pop %v471
  %v473 = vmul.f32 %v420, 1.442695
  %v474 = vpow.pop %v473
  %v475 = vmul.f32 %v421, 1.442695
  %v476 = vpow.pop %v475
  %v477 = vmul.f32 %v422, 1.442695
  %v478 = vpow.pop %v477
  %v479 = vmul.f32 %v423, 1.442695
  %v480 = vpow.pop %v479
  %v481 = vmul.f32 %v424, 1.442695
  %v482 = vpow.pop %v481
  %v483 = vmul.f32 %v425, 1.442695
  %v484 = vpow.pop %v483
  %v485 = vmul.f32 %v426, 1.442695
  %v486 = vpow.pop %v485
  %v487 = vmul.f32 %v427, 1.442695
  %v488 = vpow.pop %v487
  %v489 = vmul.f32 %v428, 1.442695
  %v490 = vpow.pop %v489
  %v491 = vmul.f32 %v429, 1.442695
  %v492 = vpow.pop %v491
  %v493 = vmul.f32 %v430, 1.442695
  %v494 = vpow.pop %v493
  %v495 = vmul.f32 %v431, 1.442695
  %v496 = vpow.pop %v495
  %v497 = vmul.f32 %v432, 1.442695
  %v498 = vpow.pop %v497
  %v499 = vmul.f32 %v433, 1.442695
  %v500 = vpow.pop %v499
  %v501 = vmul.f32 %v434, 1.442695
  %v502 = vpow.pop %v501
  %v503 = vmul.f32 %v435, 1.442695
  %v504 = vpow.pop %v503
  %v505 = vmul.f32 %v436, 1.442695
  %v506 = vpow.pop %v505
  %v507 = vmul.f32 %v437, 1.442695
  %v508 = vpow.pop %v507
  %v509 = vmul.f32 %v438, 1.442695
  %v510 = vpow.pop %v509
  %v511 = vmul.f32 %v439, 1.442695
  %v512 = vpow.pop %v511
  %v513 = vmul.f32 %v440, 1.442695
  %v514 = vpow.pop %v513
  %v515 = vmul.f32 %v441, 1.442695
  %v516 = vpow.pop %v515
  %v517 = vmul.f32 %v442, 1.442695
  %v518 = vpow.pop %v517
  %v519 = vmul.f32 %v443, 1.442695
  %v520 = vpow.pop %v519
  %v521 = vmul.f32 %v444, 1.442695
  %v522 = vpow.pop %v521
  %v523 = vmul.f32 %v445, 1.442695
  %v524 = vpow.pop %v523
  %v525 = vmul.f32 %v446, 1.442695
  %v526 = vpow.pop %v525
  %v527 = vmul.f32 %v447, 1.442695
  %v528 = vpow.pop %v527
  %v529 = vmul.f32 %v448, 1.442695
  %v530 = vpow.pop %v529
  %v531 = vmul.f32 %v449, 1.442695
  %v532 = vpow.pop %v531
  %v533 = vmul.f32 %v450, 1.442695
  %v534 = vpow.pop %v533
  %v535 = vmul.f32 %v451, 1.442695
  %v536 = vpow.pop %v535
  %v537 = vmul.f32 %v452, 1.442695
  %v538 = vpow.pop %v537
  %v539 = vmul.f32 %v453, 1.442695
  %v540 = vpow.pop %v539
  %v541 = vmul.f32 %v454, 1.442695
  %v542 = vpow.pop %v541
  %v543 = vmul.f32 %v455, 1.442695
  %v544 = vpow.pop %v543
  %v545 = vmul.f32 %v456, 1.442695
  %v546 = vpow.pop %v545
  %v547 = vmul.f32 %v457, 1.442695
  %v548 = vpow.pop %v547
  %v549 = vmul.f32 %v458, 1.442695
  %v550 = vpow.pop %v549
  %v551 = vmul.f32 %v459, 1.442695
  %v552 = vpow.pop %v551
  %v553 = vmul.f32 %v460, 1.442695
  %v554 = vpow.pop %v553
  %v555 = vmul.f32 %v461, 1.442695
  %v556 = vpow.pop %v555
  %v557 = vmul.f32 %v462, 1.442695
  %v558 = vpow.pop %v557
  %v559 = vadd.f32 %v464, 1.0
  %v560 = vadd.f32 %v466, 1.0
  %v561 = vadd.f32 %v468, 1.0
  %v562 = vadd.f32 %v470, 1.0
  %v563 = vadd.f32 %v472, 1.0
  %v564 = vadd.f32 %v474, 1.0
  %v565 = vadd.f32 %v476, 1.0
  %v566 = vadd.f32 %v478, 1.0
  %v567 = vadd.f32 %v480, 1.0
  %v568 = vadd.f32 %v482, 1.0
  %v569 = vadd.f32 %v484, 1.0
  %v570 = vadd.f32 %v486, 1.0
  %v571 = vadd.f32 %v488, 1.0
  %v572 = vadd.f32 %v490, 1.0
  %v573 = vadd.f32 %v492, 1.0
  %v574 = vadd.f32 %v494, 1.0
  %v575 = vadd.f32 %v496, 1.0
  %v576 = vadd.f32 %v498, 1.0
  %v577 = vadd.f32 %v500, 1.0
  %v578 = vadd.f32 %v502, 1.0
  %v579 = vadd.f32 %v504, 1.0
  %v580 = vadd.f32 %v506, 1.0
  %v581 = vadd.f32 %v508, 1.0
  %v582 = vadd.f32 %v510, 1.0
  %v583 = vadd.f32 %v512, 1.0
  %v584 = vadd.f32 %v514, 1.0
  %v585 = vadd.f32 %v516, 1.0
  %v586 = vadd.f32 %v518, 1.0
  %v587 = vadd.f32 %v520, 1.0
  %v588 = vadd.f32 %v522, 1.0
  %v589 = vadd.f32 %v524, 1.0
  %v590 = vadd.f32 %v526, 1.0
  %v591 = vadd.f32 %v528, 1.0
  %v592 = vadd.f32 %v530, 1.0
  %v593 = vadd.f32 %v532, 1.0
  %v594 = vadd.f32 %v534, 1.0
  %v595 = vadd.f32 %v536, 1.0
  %v596 = vadd.f32 %v538, 1.0
  %v597 = vadd.f32 %v540, 1.0
  %v598 = vadd.f32 %v542, 1.0
  %v599 = vadd.f32 %v544, 1.0
  %v600 = vadd.f32 %v546, 1.0
  %v601 = vadd.f32 %v548, 1.0
  %v602 = vadd.f32 %v550, 1.0
  %v603 = vadd.f32 %v552, 1.0
  %v604 = vadd.f32 %v554, 1.0
  %v605 = vadd.f32 %v556, 1.0
  %v606 = vadd.f32 %v558, 1.0
  %v607 = vrcp.pop %v559
  %v608 = vmul.f32 %v559, %v607
  %v609 = vsub.f32 1.0, %v608
  %v610 = vmul.f32 %v607, %v609
  %v611 = vadd.f32 %v607, %v610
  %vm612 = vweird.f32 %v559
  %vm613 = vweird.f32 %v607
  %vm614 = vmor %vm612, %vm613
  %v615 = vsel %vm614, %v607, %v611
  %v616 = vand.u32 2147483647, %v559
  %vm617 = vcmp.eq.f32.partialorder %v616, 8.507059e+37
  %v618 = vand.u32 %v559, 2147483648
  %v619 = vor.u32 1.1754944e-38, %v618
  %v620 = vsel %vm617, %v619, %v615
  %v621 = vmul.f32 1.0, %v620
  %v622 = vrcp.pop %v560
  %v623 = vmul.f32 %v560, %v622
  %v624 = vsub.f32 1.0, %v623
  %v625 = vmul.f32 %v622, %v624
  %v626 = vadd.f32 %v622, %v625
  %vm627 = vweird.f32 %v560
  %vm628 = vweird.f32 %v622
  %vm629 = vmor %vm627, %vm628
  %v630 = vsel %vm629, %v622, %v626
  %v631 = vand.u32 2147483647, %v560
  %vm632 = vcmp.eq.f32.partialorder %v631, 8.507059e+37
  %v633 = vand.u32 %v560, 2147483648
  %v634 = vor.u32 1.1754944e-38, %v633
  %v635 = vsel %vm632, %v634, %v630
  %v636 = vmul.f32 1.0, %v635
  %v637 = vrcp.pop %v561
  %v638 = vmul.f32 %v561, %v637
  %v639 = vsub.f32 1.0, %v638
  %v640 = vmul.f32 %v637, %v639
  %v641 = vadd.f32 %v637, %v640
  %vm642 = vweird.f32 %v561
  %vm643 = vweird.f32 %v637
  %vm644 = vmor %vm642, %vm643
  %v645 = vsel %vm644, %v637, %v641
  %v646 = vand.u32 2147483647, %v561
  %vm647 = vcmp.eq.f32.partialorder %v646, 8.507059e+37
  %v648 = vand.u32 %v561, 2147483648
  %v649 = vor.u32 1.1754944e-38, %v648
  %v650 = vsel %vm647, %v649, %v645
  %v651 = vmul.f32 1.0, %v650
  %v652 = vrcp.pop %v562
  %v653 = vmul.f32 %v562, %v652
  %v654 = vsub.f32 1.0, %v653
  %v655 = vmul.f32 %v652, %v654
  %v656 = vadd.f32 %v652, %v655
  %vm657 = vweird.f32 %v562
  %vm658 = vweird.f32 %v652
  %vm659 = vmor %vm657, %vm658
  %v660 = vsel %vm659, %v652, %v656
  %v661 = vand.u32 2147483647, %v562
  %vm662 = vcmp.eq.f32.partialorder %v661, 8.507059e+37
  %v663 = vand.u32 %v562, 2147483648
  %v664 = vor.u32 1.1754944e-38, %v663
  %v665 = vsel %vm662, %v664, %v660
  %v666 = vmul.f32 1.0, %v665
  %v667 = vrcp.pop %v563
  %v668 = vmul.f32 %v563, %v667
  %v669 = vsub.f32 1.0, %v668
  %v670 = vmul.f32 %v667, %v669
  %v671 = vadd.f32 %v667, %v670
  %vm672 = vweird.f32 %v563
  %vm673 = vweird.f32 %v667
  %vm674 = vmor %vm672, %vm673
  %v675 = vsel %vm674, %v667, %v671
  %v676 = vand.u32 2147483647, %v563
  %vm677 = vcmp.eq.f32.partialorder %v676, 8.507059e+37
  %v678 = vand.u32 %v563, 2147483648
  %v679 = vor.u32 1.1754944e-38, %v678
  %v680 = vsel %vm677, %v679, %v675
  %v681 = vmul.f32 1.0, %v680
  %v682 = vrcp.pop %v564
  %v683 = vmul.f32 %v564, %v682
  %v684 = vsub.f32 1.0, %v683
  %v685 = vmul.f32 %v682, %v684
  %v686 = vadd.f32 %v682, %v685
  %vm687 = vweird.f32 %v564
  %vm688 = vweird.f32 %v682
  %vm689 = vmor %vm687, %vm688
  %v690 = vsel %vm689, %v682, %v686
  %v691 = vand.u32 2147483647, %v564
  %vm692 = vcmp.eq.f32.partialorder %v691, 8.507059e+37
  %v693 = vand.u32 %v564, 2147483648
  %v694 = vor.u32 1.1754944e-38, %v693
  %v695 = vsel %vm692, %v694, %v690
  %v696 = vmul.f32 1.0, %v695
  %v697 = vrcp.pop %v565
  %v698 = vmul.f32 %v565, %v697
  %v699 = vsub.f32 1.0, %v698
  %v700 = vmul.f32 %v697, %v699
  %v701 = vadd.f32 %v697, %v700
  %vm702 = vweird.f32 %v565
  %vm703 = vweird.f32 %v697
  %vm704 = vmor %vm702, %vm703
  %v705 = vsel %vm704, %v697, %v701
  %v706 = vand.u32 2147483647, %v565
  %vm707 = vcmp.eq.f32.partialorder %v706, 8.507059e+37
  %v708 = vand.u32 %v565, 2147483648
  %v709 = vor.u32 1.1754944e-38, %v708
  %v710 = vsel %vm707, %v709, %v705
  %v711 = vmul.f32 1.0, %v710
  %v712 = vrcp.pop %v566
  %v713 = vmul.f32 %v566, %v712
  %v714 = vsub.f32 1.0, %v713
  %v715 = vmul.f32 %v712, %v714
  %v716 = vadd.f32 %v712, %v715
  %vm717 = vweird.f32 %v566
  %vm718 = vweird.f32 %v712
  %vm719 = vmor %vm717, %vm718
  %v720 = vsel %vm719, %v712, %v716
  %v721 = vand.u32 2147483647, %v566
  %vm722 = vcmp.eq.f32.partialorder %v721, 8.507059e+37
  %v723 = vand.u32 %v566, 2147483648
  %v724 = vor.u32 1.1754944e-38, %v723
  %v725 = vsel %vm722, %v724, %v720
  %v726 = vmul.f32 1.0, %v725
  %v727 = vrcp.pop %v567
  %v728 = vmul.f32 %v567, %v727
  %v729 = vsub.f32 1.0, %v728
  %v730 = vmul.f32 %v727, %v729
  %v731 = vadd.f32 %v727, %v730
  %vm732 = vweird.f32 %v567
  %vm733 = vweird.f32 %v727
  %vm734 = vmor %vm732, %vm733
  %v735 = vsel %vm734, %v727, %v731
  %v736 = vand.u32 2147483647, %v567
  %vm737 = vcmp.eq.f32.partialorder %v736, 8.507059e+37
  %v738 = vand.u32 %v567, 2147483648
  %v739 = vor.u32 1.1754944e-38, %v738
  %v740 = vsel %vm737, %v739, %v735
  %v741 = vmul.f32 1.0, %v740
  %v742 = vrcp.pop %v568
  %v743 = vmul.f32 %v568, %v742
  %v744 = vsub.f32 1.0, %v743
  %v745 = vmul.f32 %v742, %v744
  %v746 = vadd.f32 %v742, %v745
  %vm747 = vweird.f32 %v568
  %vm748 = vweird.f32 %v742
  %vm749 = vmor %vm747, %vm748
  %v750 = vsel %vm749, %v742, %v746
  %v751 = vand.u32 2147483647, %v568
  %vm752 = vcmp.eq.f32.partialorder %v751, 8.507059e+37
  %v753 = vand.u32 %v568, 2147483648
  %v754 = vor.u32 1.1754944e-38, %v753
  %v755 = vsel %vm752, %v754, %v750
  %v756 = vmul.f32 1.0, %v755
  %v757 = vrcp.pop %v569
  %v758 = vmul.f32 %v569, %v757
  %v759 = vsub.f32 1.0, %v758
  %v760 = vmul.f32 %v757, %v759
  %v761 = vadd.f32 %v757, %v760
  %vm762 = vweird.f32 %v569
  %vm763 = vweird.f32 %v757
  %vm764 = vmor %vm762, %vm763
  %v765 = vsel %vm764, %v757, %v761
  %v766 = vand.u32 2147483647, %v569
  %vm767 = vcmp.eq.f32.partialorder %v766, 8.507059e+37
  %v768 = vand.u32 %v569, 2147483648
  %v769 = vor.u32 1.1754944e-38, %v768
  %v770 = vsel %vm767, %v769, %v765
  %v771 = vmul.f32 1.0, %v770
  %v772 = vrcp.pop %v570
  %v773 = vmul.f32 %v570, %v772
  %v774 = vsub.f32 1.0, %v773
  %v775 = vmul.f32 %v772, %v774
  %v776 = vadd.f32 %v772, %v775
  %vm777 = vweird.f32 %v570
  %vm778 = vweird.f32 %v772
  %vm779 = vmor %vm777, %vm778
  %v780 = vsel %vm779, %v772, %v776
  %v781 = vand.u32 2147483647, %v570
  %vm782 = vcmp.eq.f32.partialorder %v781, 8.507059e+37
  %v783 = vand.u32 %v570, 2147483648
  %v784 = vor.u32 1.1754944e-38, %v783
  %v785 = vsel %vm782, %v784, %v780
  %v786 = vmul.f32 1.0, %v785
  %v787 = vrcp.pop %v571
  %v788 = vmul.f32 %v571, %v787
  %v789 = vsub.f32 1.0, %v788
  %v790 = vmul.f32 %v787, %v789
  %v791 = vadd.f32 %v787, %v790
  %vm792 = vweird.f32 %v571
  %vm793 = vweird.f32 %v787
  %vm794 = vmor %vm792, %vm793
  %v795 = vsel %vm794, %v787, %v791
  %v796 = vand.u32 2147483647, %v571
  %vm797 = vcmp.eq.f32.partialorder %v796, 8.507059e+37
  %v798 = vand.u32 %v571, 2147483648
  %v799 = vor.u32 1.1754944e-38, %v798
  %v800 = vsel %vm797, %v799, %v795
  %v801 = vmul.f32 1.0, %v800
  %v802 = vrcp.pop %v572
  %v803 = vmul.f32 %v572, %v802
  %v804 = vsub.f32 1.0, %v803
  %v805 = vmul.f32 %v802, %v804
  %v806 = vadd.f32 %v802, %v805
  %vm807 = vweird.f32 %v572
  %vm808 = vweird.f32 %v802
  %vm809 = vmor %vm807, %vm808
  %v810 = vsel %vm809, %v802, %v806
  %v811 = vand.u32 2147483647, %v572
  %vm812 = vcmp.eq.f32.partialorder %v811, 8.507059e+37
  %v813 = vand.u32 %v572, 2147483648
  %v814 = vor.u32 1.1754944e-38, %v813
  %v815 = vsel %vm812, %v814, %v810
  %v816 = vmul.f32 1.0, %v815
  %v817 = vrcp.pop %v573
  %v818 = vmul.f32 %v573, %v817
  %v819 = vsub.f32 1.0, %v818
  %v820 = vmul.f32 %v817, %v819
  %v821 = vadd.f32 %v817, %v820
  %vm822 = vweird.f32 %v573
  %vm823 = vweird.f32 %v817
  %vm824 = vmor %vm822, %vm823
  %v825 = vsel %vm824, %v817, %v821
  %v826 = vand.u32 2147483647, %v573
  %vm827 = vcmp.eq.f32.partialorder %v826, 8.507059e+37
  %v828 = vand.u32 %v573, 2147483648
  %v829 = vor.u32 1.1754944e-38, %v828
  %v830 = vsel %vm827, %v829, %v825
  %v831 = vmul.f32 1.0, %v830
  %v832 = vrcp.pop %v574
  %v833 = vmul.f32 %v574, %v832
  %v834 = vsub.f32 1.0, %v833
  %v835 = vmul.f32 %v832, %v834
  %v836 = vadd.f32 %v832, %v835
  %vm837 = vweird.f32 %v574
  %vm838 = vweird.f32 %v832
  %vm839 = vmor %vm837, %vm838
  %v840 = vsel %vm839, %v832, %v836
  %v841 = vand.u32 2147483647, %v574
  %vm842 = vcmp.eq.f32.partialorder %v841, 8.507059e+37
  %v843 = vand.u32 %v574, 2147483648
  %v844 = vor.u32 1.1754944e-38, %v843
  %v845 = vsel %vm842, %v844, %v840
  %v846 = vmul.f32 1.0, %v845
  %v847 = vrcp.pop %v575
  %v848 = vmul.f32 %v575, %v847
  %v849 = vsub.f32 1.0, %v848
  %v850 = vmul.f32 %v847, %v849
  %v851 = vadd.f32 %v847, %v850
  %vm852 = vweird.f32 %v575
  %vm853 = vweird.f32 %v847
  %vm854 = vmor %vm852, %vm853
  %v855 = vsel %vm854, %v847, %v851
  %v856 = vand.u32 2147483647, %v575
  %vm857 = vcmp.eq.f32.partialorder %v856, 8.507059e+37
  %v858 = vand.u32 %v575, 2147483648
  %v859 = vor.u32 1.1754944e-38, %v858
  %v860 = vsel %vm857, %v859, %v855
  %v861 = vmul.f32 1.0, %v860
  %v862 = vrcp.pop %v576
  %v863 = vmul.f32 %v576, %v862
  %v864 = vsub.f32 1.0, %v863
  %v865 = vmul.f32 %v862, %v864
  %v866 = vadd.f32 %v862, %v865
  %vm867 = vweird.f32 %v576
  %vm868 = vweird.f32 %v862
  %vm869 = vmor %vm867, %vm868
  %v870 = vsel %vm869, %v862, %v866
  %v871 = vand.u32 2147483647, %v576
  %vm872 = vcmp.eq.f32.partialorder %v871, 8.507059e+37
  %v873 = vand.u32 %v576, 2147483648
  %v874 = vor.u32 1.1754944e-38, %v873
  %v875 = vsel %vm872, %v874, %v870
  %v876 = vmul.f32 1.0, %v875
  %v877 = vrcp.pop %v577
  %v878 = vmul.f32 %v577, %v877
  %v879 = vsub.f32 1.0, %v878
  %v880 = vmul.f32 %v877, %v879
  %v881 = vadd.f32 %v877, %v880
  %vm882 = vweird.f32 %v577
  %vm883 = vweird.f32 %v877
  %vm884 = vmor %vm882, %vm883
  %v885 = vsel %vm884, %v877, %v881
  %v886 = vand.u32 2147483647, %v577
  %vm887 = vcmp.eq.f32.partialorder %v886, 8.507059e+37
  %v888 = vand.u32 %v577, 2147483648
  %v889 = vor.u32 1.1754944e-38, %v888
  %v890 = vsel %vm887, %v889, %v885
  %v891 = vmul.f32 1.0, %v890
  %v892 = vrcp.pop %v578
  %v893 = vmul.f32 %v578, %v892
  %v894 = vsub.f32 1.0, %v893
  %v895 = vmul.f32 %v892, %v894
  %v896 = vadd.f32 %v892, %v895
  %vm897 = vweird.f32 %v578
  %vm898 = vweird.f32 %v892
  %vm899 = vmor %vm897, %vm898
  %v900 = vsel %vm899, %v892, %v896
  %v901 = vand.u32 2147483647, %v578
  %vm902 = vcmp.eq.f32.partialorder %v901, 8.507059e+37
  %v903 = vand.u32 %v578, 2147483648
  %v904 = vor.u32 1.1754944e-38, %v903
  %v905 = vsel %vm902, %v904, %v900
  %v906 = vmul.f32 1.0, %v905
  %v907 = vrcp.pop %v579
  %v908 = vmul.f32 %v579, %v907
  %v909 = vsub.f32 1.0, %v908
  %v910 = vmul.f32 %v907, %v909
  %v911 = vadd.f32 %v907, %v910
  %vm912 = vweird.f32 %v579
  %vm913 = vweird.f32 %v907
  %vm914 = vmor %vm912, %vm913
  %v915 = vsel %vm914, %v907, %v911
  %v916 = vand.u32 2147483647, %v579
  %vm917 = vcmp.eq.f32.partialorder %v916, 8.507059e+37
  %v918 = vand.u32 %v579, 2147483648
  %v919 = vor.u32 1.1754944e-38, %v918
  %v920 = vsel %vm917, %v919, %v915
  %v921 = vmul.f32 1.0, %v920
  %v922 = vrcp.pop %v580
  %v923 = vmul.f32 %v580, %v922
  %v924 = vsub.f32 1.0, %v923
  %v925 = vmul.f32 %v922, %v924
  %v926 = vadd.f32 %v922, %v925
  %vm927 = vweird.f32 %v580
  %vm928 = vweird.f32 %v922
  %vm929 = vmor %vm927, %vm928
  %v930 = vsel %vm929, %v922, %v926
  %v931 = vand.u32 2147483647, %v580
  %vm932 = vcmp.eq.f32.partialorder %v931, 8.507059e+37
  %v933 = vand.u32 %v580, 2147483648
  %v934 = vor.u32 1.1754944e-38, %v933
  %v935 = vsel %vm932, %v934, %v930
  %v936 = vmul.f32 1.0, %v935
  %v937 = vrcp.pop %v581
  %v938 = vmul.f32 %v581, %v937
  %v939 = vsub.f32 1.0, %v938
  %v940 = vmul.f32 %v937, %v939
  %v941 = vadd.f32 %v937, %v940
  %vm942 = vweird.f32 %v581
  %vm943 = vweird.f32 %v937
  %vm944 = vmor %vm942, %vm943
  %v945 = vsel %vm944, %v937, %v941
  %v946 = vand.u32 2147483647, %v581
  %vm947 = vcmp.eq.f32.partialorder %v946, 8.507059e+37
  %v948 = vand.u32 %v581, 2147483648
  %v949 = vor.u32 1.1754944e-38, %v948
  %v950 = vsel %vm947, %v949, %v945
  %v951 = vmul.f32 1.0, %v950
  %v952 = vrcp.pop %v582
  %v953 = vmul.f32 %v582, %v952
  %v954 = vsub.f32 1.0, %v953
  %v955 = vmul.f32 %v952, %v954
  %v956 = vadd.f32 %v952, %v955
  %vm957 = vweird.f32 %v582
  %vm958 = vweird.f32 %v952
  %vm959 = vmor %vm957, %vm958
  %v960 = vsel %vm959, %v952, %v956
  %v961 = vand.u32 2147483647, %v582
  %vm962 = vcmp.eq.f32.partialorder %v961, 8.507059e+37
  %v963 = vand.u32 %v582, 2147483648
  %v964 = vor.u32 1.1754944e-38, %v963
  %v965 = vsel %vm962, %v964, %v960
  %v966 = vmul.f32 1.0, %v965
  %v967 = vrcp.pop %v583
  %v968 = vmul.f32 %v583, %v967
  %v969 = vsub.f32 1.0, %v968
  %v970 = vmul.f32 %v967, %v969
  %v971 = vadd.f32 %v967, %v970
  %vm972 = vweird.f32 %v583
  %vm973 = vweird.f32 %v967
  %vm974 = vmor %vm972, %vm973
  %v975 = vsel %vm974, %v967, %v971
  %v976 = vand.u32 2147483647, %v583
  %vm977 = vcmp.eq.f32.partialorder %v976, 8.507059e+37
  %v978 = vand.u32 %v583, 2147483648
  %v979 = vor.u32 1.1754944e-38, %v978
  %v980 = vsel %vm977, %v979, %v975
  %v981 = vmul.f32 1.0, %v980
  %v982 = vrcp.pop %v584
  %v983 = vmul.f32 %v584, %v982
  %v984 = vsub.f32 1.0, %v983
  %v985 = vmul.f32 %v982, %v984
  %v986 = vadd.f32 %v982, %v985
  %vm987 = vweird.f32 %v584
  %vm988 = vweird.f32 %v982
  %vm989 = vmor %vm987, %vm988
  %v990 = vsel %vm989, %v982, %v986
  %v991 = vand.u32 2147483647, %v584
  %vm992 = vcmp.eq.f32.partialorder %v991, 8.507059e+37
  %v993 = vand.u32 %v584, 2147483648
  %v994 = vor.u32 1.1754944e-38, %v993
  %v995 = vsel %vm992, %v994, %v990
  %v996 = vmul.f32 1.0, %v995
  %v997 = vrcp.pop %v585
  %v998 = vmul.f32 %v585, %v997
  %v999 = vsub.f32 1.0, %v998
  %v1000 = vmul.f32 %v997, %v999
  %v1001 = vadd.f32 %v997, %v1000
  %vm1002 = vweird.f32 %v585
  %vm1003 = vweird.f32 %v997
  %vm1004 = vmor %vm1002, %vm1003
  %v1005 = vsel %vm1004, %v997, %v1001
  %v1006 = vand.u32 2147483647, %v585
  %vm1007 = vcmp.eq.f32.partialorder %v1006, 8.507059e+37
  %v1008 = vand.u32 %v585, 2147483648
  %v1009 = vor.u32 1.1754944e-38, %v1008
  %v1010 = vsel %vm1007, %v1009, %v1005
  %v1011 = vmul.f32 1.0, %v1010
  %v1012 = vrcp.pop %v586
  %v1013 = vmul.f32 %v586, %v1012
  %v1014 = vsub.f32 1.0, %v1013
  %v1015 = vmul.f32 %v1012, %v1014
  %v1016 = vadd.f32 %v1012, %v1015
  %vm1017 = vweird.f32 %v586
  %vm1018 = vweird.f32 %v1012
  %vm1019 = vmor %vm1017, %vm1018
  %v1020 = vsel %vm1019, %v1012, %v1016
  %v1021 = vand.u32 2147483647, %v586
  %vm1022 = vcmp.eq.f32.partialorder %v1021, 8.507059e+37
  %v1023 = vand.u32 %v586, 2147483648
  %v1024 = vor.u32 1.1754944e-38, %v1023
  %v1025 = vsel %vm1022, %v1024, %v1020
  %v1026 = vmul.f32 1.0, %v1025
  %v1027 = vrcp.pop %v587
  %v1028 = vmul.f32 %v587, %v1027
  %v1029 = vsub.f32 1.0, %v1028
  %v1030 = vmul.f32 %v1027, %v1029
  %v1031 = vadd.f32 %v1027, %v1030
  %vm1032 = vweird.f32 %v587
  %vm1033 = vweird.f32 %v1027
  %vm1034 = vmor %vm1032, %vm1033
  %v1035 = vsel %vm1034, %v1027, %v1031
  %v1036 = vand.u32 2147483647, %v587
  %vm1037 = vcmp.eq.f32.partialorder %v1036, 8.507059e+37
  %v1038 = vand.u32 %v587, 2147483648
  %v1039 = vor.u32 1.1754944e-38, %v1038
  %v1040 = vsel %vm1037, %v1039, %v1035
  %v1041 = vmul.f32 1.0, %v1040
  %v1042 = vrcp.pop %v588
  %v1043 = vmul.f32 %v588, %v1042
  %v1044 = vsub.f32 1.0, %v1043
  %v1045 = vmul.f32 %v1042, %v1044
  %v1046 = vadd.f32 %v1042, %v1045
  %vm1047 = vweird.f32 %v588
  %vm1048 = vweird.f32 %v1042
  %vm1049 = vmor %vm1047, %vm1048
  %v1050 = vsel %vm1049, %v1042, %v1046
  %v1051 = vand.u32 2147483647, %v588
  %vm1052 = vcmp.eq.f32.partialorder %v1051, 8.507059e+37
  %v1053 = vand.u32 %v588, 2147483648
  %v1054 = vor.u32 1.1754944e-38, %v1053
  %v1055 = vsel %vm1052, %v1054, %v1050
  %v1056 = vmul.f32 1.0, %v1055
  %v1057 = vrcp.pop %v589
  %v1058 = vmul.f32 %v589, %v1057
  %v1059 = vsub.f32 1.0, %v1058
  %v1060 = vmul.f32 %v1057, %v1059
  %v1061 = vadd.f32 %v1057, %v1060
  %vm1062 = vweird.f32 %v589
  %vm1063 = vweird.f32 %v1057
  %vm1064 = vmor %vm1062, %vm1063
  %v1065 = vsel %vm1064, %v1057, %v1061
  %v1066 = vand.u32 2147483647, %v589
  %vm1067 = vcmp.eq.f32.partialorder %v1066, 8.507059e+37
  %v1068 = vand.u32 %v589, 2147483648
  %v1069 = vor.u32 1.1754944e-38, %v1068
  %v1070 = vsel %vm1067, %v1069, %v1065
  %v1071 = vmul.f32 1.0, %v1070
  %v1072 = vrcp.pop %v590
  %v1073 = vmul.f32 %v590, %v1072
  %v1074 = vsub.f32 1.0, %v1073
  %v1075 = vmul.f32 %v1072, %v1074
  %v1076 = vadd.f32 %v1072, %v1075
  %vm1077 = vweird.f32 %v590
  %vm1078 = vweird.f32 %v1072
  %vm1079 = vmor %vm1077, %vm1078
  %v1080 = vsel %vm1079, %v1072, %v1076
  %v1081 = vand.u32 2147483647, %v590
  %vm1082 = vcmp.eq.f32.partialorder %v1081, 8.507059e+37
  %v1083 = vand.u32 %v590, 2147483648
  %v1084 = vor.u32 1.1754944e-38, %v1083
  %v1085 = vsel %vm1082, %v1084, %v1080
  %v1086 = vmul.f32 1.0, %v1085
  %v1087 = vrcp.pop %v591
  %v1088 = vmul.f32 %v591, %v1087
  %v1089 = vsub.f32 1.0, %v1088
  %v1090 = vmul.f32 %v1087, %v1089
  %v1091 = vadd.f32 %v1087, %v1090
  %vm1092 = vweird.f32 %v591
  %vm1093 = vweird.f32 %v1087
  %vm1094 = vmor %vm1092, %vm1093
  %v1095 = vsel %vm1094, %v1087, %v1091
  %v1096 = vand.u32 2147483647, %v591
  %vm1097 = vcmp.eq.f32.partialorder %v1096, 8.507059e+37
  %v1098 = vand.u32 %v591, 2147483648
  %v1099 = vor.u32 1.1754944e-38, %v1098
  %v1100 = vsel %vm1097, %v1099, %v1095
  %v1101 = vmul.f32 1.0, %v1100
  %v1102 = vrcp.pop %v592
  %v1103 = vmul.f32 %v592, %v1102
  %v1104 = vsub.f32 1.0, %v1103
  %v1105 = vmul.f32 %v1102, %v1104
  %v1106 = vadd.f32 %v1102, %v1105
  %vm1107 = vweird.f32 %v592
  %vm1108 = vweird.f32 %v1102
  %vm1109 = vmor %vm1107, %vm1108
  %v1110 = vsel %vm1109, %v1102, %v1106
  %v1111 = vand.u32 2147483647, %v592
  %vm1112 = vcmp.eq.f32.partialorder %v1111, 8.507059e+37
  %v1113 = vand.u32 %v592, 2147483648
  %v1114 = vor.u32 1.1754944e-38, %v1113
  %v1115 = vsel %vm1112, %v1114, %v1110
  %v1116 = vmul.f32 1.0, %v1115
  %v1117 = vrcp.pop %v593
  %v1118 = vmul.f32 %v593, %v1117
  %v1119 = vsub.f32 1.0, %v1118
  %v1120 = vmul.f32 %v1117, %v1119
  %v1121 = vadd.f32 %v1117, %v1120
  %vm1122 = vweird.f32 %v593
  %vm1123 = vweird.f32 %v1117
  %vm1124 = vmor %vm1122, %vm1123
  %v1125 = vsel %vm1124, %v1117, %v1121
  %v1126 = vand.u32 2147483647, %v593
  %vm1127 = vcmp.eq.f32.partialorder %v1126, 8.507059e+37
  %v1128 = vand.u32 %v593, 2147483648
  %v1129 = vor.u32 1.1754944e-38, %v1128
  %v1130 = vsel %vm1127, %v1129, %v1125
  %v1131 = vmul.f32 1.0, %v1130
  %v1132 = vrcp.pop %v594
  %v1133 = vmul.f32 %v594, %v1132
  %v1134 = vsub.f32 1.0, %v1133
  %v1135 = vmul.f32 %v1132, %v1134
  %v1136 = vadd.f32 %v1132, %v1135
  %vm1137 = vweird.f32 %v594
  %vm1138 = vweird.f32 %v1132
  %vm1139 = vmor %vm1137, %vm1138
  %v1140 = vsel %vm1139, %v1132, %v1136
  %v1141 = vand.u32 2147483647, %v594
  %vm1142 = vcmp.eq.f32.partialorder %v1141, 8.507059e+37
  %v1143 = vand.u32 %v594, 2147483648
  %v1144 = vor.u32 1.1754944e-38, %v1143
  %v1145 = vsel %vm1142, %v1144, %v1140
  %v1146 = vmul.f32 1.0, %v1145
  %v1147 = vrcp.pop %v595
  %v1148 = vmul.f32 %v595, %v1147
  %v1149 = vsub.f32 1.0, %v1148
  %v1150 = vmul.f32 %v1147, %v1149
  %v1151 = vadd.f32 %v1147, %v1150
  %vm1152 = vweird.f32 %v595
  %vm1153 = vweird.f32 %v1147
  %vm1154 = vmor %vm1152, %vm1153
  %v1155 = vsel %vm1154, %v1147, %v1151
  %v1156 = vand.u32 2147483647, %v595
  %vm1157 = vcmp.eq.f32.partialorder %v1156, 8.507059e+37
  %v1158 = vand.u32 %v595, 2147483648
  %v1159 = vor.u32 1.1754944e-38, %v1158
  %v1160 = vsel %vm1157, %v1159, %v1155
  %v1161 = vmul.f32 1.0, %v1160
  %v1162 = vrcp.pop %v596
  %v1163 = vmul.f32 %v596, %v1162
  %v1164 = vsub.f32 1.0, %v1163
  %v1165 = vmul.f32 %v1162, %v1164
  %v1166 = vadd.f32 %v1162, %v1165
  %vm1167 = vweird.f32 %v596
  %vm1168 = vweird.f32 %v1162
  %vm1169 = vmor %vm1167, %vm1168
  %v1170 = vsel %vm1169, %v1162, %v1166
  %v1171 = vand.u32 2147483647, %v596
  %vm1172 = vcmp.eq.f32.partialorder %v1171, 8.507059e+37
  %v1173 = vand.u32 %v596, 2147483648
  %v1174 = vor.u32 1.1754944e-38, %v1173
  %v1175 = vsel %vm1172, %v1174, %v1170
  %v1176 = vmul.f32 1.0, %v1175
  %v1177 = vrcp.pop %v597
  %v1178 = vmul.f32 %v597, %v1177
  %v1179 = vsub.f32 1.0, %v1178
  %v1180 = vmul.f32 %v1177, %v1179
  %v1181 = vadd.f32 %v1177, %v1180
  %vm1182 = vweird.f32 %v597
  %vm1183 = vweird.f32 %v1177
  %vm1184 = vmor %vm1182, %vm1183
  %v1185 = vsel %vm1184, %v1177, %v1181
  %v1186 = vand.u32 2147483647, %v597
  %vm1187 = vcmp.eq.f32.partialorder %v1186, 8.507059e+37
  %v1188 = vand.u32 %v597, 2147483648
  %v1189 = vor.u32 1.1754944e-38, %v1188
  %v1190 = vsel %vm1187, %v1189, %v1185
  %v1191 = vmul.f32 1.0, %v1190
  %v1192 = vrcp.pop %v598
  %v1193 = vmul.f32 %v598, %v1192
  %v1194 = vsub.f32 1.0, %v1193
  %v1195 = vmul.f32 %v1192, %v1194
  %v1196 = vadd.f32 %v1192, %v1195
  %vm1197 = vweird.f32 %v598
  %vm1198 = vweird.f32 %v1192
  %vm1199 = vmor %vm1197, %vm1198
  %v1200 = vsel %vm1199, %v1192, %v1196
  %v1201 = vand.u32 2147483647, %v598
  %vm1202 = vcmp.eq.f32.partialorder %v1201, 8.507059e+37
  %v1203 = vand.u32 %v598, 2147483648
  %v1204 = vor.u32 1.1754944e-38, %v1203
  %v1205 = vsel %vm1202, %v1204, %v1200
  %v1206 = vmul.f32 1.0, %v1205
  %v1207 = vrcp.pop %v599
  %v1208 = vmul.f32 %v599, %v1207
  %v1209 = vsub.f32 1.0, %v1208
  %v1210 = vmul.f32 %v1207, %v1209
  %v1211 = vadd.f32 %v1207, %v1210
  %vm1212 = vweird.f32 %v599
  %vm1213 = vweird.f32 %v1207
  %vm1214 = vmor %vm1212, %vm1213
  %v1215 = vsel %vm1214, %v1207, %v1211
  %v1216 = vand.u32 2147483647, %v599
  %vm1217 = vcmp.eq.f32.partialorder %v1216, 8.507059e+37
  %v1218 = vand.u32 %v599, 2147483648
  %v1219 = vor.u32 1.1754944e-38, %v1218
  %v1220 = vsel %vm1217, %v1219, %v1215
  %v1221 = vmul.f32 1.0, %v1220
  %v1222 = vrcp.pop %v600
  %v1223 = vmul.f32 %v600, %v1222
  %v1224 = vsub.f32 1.0, %v1223
  %v1225 = vmul.f32 %v1222, %v1224
  %v1226 = vadd.f32 %v1222, %v1225
  %vm1227 = vweird.f32 %v600
  %vm1228 = vweird.f32 %v1222
  %vm1229 = vmor %vm1227, %vm1228
  %v1230 = vsel %vm1229, %v1222, %v1226
  %v1231 = vand.u32 2147483647, %v600
  %vm1232 = vcmp.eq.f32.partialorder %v1231, 8.507059e+37
  %v1233 = vand.u32 %v600, 2147483648
  %v1234 = vor.u32 1.1754944e-38, %v1233
  %v1235 = vsel %vm1232, %v1234, %v1230
  %v1236 = vmul.f32 1.0, %v1235
  %v1237 = vrcp.pop %v601
  %v1238 = vmul.f32 %v601, %v1237
  %v1239 = vsub.f32 1.0, %v1238
  %v1240 = vmul.f32 %v1237, %v1239
  %v1241 = vadd.f32 %v1237, %v1240
  %vm1242 = vweird.f32 %v601
  %vm1243 = vweird.f32 %v1237
  %vm1244 = vmor %vm1242, %vm1243
  %v1245 = vsel %vm1244, %v1237, %v1241
  %v1246 = vand.u32 2147483647, %v601
  %vm1247 = vcmp.eq.f32.partialorder %v1246, 8.507059e+37
  %v1248 = vand.u32 %v601, 2147483648
  %v1249 = vor.u32 1.1754944e-38, %v1248
  %v1250 = vsel %vm1247, %v1249, %v1245
  %v1251 = vmul.f32 1.0, %v1250
  %v1252 = vrcp.pop %v602
  %v1253 = vmul.f32 %v602, %v1252
  %v1254 = vsub.f32 1.0, %v1253
  %v1255 = vmul.f32 %v1252, %v1254
  %v1256 = vadd.f32 %v1252, %v1255
  %vm1257 = vweird.f32 %v602
  %vm1258 = vweird.f32 %v1252
  %vm1259 = vmor %vm1257, %vm1258
  %v1260 = vsel %vm1259, %v1252, %v1256
  %v1261 = vand.u32 2147483647, %v602
  %vm1262 = vcmp.eq.f32.partialorder %v1261, 8.507059e+37
  %v1263 = vand.u32 %v602, 2147483648
  %v1264 = vor.u32 1.1754944e-38, %v1263
  %v1265 = vsel %vm1262, %v1264, %v1260
  %v1266 = vmul.f32 1.0, %v1265
  %v1267 = vrcp.pop %v603
  %v1268 = vmul.f32 %v603, %v1267
  %v1269 = vsub.f32 1.0, %v1268
  %v1270 = vmul.f32 %v1267, %v1269
  %v1271 = vadd.f32 %v1267, %v1270
  %vm1272 = vweird.f32 %v603
  %vm1273 = vweird.f32 %v1267
  %vm1274 = vmor %vm1272, %vm1273
  %v1275 = vsel %vm1274, %v1267, %v1271
  %v1276 = vand.u32 2147483647, %v603
  %vm1277 = vcmp.eq.f32.partialorder %v1276, 8.507059e+37
  %v1278 = vand.u32 %v603, 2147483648
  %v1279 = vor.u32 1.1754944e-38, %v1278
  %v1280 = vsel %vm1277, %v1279, %v1275
  %v1281 = vmul.f32 1.0, %v1280
  %v1282 = vrcp.pop %v604
  %v1283 = vmul.f32 %v604, %v1282
  %v1284 = vsub.f32 1.0, %v1283
  %v1285 = vmul.f32 %v1282, %v1284
  %v1286 = vadd.f32 %v1282, %v1285
  %vm1287 = vweird.f32 %v604
  %vm1288 = vweird.f32 %v1282
  %vm1289 = vmor %vm1287, %vm1288
  %v1290 = vsel %vm1289, %v1282, %v1286
  %v1291 = vand.u32 2147483647, %v604
  %vm1292 = vcmp.eq.f32.partialorder %v1291, 8.507059e+37
  %v1293 = vand.u32 %v604, 2147483648
  %v1294 = vor.u32 1.1754944e-38, %v1293
  %v1295 = vsel %vm1292, %v1294, %v1290
  %v1296 = vmul.f32 1.0, %v1295
  %v1297 = vrcp.pop %v605
  %v1298 = vmul.f32 %v605, %v1297
  %v1299 = vsub.f32 1.0, %v1298
  %v1300 = vmul.f32 %v1297, %v1299
  %v1301 = vadd.f32 %v1297, %v1300
  %vm1302 = vweird.f32 %v605
  %vm1303 = vweird.f32 %v1297
  %vm1304 = vmor %vm1302, %vm1303
  %v1305 = vsel %vm1304, %v1297, %v1301
  %v1306 = vand.u32 2147483647, %v605
  %vm1307 = vcmp.eq.f32.partialorder %v1306, 8.507059e+37
  %v1308 = vand.u32 %v605, 2147483648
  %v1309 = vor.u32 1.1754944e-38, %v1308
  %v1310 = vsel %vm1307, %v1309, %v1305
  %v1311 = vmul.f32 1.0, %v1310
  %v1312 = vrcp.pop %v606
  %v1313 = vmul.f32 %v606, %v1312
  %v1314 = vsub.f32 1.0, %v1313
  %v1315 = vmul.f32 %v1312, %v1314
  %v1316 = vadd.f32 %v1312, %v1315
  %vm1317 = vweird.f32 %v606
  %vm1318 = vweird.f32 %v1312
  %vm1319 = vmor %vm1317, %vm1318
  %v1320 = vsel %vm1319, %v1312, %v1316
  %v1321 = vand.u32 2147483647, %v606
  %vm1322 = vcmp.eq.f32.partialorder %v1321, 8.507059e+37
  %v1323 = vand.u32 %v606, 2147483648
  %v1324 = vor.u32 1.1754944e-38, %v1323
  %v1325 = vsel %vm1322, %v1324, %v1320
  %v1326 = vmul.f32 1.0, %v1325
  %v1327 = vld [vmem:[%s6] sm:$0xff]
  %v1328 = vld [vmem:[%s6 + $0x8] sm:$0xff]
  %v1329 = vld [vmem:[%s6 + $0x10] sm:$0xff]
  %v1330 = vld [vmem:[%s6 + $0x18] sm:$0xff]
  %v1331 = vperm.slane %v53, 0
  %vm1332 = vcmask 261120
  %v1334 = vsel %vm1332, %v621, 0
  %v1337 = vsel %vm1332, %v636, 0
  %v1340 = vsel %vm1332, %v651, 0
  %v1343 = vsel %vm1332, %v666, 0
  %v1346 = vsel %vm1332, %v681, 0
  %v1349 = vsel %vm1332, %v696, 0
  %v1352 = vsel %vm1332, %v711, 0
  %v1355 = vsel %vm1332, %v726, 0
  %v1358 = vsel %vm1332, %v741, 0
  %v1361 = vsel %vm1332, %v756, 0
  %v1364 = vsel %vm1332, %v771, 0
  %v1367 = vsel %vm1332, %v786, 0
  %v1370 = vsel %vm1332, %v801, 0
  %v1373 = vsel %vm1332, %v816, 0
  %v1376 = vsel %vm1332, %v831, 0
  %v1379 = vsel %vm1332, %v846, 0
  %v1382 = vsel %vm1332, %v861, 0
  %v1385 = vsel %vm1332, %v876, 0
  %v1388 = vsel %vm1332, %v891, 0
  %v1391 = vsel %vm1332, %v906, 0
  %v1394 = vsel %vm1332, %v921, 0
  %v1397 = vsel %vm1332, %v936, 0
  %v1400 = vsel %vm1332, %v951, 0
  %v1403 = vsel %vm1332, %v966, 0
  %v1406 = vsel %vm1332, %v981, 0
  %v1409 = vsel %vm1332, %v996, 0
  %v1412 = vsel %vm1332, %v1011, 0
  %v1415 = vsel %vm1332, %v1026, 0
  %v1418 = vsel %vm1332, %v1041, 0
  %v1421 = vsel %vm1332, %v1056, 0
  %v1424 = vsel %vm1332, %v1071, 0
  %v1427 = vsel %vm1332, %v1086, 0
  %v1430 = vsel %vm1332, %v1101, 0
  %v1433 = vsel %vm1332, %v1116, 0
  %v1436 = vsel %vm1332, %v1131, 0
  %v1439 = vsel %vm1332, %v1146, 0
  %v1442 = vsel %vm1332, %v1161, 0
  %v1445 = vsel %vm1332, %v1176, 0
  %v1448 = vsel %vm1332, %v1191, 0
  %v1451 = vsel %vm1332, %v1206, 0
  %v1454 = vsel %vm1332, %v1221, 0
  %v1457 = vsel %vm1332, %v1236, 0
  %v1460 = vsel %vm1332, %v1251, 0
  %v1463 = vsel %vm1332, %v1266, 0
  %v1466 = vsel %vm1332, %v1281, 0
  %v1469 = vsel %vm1332, %v1296, 0
  %v1472 = vsel %vm1332, %v1311, 0
  %v1475 = vsel %vm1332, %v1326, 0
  %1477 = vmatpush.msra.mxu0 0.0
  %1478 = vmatpush.msra.mxu0 0.0
  %1479 = vmatpush.msra.mxu0 0.0
  %1480 = vmatpush.msra.mxu0 0.0
  %1481 = vmatpush.msra.mxu0 0.0
  %1482 = vmatpush.msra.mxu0 0.0
  %1483 = vmatpush.msra.mxu0 0.0
  %1484 = vmatpush.msra.mxu0 0.0
  %1485 = vmatpush.msra.mxu0 0.0
  %1486 = vmatpush.msra.mxu0 0.0
  %1487 = vmatpush.msra.mxu0 0.0
  %1488 = vmatpush.msra.mxu0 0.0
  %1489 = vmatpush.msra.mxu0 %v1330
  %1490 = vmatpush.msra.mxu0 %v1329
  %1491 = vmatpush.msra.mxu0 %v1328
  %1492 = vmatpush.msra.mxu0 %v1327
  %1493 = vmatmul.f32.gmra.mxu0 %v1334
  %v1494 = vpop.f32.mrf.mxu0
  %v1495 = vadd.f32 %v1331, %v1494
  %1496 = vmatmul.f32.gmra.mxu0 %v1337
  %v1497 = vpop.f32.mrf.mxu0
  %v1498 = vadd.f32 %v1331, %v1497
  %1499 = vmatmul.f32.gmra.mxu0 %v1340
  %v1500 = vpop.f32.mrf.mxu0
  %v1501 = vadd.f32 %v1331, %v1500
  %1502 = vmatmul.f32.gmra.mxu0 %v1343
  %v1503 = vpop.f32.mrf.mxu0
  %v1504 = vadd.f32 %v1331, %v1503
  %1505 = vmatmul.f32.gmra.mxu0 %v1346
  %v1506 = vpop.f32.mrf.mxu0
  %v1507 = vadd.f32 %v1331, %v1506
  %1508 = vmatmul.f32.gmra.mxu0 %v1349
  %v1509 = vpop.f32.mrf.mxu0
  %v1510 = vadd.f32 %v1331, %v1509
  %1511 = vmatmul.f32.gmra.mxu0 %v1352
  %v1512 = vpop.f32.mrf.mxu0
  %v1513 = vadd.f32 %v1331, %v1512
  %1514 = vmatmul.f32.gmra.mxu0 %v1355
  %v1515 = vpop.f32.mrf.mxu0
  %v1516 = vadd.f32 %v1331, %v1515
  %1517 = vmatmul.f32.gmra.mxu0 %v1358
  %v1518 = vpop.f32.mrf.mxu0
  %v1519 = vadd.f32 %v1331, %v1518
  %1520 = vmatmul.f32.gmra.mxu0 %v1361
  %v1521 = vpop.f32.mrf.mxu0
  %v1522 = vadd.f32 %v1331, %v1521
  %1523 = vmatmul.f32.gmra.mxu0 %v1364
  %v1524 = vpop.f32.mrf.mxu0
  %v1525 = vadd.f32 %v1331, %v1524
  %1526 = vmatmul.f32.gmra.mxu0 %v1367
  %v1527 = vpop.f32.mrf.mxu0
  %v1528 = vadd.f32 %v1331, %v1527
  %1529 = vmatmul.f32.gmra.mxu0 %v1370
  %v1530 = vpop.f32.mrf.mxu0
  %v1531 = vadd.f32 %v1331, %v1530
  %1532 = vmatmul.f32.gmra.mxu0 %v1373
  %v1533 = vpop.f32.mrf.mxu0
  %v1534 = vadd.f32 %v1331, %v1533
  %1535 = vmatmul.f32.gmra.mxu0 %v1376
  %v1536 = vpop.f32.mrf.mxu0
  %v1537 = vadd.f32 %v1331, %v1536
  %1538 = vmatmul.f32.gmra.mxu0 %v1379
  %v1539 = vpop.f32.mrf.mxu0
  %v1540 = vadd.f32 %v1331, %v1539
  %1541 = vmatmul.f32.gmra.mxu0 %v1382
  %v1542 = vpop.f32.mrf.mxu0
  %v1543 = vadd.f32 %v1331, %v1542
  %1544 = vmatmul.f32.gmra.mxu0 %v1385
  %v1545 = vpop.f32.mrf.mxu0
  %v1546 = vadd.f32 %v1331, %v1545
  %1547 = vmatmul.f32.gmra.mxu0 %v1388
  %v1548 = vpop.f32.mrf.mxu0
  %v1549 = vadd.f32 %v1331, %v1548
  %1550 = vmatmul.f32.gmra.mxu0 %v1391
  %v1551 = vpop.f32.mrf.mxu0
  %v1552 = vadd.f32 %v1331, %v1551
  %1553 = vmatmul.f32.gmra.mxu0 %v1394
  %v1554 = vpop.f32.mrf.mxu0
  %v1555 = vadd.f32 %v1331, %v1554
  %1556 = vmatmul.f32.gmra.mxu0 %v1397
  %v1557 = vpop.f32.mrf.mxu0
  %v1558 = vadd.f32 %v1331, %v1557
  %1559 = vmatmul.f32.gmra.mxu0 %v1400
  %v1560 = vpop.f32.mrf.mxu0
  %v1561 = vadd.f32 %v1331, %v1560
  %1562 = vmatmul.f32.gmra.mxu0 %v1403
  %v1563 = vpop.f32.mrf.mxu0
  %v1564 = vadd.f32 %v1331, %v1563
  %1565 = vmatmul.f32.gmra.mxu0 %v1406
  %v1566 = vpop.f32.mrf.mxu0
  %v1567 = vadd.f32 %v1331, %v1566
  %1568 = vmatmul.f32.gmra.mxu0 %v1409
  %v1569 = vpop.f32.mrf.mxu0
  %v1570 = vadd.f32 %v1331, %v1569
  %1571 = vmatmul.f32.gmra.mxu0 %v1412
  %v1572 = vpop.f32.mrf.mxu0
  %v1573 = vadd.f32 %v1331, %v1572
  %1574 = vmatmul.f32.gmra.mxu0 %v1415
  %v1575 = vpop.f32.mrf.mxu0
  %v1576 = vadd.f32 %v1331, %v1575
  %1577 = vmatmul.f32.gmra.mxu0 %v1418
  %v1578 = vpop.f32.mrf.mxu0
  %v1579 = vadd.f32 %v1331, %v1578
  %1580 = vmatmul.f32.gmra.mxu0 %v1421
  %v1581 = vpop.f32.mrf.mxu0
  %v1582 = vadd.f32 %v1331, %v1581
  %1583 = vmatmul.f32.gmra.mxu0 %v1424
  %v1584 = vpop.f32.mrf.mxu0
  %v1585 = vadd.f32 %v1331, %v1584
  %1586 = vmatmul.f32.gmra.mxu0 %v1427
  %v1587 = vpop.f32.mrf.mxu0
  %v1588 = vadd.f32 %v1331, %v1587
  %1589 = vmatmul.f32.gmra.mxu0 %v1430
  %v1590 = vpop.f32.mrf.mxu0
  %v1591 = vadd.f32 %v1331, %v1590
  %1592 = vmatmul.f32.gmra.mxu0 %v1433
  %v1593 = vpop.f32.mrf.mxu0
  %v1594 = vadd.f32 %v1331, %v1593
  %1595 = vmatmul.f32.gmra.mxu0 %v1436
  %v1596 = vpop.f32.mrf.mxu0
  %v1597 = vadd.f32 %v1331, %v1596
  %1598 = vmatmul.f32.gmra.mxu0 %v1439
  %v1599 = vpop.f32.mrf.mxu0
  %v1600 = vadd.f32 %v1331, %v1599
  %1601 = vmatmul.f32.gmra.mxu0 %v1442
  %v1602 = vpop.f32.mrf.mxu0
  %v1603 = vadd.f32 %v1331, %v1602
  %1604 = vmatmul.f32.gmra.mxu0 %v1445
  %v1605 = vpop.f32.mrf.mxu0
  %v1606 = vadd.f32 %v1331, %v1605
  %1607 = vmatmul.f32.gmra.mxu0 %v1448
  %v1608 = vpop.f32.mrf.mxu0
  %v1609 = vadd.f32 %v1331, %v1608
  %1610 = vmatmul.f32.gmra.mxu0 %v1451
  %v1611 = vpop.f32.mrf.mxu0
  %v1612 = vadd.f32 %v1331, %v1611
  %1613 = vmatmul.f32.gmra.mxu0 %v1454
  %v1614 = vpop.f32.mrf.mxu0
  %v1615 = vadd.f32 %v1331, %v1614
  %1616 = vmatmul.f32.gmra.mxu0 %v1457
  %v1617 = vpop.f32.mrf.mxu0
  %v1618 = vadd.f32 %v1331, %v1617
  %1619 = vmatmul.f32.gmra.mxu0 %v1460
  %v1620 = vpop.f32.mrf.mxu0
  %v1621 = vadd.f32 %v1331, %v1620
  %1622 = vmatmul.f32.gmra.mxu0 %v1463
  %v1623 = vpop.f32.mrf.mxu0
  %v1624 = vadd.f32 %v1331, %v1623
  %1625 = vmatmul.f32.gmra.mxu0 %v1466
  %v1626 = vpop.f32.mrf.mxu0
  %v1627 = vadd.f32 %v1331, %v1626
  %1628 = vmatmul.f32.gmra.mxu0 %v1469
  %v1629 = vpop.f32.mrf.mxu0
  %v1630 = vadd.f32 %v1331, %v1629
  %1631 = vmatmul.f32.gmra.mxu0 %v1472
  %v1632 = vpop.f32.mrf.mxu0
  %v1633 = vadd.f32 %v1331, %v1632
  %1634 = vmatmul.f32.gmra.mxu0 %v1475
  %v1635 = vpop.f32.mrf.mxu0
  %v1636 = vadd.f32 %v1331, %v1635
  %1637 = vdwg.mxu0
  %v1638 = vxor.u32 %v1495, 2147483648
  %v1639 = vxor.u32 %v1498, 2147483648
  %v1640 = vxor.u32 %v1501, 2147483648
  %v1641 = vxor.u32 %v1504, 2147483648
  %v1642 = vxor.u32 %v1507, 2147483648
  %v1643 = vxor.u32 %v1510, 2147483648
  %v1644 = vxor.u32 %v1513, 2147483648
  %v1645 = vxor.u32 %v1516, 2147483648
  %v1646 = vxor.u32 %v1519, 2147483648
  %v1647 = vxor.u32 %v1522, 2147483648
  %v1648 = vxor.u32 %v1525, 2147483648
  %v1649 = vxor.u32 %v1528, 2147483648
  %v1650 = vxor.u32 %v1531, 2147483648
  %v1651 = vxor.u32 %v1534, 2147483648
  %v1652 = vxor.u32 %v1537, 2147483648
  %v1653 = vxor.u32 %v1540, 2147483648
  %v1654 = vxor.u32 %v1543, 2147483648
  %v1655 = vxor.u32 %v1546, 2147483648
  %v1656 = vxor.u32 %v1549, 2147483648
  %v1657 = vxor.u32 %v1552, 2147483648
  %v1658 = vxor.u32 %v1555, 2147483648
  %v1659 = vxor.u32 %v1558, 2147483648
  %v1660 = vxor.u32 %v1561, 2147483648
  %v1661 = vxor.u32 %v1564, 2147483648
  %v1662 = vxor.u32 %v1567, 2147483648
  %v1663 = vxor.u32 %v1570, 2147483648
  %v1664 = vxor.u32 %v1573, 2147483648
  %v1665 = vxor.u32 %v1576, 2147483648
  %v1666 = vxor.u32 %v1579, 2147483648
  %v1667 = vxor.u32 %v1582, 2147483648
  %v1668 = vxor.u32 %v1585, 2147483648
  %v1669 = vxor.u32 %v1588, 2147483648
  %v1670 = vxor.u32 %v1591, 2147483648
  %v1671 = vxor.u32 %v1594, 2147483648
  %v1672 = vxor.u32 %v1597, 2147483648
  %v1673 = vxor.u32 %v1600, 2147483648
  %v1674 = vxor.u32 %v1603, 2147483648
  %v1675 = vxor.u32 %v1606, 2147483648
  %v1676 = vxor.u32 %v1609, 2147483648
  %v1677 = vxor.u32 %v1612, 2147483648
  %v1678 = vxor.u32 %v1615, 2147483648
  %v1679 = vxor.u32 %v1618, 2147483648
  %v1680 = vxor.u32 %v1621, 2147483648
  %v1681 = vxor.u32 %v1624, 2147483648
  %v1682 = vxor.u32 %v1627, 2147483648
  %v1683 = vxor.u32 %v1630, 2147483648
  %v1684 = vxor.u32 %v1633, 2147483648
  %v1685 = vxor.u32 %v1636, 2147483648
  %v1686 = vmul.f32 %v1638, 1.442695
  %v1687 = vpow.pop %v1686
  %v1688 = vmul.f32 %v1639, 1.442695
  %v1689 = vpow.pop %v1688
  %v1690 = vmul.f32 %v1640, 1.442695
  %v1691 = vpow.pop %v1690
  %v1692 = vmul.f32 %v1641, 1.442695
  %v1693 = vpow.pop %v1692
  %v1694 = vmul.f32 %v1642, 1.442695
  %v1695 = vpow.pop %v1694
  %v1696 = vmul.f32 %v1643, 1.442695
  %v1697 = vpow.pop %v1696
  %v1698 = vmul.f32 %v1644, 1.442695
  %v1699 = vpow.pop %v1698
  %v1700 = vmul.f32 %v1645, 1.442695
  %v1701 = vpow.pop %v1700
  %v1702 = vmul.f32 %v1646, 1.442695
  %v1703 = vpow.pop %v1702
  %v1704 = vmul.f32 %v1647, 1.442695
  %v1705 = vpow.pop %v1704
  %v1706 = vmul.f32 %v1648, 1.442695
  %v1707 = vpow.pop %v1706
  %v1708 = vmul.f32 %v1649, 1.442695
  %v1709 = vpow.pop %v1708
  %v1710 = vmul.f32 %v1650, 1.442695
  %v1711 = vpow.pop %v1710
  %v1712 = vmul.f32 %v1651, 1.442695
  %v1713 = vpow.pop %v1712
  %v1714 = vmul.f32 %v1652, 1.442695
  %v1715 = vpow.pop %v1714
  %v1716 = vmul.f32 %v1653, 1.442695
  %v1717 = vpow.pop %v1716
  %v1718 = vmul.f32 %v1654, 1.442695
  %v1719 = vpow.pop %v1718
  %v1720 = vmul.f32 %v1655, 1.442695
  %v1721 = vpow.pop %v1720
  %v1722 = vmul.f32 %v1656, 1.442695
  %v1723 = vpow.pop %v1722
  %v1724 = vmul.f32 %v1657, 1.442695
  %v1725 = vpow.pop %v1724
  %v1726 = vmul.f32 %v1658, 1.442695
  %v1727 = vpow.pop %v1726
  %v1728 = vmul.f32 %v1659, 1.442695
  %v1729 = vpow.pop %v1728
  %v1730 = vmul.f32 %v1660, 1.442695
  %v1731 = vpow.pop %v1730
  %v1732 = vmul.f32 %v1661, 1.442695
  %v1733 = vpow.pop %v1732
  %v1734 = vmul.f32 %v1662, 1.442695
  %v1735 = vpow.pop %v1734
  %v1736 = vmul.f32 %v1663, 1.442695
  %v1737 = vpow.pop %v1736
  %v1738 = vmul.f32 %v1664, 1.442695
  %v1739 = vpow.pop %v1738
  %v1740 = vmul.f32 %v1665, 1.442695
  %v1741 = vpow.pop %v1740
  %v1742 = vmul.f32 %v1666, 1.442695
  %v1743 = vpow.pop %v1742
  %v1744 = vmul.f32 %v1667, 1.442695
  %v1745 = vpow.pop %v1744
  %v1746 = vmul.f32 %v1668, 1.442695
  %v1747 = vpow.pop %v1746
  %v1748 = vmul.f32 %v1669, 1.442695
  %v1749 = vpow.pop %v1748
  %v1750 = vmul.f32 %v1670, 1.442695
  %v1751 = vpow.pop %v1750
  %v1752 = vmul.f32 %v1671, 1.442695
  %v1753 = vpow.pop %v1752
  %v1754 = vmul.f32 %v1672, 1.442695
  %v1755 = vpow.pop %v1754
  %v1756 = vmul.f32 %v1673, 1.442695
  %v1757 = vpow.pop %v1756
  %v1758 = vmul.f32 %v1674, 1.442695
  %v1759 = vpow.pop %v1758
  %v1760 = vmul.f32 %v1675, 1.442695
  %v1761 = vpow.pop %v1760
  %v1762 = vmul.f32 %v1676, 1.442695
  %v1763 = vpow.pop %v1762
  %v1764 = vmul.f32 %v1677, 1.442695
  %v1765 = vpow.pop %v1764
  %v1766 = vmul.f32 %v1678, 1.442695
  %v1767 = vpow.pop %v1766
  %v1768 = vmul.f32 %v1679, 1.442695
  %v1769 = vpow.pop %v1768
  %v1770 = vmul.f32 %v1680, 1.442695
  %v1771 = vpow.pop %v1770
  %v1772 = vmul.f32 %v1681, 1.442695
  %v1773 = vpow.pop %v1772
  %v1774 = vmul.f32 %v1682, 1.442695
  %v1775 = vpow.pop %v1774
  %v1776 = vmul.f32 %v1683, 1.442695
  %v1777 = vpow.pop %v1776
  %v1778 = vmul.f32 %v1684, 1.442695
  %v1779 = vpow.pop %v1778
  %v1780 = vmul.f32 %v1685, 1.442695
  %v1781 = vpow.pop %v1780
  %v1782 = vadd.f32 %v1687, 1.0
  %v1783 = vadd.f32 %v1689, 1.0
  %v1784 = vadd.f32 %v1691, 1.0
  %v1785 = vadd.f32 %v1693, 1.0
  %v1786 = vadd.f32 %v1695, 1.0
  %v1787 = vadd.f32 %v1697, 1.0
  %v1788 = vadd.f32 %v1699, 1.0
  %v1789 = vadd.f32 %v1701, 1.0
  %v1790 = vadd.f32 %v1703, 1.0
  %v1791 = vadd.f32 %v1705, 1.0
  %v1792 = vadd.f32 %v1707, 1.0
  %v1793 = vadd.f32 %v1709, 1.0
  %v1794 = vadd.f32 %v1711, 1.0
  %v1795 = vadd.f32 %v1713, 1.0
  %v1796 = vadd.f32 %v1715, 1.0
  %v1797 = vadd.f32 %v1717, 1.0
  %v1798 = vadd.f32 %v1719, 1.0
  %v1799 = vadd.f32 %v1721, 1.0
  %v1800 = vadd.f32 %v1723, 1.0
  %v1801 = vadd.f32 %v1725, 1.0
  %v1802 = vadd.f32 %v1727, 1.0
  %v1803 = vadd.f32 %v1729, 1.0
  %v1804 = vadd.f32 %v1731, 1.0
  %v1805 = vadd.f32 %v1733, 1.0
  %v1806 = vadd.f32 %v1735, 1.0
  %v1807 = vadd.f32 %v1737, 1.0
  %v1808 = vadd.f32 %v1739, 1.0
  %v1809 = vadd.f32 %v1741, 1.0
  %v1810 = vadd.f32 %v1743, 1.0
  %v1811 = vadd.f32 %v1745, 1.0
  %v1812 = vadd.f32 %v1747, 1.0
  %v1813 = vadd.f32 %v1749, 1.0
  %v1814 = vadd.f32 %v1751, 1.0
  %v1815 = vadd.f32 %v1753, 1.0
  %v1816 = vadd.f32 %v1755, 1.0
  %v1817 = vadd.f32 %v1757, 1.0
  %v1818 = vadd.f32 %v1759, 1.0
  %v1819 = vadd.f32 %v1761, 1.0
  %v1820 = vadd.f32 %v1763, 1.0
  %v1821 = vadd.f32 %v1765, 1.0
  %v1822 = vadd.f32 %v1767, 1.0
  %v1823 = vadd.f32 %v1769, 1.0
  %v1824 = vadd.f32 %v1771, 1.0
  %v1825 = vadd.f32 %v1773, 1.0
  %v1826 = vadd.f32 %v1775, 1.0
  %v1827 = vadd.f32 %v1777, 1.0
  %v1828 = vadd.f32 %v1779, 1.0
  %v1829 = vadd.f32 %v1781, 1.0
  %v1830 = vrcp.pop %v1782
  %v1831 = vmul.f32 %v1782, %v1830
  %v1832 = vsub.f32 1.0, %v1831
  %v1833 = vmul.f32 %v1830, %v1832
  %v1834 = vadd.f32 %v1830, %v1833
  %vm1835 = vweird.f32 %v1782
  %vm1836 = vweird.f32 %v1830
  %vm1837 = vmor %vm1835, %vm1836
  %v1838 = vsel %vm1837, %v1830, %v1834
  %v1839 = vand.u32 2147483647, %v1782
  %vm1840 = vcmp.eq.f32.partialorder %v1839, 8.507059e+37
  %v1841 = vand.u32 %v1782, 2147483648
  %v1842 = vor.u32 1.1754944e-38, %v1841
  %v1843 = vsel %vm1840, %v1842, %v1838
  %v1844 = vmul.f32 1.0, %v1843
  %v1845 = vrcp.pop %v1783
  %v1846 = vmul.f32 %v1783, %v1845
  %v1847 = vsub.f32 1.0, %v1846
  %v1848 = vmul.f32 %v1845, %v1847
  %v1849 = vadd.f32 %v1845, %v1848
  %vm1850 = vweird.f32 %v1783
  %vm1851 = vweird.f32 %v1845
  %vm1852 = vmor %vm1850, %vm1851
  %v1853 = vsel %vm1852, %v1845, %v1849
  %v1854 = vand.u32 2147483647, %v1783
  %vm1855 = vcmp.eq.f32.partialorder %v1854, 8.507059e+37
  %v1856 = vand.u32 %v1783, 2147483648
  %v1857 = vor.u32 1.1754944e-38, %v1856
  %v1858 = vsel %vm1855, %v1857, %v1853
  %v1859 = vmul.f32 1.0, %v1858
  %v1860 = vrcp.pop %v1784
  %v1861 = vmul.f32 %v1784, %v1860
  %v1862 = vsub.f32 1.0, %v1861
  %v1863 = vmul.f32 %v1860, %v1862
  %v1864 = vadd.f32 %v1860, %v1863
  %vm1865 = vweird.f32 %v1784
  %vm1866 = vweird.f32 %v1860
  %vm1867 = vmor %vm1865, %vm1866
  %v1868 = vsel %vm1867, %v1860, %v1864
  %v1869 = vand.u32 2147483647, %v1784
  %vm1870 = vcmp.eq.f32.partialorder %v1869, 8.507059e+37
  %v1871 = vand.u32 %v1784, 2147483648
  %v1872 = vor.u32 1.1754944e-38, %v1871
  %v1873 = vsel %vm1870, %v1872, %v1868
  %v1874 = vmul.f32 1.0, %v1873
  %v1875 = vrcp.pop %v1785
  %v1876 = vmul.f32 %v1785, %v1875
  %v1877 = vsub.f32 1.0, %v1876
  %v1878 = vmul.f32 %v1875, %v1877
  %v1879 = vadd.f32 %v1875, %v1878
  %vm1880 = vweird.f32 %v1785
  %vm1881 = vweird.f32 %v1875
  %vm1882 = vmor %vm1880, %vm1881
  %v1883 = vsel %vm1882, %v1875, %v1879
  %v1884 = vand.u32 2147483647, %v1785
  %vm1885 = vcmp.eq.f32.partialorder %v1884, 8.507059e+37
  %v1886 = vand.u32 %v1785, 2147483648
  %v1887 = vor.u32 1.1754944e-38, %v1886
  %v1888 = vsel %vm1885, %v1887, %v1883
  %v1889 = vmul.f32 1.0, %v1888
  %v1890 = vrcp.pop %v1786
  %v1891 = vmul.f32 %v1786, %v1890
  %v1892 = vsub.f32 1.0, %v1891
  %v1893 = vmul.f32 %v1890, %v1892
  %v1894 = vadd.f32 %v1890, %v1893
  %vm1895 = vweird.f32 %v1786
  %vm1896 = vweird.f32 %v1890
  %vm1897 = vmor %vm1895, %vm1896
  %v1898 = vsel %vm1897, %v1890, %v1894
  %v1899 = vand.u32 2147483647, %v1786
  %vm1900 = vcmp.eq.f32.partialorder %v1899, 8.507059e+37
  %v1901 = vand.u32 %v1786, 2147483648
  %v1902 = vor.u32 1.1754944e-38, %v1901
  %v1903 = vsel %vm1900, %v1902, %v1898
  %v1904 = vmul.f32 1.0, %v1903
  %v1905 = vrcp.pop %v1787
  %v1906 = vmul.f32 %v1787, %v1905
  %v1907 = vsub.f32 1.0, %v1906
  %v1908 = vmul.f32 %v1905, %v1907
  %v1909 = vadd.f32 %v1905, %v1908
  %vm1910 = vweird.f32 %v1787
  %vm1911 = vweird.f32 %v1905
  %vm1912 = vmor %vm1910, %vm1911
  %v1913 = vsel %vm1912, %v1905, %v1909
  %v1914 = vand.u32 2147483647, %v1787
  %vm1915 = vcmp.eq.f32.partialorder %v1914, 8.507059e+37
  %v1916 = vand.u32 %v1787, 2147483648
  %v1917 = vor.u32 1.1754944e-38, %v1916
  %v1918 = vsel %vm1915, %v1917, %v1913
  %v1919 = vmul.f32 1.0, %v1918
  %v1920 = vrcp.pop %v1788
  %v1921 = vmul.f32 %v1788, %v1920
  %v1922 = vsub.f32 1.0, %v1921
  %v1923 = vmul.f32 %v1920, %v1922
  %v1924 = vadd.f32 %v1920, %v1923
  %vm1925 = vweird.f32 %v1788
  %vm1926 = vweird.f32 %v1920
  %vm1927 = vmor %vm1925, %vm1926
  %v1928 = vsel %vm1927, %v1920, %v1924
  %v1929 = vand.u32 2147483647, %v1788
  %vm1930 = vcmp.eq.f32.partialorder %v1929, 8.507059e+37
  %v1931 = vand.u32 %v1788, 2147483648
  %v1932 = vor.u32 1.1754944e-38, %v1931
  %v1933 = vsel %vm1930, %v1932, %v1928
  %v1934 = vmul.f32 1.0, %v1933
  %v1935 = vrcp.pop %v1789
  %v1936 = vmul.f32 %v1789, %v1935
  %v1937 = vsub.f32 1.0, %v1936
  %v1938 = vmul.f32 %v1935, %v1937
  %v1939 = vadd.f32 %v1935, %v1938
  %vm1940 = vweird.f32 %v1789
  %vm1941 = vweird.f32 %v1935
  %vm1942 = vmor %vm1940, %vm1941
  %v1943 = vsel %vm1942, %v1935, %v1939
  %v1944 = vand.u32 2147483647, %v1789
  %vm1945 = vcmp.eq.f32.partialorder %v1944, 8.507059e+37
  %v1946 = vand.u32 %v1789, 2147483648
  %v1947 = vor.u32 1.1754944e-38, %v1946
  %v1948 = vsel %vm1945, %v1947, %v1943
  %v1949 = vmul.f32 1.0, %v1948
  %v1950 = vrcp.pop %v1790
  %v1951 = vmul.f32 %v1790, %v1950
  %v1952 = vsub.f32 1.0, %v1951
  %v1953 = vmul.f32 %v1950, %v1952
  %v1954 = vadd.f32 %v1950, %v1953
  %vm1955 = vweird.f32 %v1790
  %vm1956 = vweird.f32 %v1950
  %vm1957 = vmor %vm1955, %vm1956
  %v1958 = vsel %vm1957, %v1950, %v1954
  %v1959 = vand.u32 2147483647, %v1790
  %vm1960 = vcmp.eq.f32.partialorder %v1959, 8.507059e+37
  %v1961 = vand.u32 %v1790, 2147483648
  %v1962 = vor.u32 1.1754944e-38, %v1961
  %v1963 = vsel %vm1960, %v1962, %v1958
  %v1964 = vmul.f32 1.0, %v1963
  %v1965 = vrcp.pop %v1791
  %v1966 = vmul.f32 %v1791, %v1965
  %v1967 = vsub.f32 1.0, %v1966
  %v1968 = vmul.f32 %v1965, %v1967
  %v1969 = vadd.f32 %v1965, %v1968
  %vm1970 = vweird.f32 %v1791
  %vm1971 = vweird.f32 %v1965
  %vm1972 = vmor %vm1970, %vm1971
  %v1973 = vsel %vm1972, %v1965, %v1969
  %v1974 = vand.u32 2147483647, %v1791
  %vm1975 = vcmp.eq.f32.partialorder %v1974, 8.507059e+37
  %v1976 = vand.u32 %v1791, 2147483648
  %v1977 = vor.u32 1.1754944e-38, %v1976
  %v1978 = vsel %vm1975, %v1977, %v1973
  %v1979 = vmul.f32 1.0, %v1978
  %v1980 = vrcp.pop %v1792
  %v1981 = vmul.f32 %v1792, %v1980
  %v1982 = vsub.f32 1.0, %v1981
  %v1983 = vmul.f32 %v1980, %v1982
  %v1984 = vadd.f32 %v1980, %v1983
  %vm1985 = vweird.f32 %v1792
  %vm1986 = vweird.f32 %v1980
  %vm1987 = vmor %vm1985, %vm1986
  %v1988 = vsel %vm1987, %v1980, %v1984
  %v1989 = vand.u32 2147483647, %v1792
  %vm1990 = vcmp.eq.f32.partialorder %v1989, 8.507059e+37
  %v1991 = vand.u32 %v1792, 2147483648
  %v1992 = vor.u32 1.1754944e-38, %v1991
  %v1993 = vsel %vm1990, %v1992, %v1988
  %v1994 = vmul.f32 1.0, %v1993
  %v1995 = vrcp.pop %v1793
  %v1996 = vmul.f32 %v1793, %v1995
  %v1997 = vsub.f32 1.0, %v1996
  %v1998 = vmul.f32 %v1995, %v1997
  %v1999 = vadd.f32 %v1995, %v1998
  %vm2000 = vweird.f32 %v1793
  %vm2001 = vweird.f32 %v1995
  %vm2002 = vmor %vm2000, %vm2001
  %v2003 = vsel %vm2002, %v1995, %v1999
  %v2004 = vand.u32 2147483647, %v1793
  %vm2005 = vcmp.eq.f32.partialorder %v2004, 8.507059e+37
  %v2006 = vand.u32 %v1793, 2147483648
  %v2007 = vor.u32 1.1754944e-38, %v2006
  %v2008 = vsel %vm2005, %v2007, %v2003
  %v2009 = vmul.f32 1.0, %v2008
  %v2010 = vrcp.pop %v1794
  %v2011 = vmul.f32 %v1794, %v2010
  %v2012 = vsub.f32 1.0, %v2011
  %v2013 = vmul.f32 %v2010, %v2012
  %v2014 = vadd.f32 %v2010, %v2013
  %vm2015 = vweird.f32 %v1794
  %vm2016 = vweird.f32 %v2010
  %vm2017 = vmor %vm2015, %vm2016
  %v2018 = vsel %vm2017, %v2010, %v2014
  %v2019 = vand.u32 2147483647, %v1794
  %vm2020 = vcmp.eq.f32.partialorder %v2019, 8.507059e+37
  %v2021 = vand.u32 %v1794, 2147483648
  %v2022 = vor.u32 1.1754944e-38, %v2021
  %v2023 = vsel %vm2020, %v2022, %v2018
  %v2024 = vmul.f32 1.0, %v2023
  %v2025 = vrcp.pop %v1795
  %v2026 = vmul.f32 %v1795, %v2025
  %v2027 = vsub.f32 1.0, %v2026
  %v2028 = vmul.f32 %v2025, %v2027
  %v2029 = vadd.f32 %v2025, %v2028
  %vm2030 = vweird.f32 %v1795
  %vm2031 = vweird.f32 %v2025
  %vm2032 = vmor %vm2030, %vm2031
  %v2033 = vsel %vm2032, %v2025, %v2029
  %v2034 = vand.u32 2147483647, %v1795
  %vm2035 = vcmp.eq.f32.partialorder %v2034, 8.507059e+37
  %v2036 = vand.u32 %v1795, 2147483648
  %v2037 = vor.u32 1.1754944e-38, %v2036
  %v2038 = vsel %vm2035, %v2037, %v2033
  %v2039 = vmul.f32 1.0, %v2038
  %v2040 = vrcp.pop %v1796
  %v2041 = vmul.f32 %v1796, %v2040
  %v2042 = vsub.f32 1.0, %v2041
  %v2043 = vmul.f32 %v2040, %v2042
  %v2044 = vadd.f32 %v2040, %v2043
  %vm2045 = vweird.f32 %v1796
  %vm2046 = vweird.f32 %v2040
  %vm2047 = vmor %vm2045, %vm2046
  %v2048 = vsel %vm2047, %v2040, %v2044
  %v2049 = vand.u32 2147483647, %v1796
  %vm2050 = vcmp.eq.f32.partialorder %v2049, 8.507059e+37
  %v2051 = vand.u32 %v1796, 2147483648
  %v2052 = vor.u32 1.1754944e-38, %v2051
  %v2053 = vsel %vm2050, %v2052, %v2048
  %v2054 = vmul.f32 1.0, %v2053
  %v2055 = vrcp.pop %v1797
  %v2056 = vmul.f32 %v1797, %v2055
  %v2057 = vsub.f32 1.0, %v2056
  %v2058 = vmul.f32 %v2055, %v2057
  %v2059 = vadd.f32 %v2055, %v2058
  %vm2060 = vweird.f32 %v1797
  %vm2061 = vweird.f32 %v2055
  %vm2062 = vmor %vm2060, %vm2061
  %v2063 = vsel %vm2062, %v2055, %v2059
  %v2064 = vand.u32 2147483647, %v1797
  %vm2065 = vcmp.eq.f32.partialorder %v2064, 8.507059e+37
  %v2066 = vand.u32 %v1797, 2147483648
  %v2067 = vor.u32 1.1754944e-38, %v2066
  %v2068 = vsel %vm2065, %v2067, %v2063
  %v2069 = vmul.f32 1.0, %v2068
  %v2070 = vrcp.pop %v1798
  %v2071 = vmul.f32 %v1798, %v2070
  %v2072 = vsub.f32 1.0, %v2071
  %v2073 = vmul.f32 %v2070, %v2072
  %v2074 = vadd.f32 %v2070, %v2073
  %vm2075 = vweird.f32 %v1798
  %vm2076 = vweird.f32 %v2070
  %vm2077 = vmor %vm2075, %vm2076
  %v2078 = vsel %vm2077, %v2070, %v2074
  %v2079 = vand.u32 2147483647, %v1798
  %vm2080 = vcmp.eq.f32.partialorder %v2079, 8.507059e+37
  %v2081 = vand.u32 %v1798, 2147483648
  %v2082 = vor.u32 1.1754944e-38, %v2081
  %v2083 = vsel %vm2080, %v2082, %v2078
  %v2084 = vmul.f32 1.0, %v2083
  %v2085 = vrcp.pop %v1799
  %v2086 = vmul.f32 %v1799, %v2085
  %v2087 = vsub.f32 1.0, %v2086
  %v2088 = vmul.f32 %v2085, %v2087
  %v2089 = vadd.f32 %v2085, %v2088
  %vm2090 = vweird.f32 %v1799
  %vm2091 = vweird.f32 %v2085
  %vm2092 = vmor %vm2090, %vm2091
  %v2093 = vsel %vm2092, %v2085, %v2089
  %v2094 = vand.u32 2147483647, %v1799
  %vm2095 = vcmp.eq.f32.partialorder %v2094, 8.507059e+37
  %v2096 = vand.u32 %v1799, 2147483648
  %v2097 = vor.u32 1.1754944e-38, %v2096
  %v2098 = vsel %vm2095, %v2097, %v2093
  %v2099 = vmul.f32 1.0, %v2098
  %v2100 = vrcp.pop %v1800
  %v2101 = vmul.f32 %v1800, %v2100
  %v2102 = vsub.f32 1.0, %v2101
  %v2103 = vmul.f32 %v2100, %v2102
  %v2104 = vadd.f32 %v2100, %v2103
  %vm2105 = vweird.f32 %v1800
  %vm2106 = vweird.f32 %v2100
  %vm2107 = vmor %vm2105, %vm2106
  %v2108 = vsel %vm2107, %v2100, %v2104
  %v2109 = vand.u32 2147483647, %v1800
  %vm2110 = vcmp.eq.f32.partialorder %v2109, 8.507059e+37
  %v2111 = vand.u32 %v1800, 2147483648
  %v2112 = vor.u32 1.1754944e-38, %v2111
  %v2113 = vsel %vm2110, %v2112, %v2108
  %v2114 = vmul.f32 1.0, %v2113
  %v2115 = vrcp.pop %v1801
  %v2116 = vmul.f32 %v1801, %v2115
  %v2117 = vsub.f32 1.0, %v2116
  %v2118 = vmul.f32 %v2115, %v2117
  %v2119 = vadd.f32 %v2115, %v2118
  %vm2120 = vweird.f32 %v1801
  %vm2121 = vweird.f32 %v2115
  %vm2122 = vmor %vm2120, %vm2121
  %v2123 = vsel %vm2122, %v2115, %v2119
  %v2124 = vand.u32 2147483647, %v1801
  %vm2125 = vcmp.eq.f32.partialorder %v2124, 8.507059e+37
  %v2126 = vand.u32 %v1801, 2147483648
  %v2127 = vor.u32 1.1754944e-38, %v2126
  %v2128 = vsel %vm2125, %v2127, %v2123
  %v2129 = vmul.f32 1.0, %v2128
  %v2130 = vrcp.pop %v1802
  %v2131 = vmul.f32 %v1802, %v2130
  %v2132 = vsub.f32 1.0, %v2131
  %v2133 = vmul.f32 %v2130, %v2132
  %v2134 = vadd.f32 %v2130, %v2133
  %vm2135 = vweird.f32 %v1802
  %vm2136 = vweird.f32 %v2130
  %vm2137 = vmor %vm2135, %vm2136
  %v2138 = vsel %vm2137, %v2130, %v2134
  %v2139 = vand.u32 2147483647, %v1802
  %vm2140 = vcmp.eq.f32.partialorder %v2139, 8.507059e+37
  %v2141 = vand.u32 %v1802, 2147483648
  %v2142 = vor.u32 1.1754944e-38, %v2141
  %v2143 = vsel %vm2140, %v2142, %v2138
  %v2144 = vmul.f32 1.0, %v2143
  %v2145 = vrcp.pop %v1803
  %v2146 = vmul.f32 %v1803, %v2145
  %v2147 = vsub.f32 1.0, %v2146
  %v2148 = vmul.f32 %v2145, %v2147
  %v2149 = vadd.f32 %v2145, %v2148
  %vm2150 = vweird.f32 %v1803
  %vm2151 = vweird.f32 %v2145
  %vm2152 = vmor %vm2150, %vm2151
  %v2153 = vsel %vm2152, %v2145, %v2149
  %v2154 = vand.u32 2147483647, %v1803
  %vm2155 = vcmp.eq.f32.partialorder %v2154, 8.507059e+37
  %v2156 = vand.u32 %v1803, 2147483648
  %v2157 = vor.u32 1.1754944e-38, %v2156
  %v2158 = vsel %vm2155, %v2157, %v2153
  %v2159 = vmul.f32 1.0, %v2158
  %v2160 = vrcp.pop %v1804
  %v2161 = vmul.f32 %v1804, %v2160
  %v2162 = vsub.f32 1.0, %v2161
  %v2163 = vmul.f32 %v2160, %v2162
  %v2164 = vadd.f32 %v2160, %v2163
  %vm2165 = vweird.f32 %v1804
  %vm2166 = vweird.f32 %v2160
  %vm2167 = vmor %vm2165, %vm2166
  %v2168 = vsel %vm2167, %v2160, %v2164
  %v2169 = vand.u32 2147483647, %v1804
  %vm2170 = vcmp.eq.f32.partialorder %v2169, 8.507059e+37
  %v2171 = vand.u32 %v1804, 2147483648
  %v2172 = vor.u32 1.1754944e-38, %v2171
  %v2173 = vsel %vm2170, %v2172, %v2168
  %v2174 = vmul.f32 1.0, %v2173
  %v2175 = vrcp.pop %v1805
  %v2176 = vmul.f32 %v1805, %v2175
  %v2177 = vsub.f32 1.0, %v2176
  %v2178 = vmul.f32 %v2175, %v2177
  %v2179 = vadd.f32 %v2175, %v2178
  %vm2180 = vweird.f32 %v1805
  %vm2181 = vweird.f32 %v2175
  %vm2182 = vmor %vm2180, %vm2181
  %v2183 = vsel %vm2182, %v2175, %v2179
  %v2184 = vand.u32 2147483647, %v1805
  %vm2185 = vcmp.eq.f32.partialorder %v2184, 8.507059e+37
  %v2186 = vand.u32 %v1805, 2147483648
  %v2187 = vor.u32 1.1754944e-38, %v2186
  %v2188 = vsel %vm2185, %v2187, %v2183
  %v2189 = vmul.f32 1.0, %v2188
  %v2190 = vrcp.pop %v1806
  %v2191 = vmul.f32 %v1806, %v2190
  %v2192 = vsub.f32 1.0, %v2191
  %v2193 = vmul.f32 %v2190, %v2192
  %v2194 = vadd.f32 %v2190, %v2193
  %vm2195 = vweird.f32 %v1806
  %vm2196 = vweird.f32 %v2190
  %vm2197 = vmor %vm2195, %vm2196
  %v2198 = vsel %vm2197, %v2190, %v2194
  %v2199 = vand.u32 2147483647, %v1806
  %vm2200 = vcmp.eq.f32.partialorder %v2199, 8.507059e+37
  %v2201 = vand.u32 %v1806, 2147483648
  %v2202 = vor.u32 1.1754944e-38, %v2201
  %v2203 = vsel %vm2200, %v2202, %v2198
  %v2204 = vmul.f32 1.0, %v2203
  %v2205 = vrcp.pop %v1807
  %v2206 = vmul.f32 %v1807, %v2205
  %v2207 = vsub.f32 1.0, %v2206
  %v2208 = vmul.f32 %v2205, %v2207
  %v2209 = vadd.f32 %v2205, %v2208
  %vm2210 = vweird.f32 %v1807
  %vm2211 = vweird.f32 %v2205
  %vm2212 = vmor %vm2210, %vm2211
  %v2213 = vsel %vm2212, %v2205, %v2209
  %v2214 = vand.u32 2147483647, %v1807
  %vm2215 = vcmp.eq.f32.partialorder %v2214, 8.507059e+37
  %v2216 = vand.u32 %v1807, 2147483648
  %v2217 = vor.u32 1.1754944e-38, %v2216
  %v2218 = vsel %vm2215, %v2217, %v2213
  %v2219 = vmul.f32 1.0, %v2218
  %v2220 = vrcp.pop %v1808
  %v2221 = vmul.f32 %v1808, %v2220
  %v2222 = vsub.f32 1.0, %v2221
  %v2223 = vmul.f32 %v2220, %v2222
  %v2224 = vadd.f32 %v2220, %v2223
  %vm2225 = vweird.f32 %v1808
  %vm2226 = vweird.f32 %v2220
  %vm2227 = vmor %vm2225, %vm2226
  %v2228 = vsel %vm2227, %v2220, %v2224
  %v2229 = vand.u32 2147483647, %v1808
  %vm2230 = vcmp.eq.f32.partialorder %v2229, 8.507059e+37
  %v2231 = vand.u32 %v1808, 2147483648
  %v2232 = vor.u32 1.1754944e-38, %v2231
  %v2233 = vsel %vm2230, %v2232, %v2228
  %v2234 = vmul.f32 1.0, %v2233
  %v2235 = vrcp.pop %v1809
  %v2236 = vmul.f32 %v1809, %v2235
  %v2237 = vsub.f32 1.0, %v2236
  %v2238 = vmul.f32 %v2235, %v2237
  %v2239 = vadd.f32 %v2235, %v2238
  %vm2240 = vweird.f32 %v1809
  %vm2241 = vweird.f32 %v2235
  %vm2242 = vmor %vm2240, %vm2241
  %v2243 = vsel %vm2242, %v2235, %v2239
  %v2244 = vand.u32 2147483647, %v1809
  %vm2245 = vcmp.eq.f32.partialorder %v2244, 8.507059e+37
  %v2246 = vand.u32 %v1809, 2147483648
  %v2247 = vor.u32 1.1754944e-38, %v2246
  %v2248 = vsel %vm2245, %v2247, %v2243
  %v2249 = vmul.f32 1.0, %v2248
  %v2250 = vrcp.pop %v1810
  %v2251 = vmul.f32 %v1810, %v2250
  %v2252 = vsub.f32 1.0, %v2251
  %v2253 = vmul.f32 %v2250, %v2252
  %v2254 = vadd.f32 %v2250, %v2253
  %vm2255 = vweird.f32 %v1810
  %vm2256 = vweird.f32 %v2250
  %vm2257 = vmor %vm2255, %vm2256
  %v2258 = vsel %vm2257, %v2250, %v2254
  %v2259 = vand.u32 2147483647, %v1810
  %vm2260 = vcmp.eq.f32.partialorder %v2259, 8.507059e+37
  %v2261 = vand.u32 %v1810, 2147483648
  %v2262 = vor.u32 1.1754944e-38, %v2261
  %v2263 = vsel %vm2260, %v2262, %v2258
  %v2264 = vmul.f32 1.0, %v2263
  %v2265 = vrcp.pop %v1811
  %v2266 = vmul.f32 %v1811, %v2265
  %v2267 = vsub.f32 1.0, %v2266
  %v2268 = vmul.f32 %v2265, %v2267
  %v2269 = vadd.f32 %v2265, %v2268
  %vm2270 = vweird.f32 %v1811
  %vm2271 = vweird.f32 %v2265
  %vm2272 = vmor %vm2270, %vm2271
  %v2273 = vsel %vm2272, %v2265, %v2269
  %v2274 = vand.u32 2147483647, %v1811
  %vm2275 = vcmp.eq.f32.partialorder %v2274, 8.507059e+37
  %v2276 = vand.u32 %v1811, 2147483648
  %v2277 = vor.u32 1.1754944e-38, %v2276
  %v2278 = vsel %vm2275, %v2277, %v2273
  %v2279 = vmul.f32 1.0, %v2278
  %v2280 = vrcp.pop %v1812
  %v2281 = vmul.f32 %v1812, %v2280
  %v2282 = vsub.f32 1.0, %v2281
  %v2283 = vmul.f32 %v2280, %v2282
  %v2284 = vadd.f32 %v2280, %v2283
  %vm2285 = vweird.f32 %v1812
  %vm2286 = vweird.f32 %v2280
  %vm2287 = vmor %vm2285, %vm2286
  %v2288 = vsel %vm2287, %v2280, %v2284
  %v2289 = vand.u32 2147483647, %v1812
  %vm2290 = vcmp.eq.f32.partialorder %v2289, 8.507059e+37
  %v2291 = vand.u32 %v1812, 2147483648
  %v2292 = vor.u32 1.1754944e-38, %v2291
  %v2293 = vsel %vm2290, %v2292, %v2288
  %v2294 = vmul.f32 1.0, %v2293
  %v2295 = vrcp.pop %v1813
  %v2296 = vmul.f32 %v1813, %v2295
  %v2297 = vsub.f32 1.0, %v2296
  %v2298 = vmul.f32 %v2295, %v2297
  %v2299 = vadd.f32 %v2295, %v2298
  %vm2300 = vweird.f32 %v1813
  %vm2301 = vweird.f32 %v2295
  %vm2302 = vmor %vm2300, %vm2301
  %v2303 = vsel %vm2302, %v2295, %v2299
  %v2304 = vand.u32 2147483647, %v1813
  %vm2305 = vcmp.eq.f32.partialorder %v2304, 8.507059e+37
  %v2306 = vand.u32 %v1813, 2147483648
  %v2307 = vor.u32 1.1754944e-38, %v2306
  %v2308 = vsel %vm2305, %v2307, %v2303
  %v2309 = vmul.f32 1.0, %v2308
  %v2310 = vrcp.pop %v1814
  %v2311 = vmul.f32 %v1814, %v2310
  %v2312 = vsub.f32 1.0, %v2311
  %v2313 = vmul.f32 %v2310, %v2312
  %v2314 = vadd.f32 %v2310, %v2313
  %vm2315 = vweird.f32 %v1814
  %vm2316 = vweird.f32 %v2310
  %vm2317 = vmor %vm2315, %vm2316
  %v2318 = vsel %vm2317, %v2310, %v2314
  %v2319 = vand.u32 2147483647, %v1814
  %vm2320 = vcmp.eq.f32.partialorder %v2319, 8.507059e+37
  %v2321 = vand.u32 %v1814, 2147483648
  %v2322 = vor.u32 1.1754944e-38, %v2321
  %v2323 = vsel %vm2320, %v2322, %v2318
  %v2324 = vmul.f32 1.0, %v2323
  %v2325 = vrcp.pop %v1815
  %v2326 = vmul.f32 %v1815, %v2325
  %v2327 = vsub.f32 1.0, %v2326
  %v2328 = vmul.f32 %v2325, %v2327
  %v2329 = vadd.f32 %v2325, %v2328
  %vm2330 = vweird.f32 %v1815
  %vm2331 = vweird.f32 %v2325
  %vm2332 = vmor %vm2330, %vm2331
  %v2333 = vsel %vm2332, %v2325, %v2329
  %v2334 = vand.u32 2147483647, %v1815
  %vm2335 = vcmp.eq.f32.partialorder %v2334, 8.507059e+37
  %v2336 = vand.u32 %v1815, 2147483648
  %v2337 = vor.u32 1.1754944e-38, %v2336
  %v2338 = vsel %vm2335, %v2337, %v2333
  %v2339 = vmul.f32 1.0, %v2338
  %v2340 = vrcp.pop %v1816
  %v2341 = vmul.f32 %v1816, %v2340
  %v2342 = vsub.f32 1.0, %v2341
  %v2343 = vmul.f32 %v2340, %v2342
  %v2344 = vadd.f32 %v2340, %v2343
  %vm2345 = vweird.f32 %v1816
  %vm2346 = vweird.f32 %v2340
  %vm2347 = vmor %vm2345, %vm2346
  %v2348 = vsel %vm2347, %v2340, %v2344
  %v2349 = vand.u32 2147483647, %v1816
  %vm2350 = vcmp.eq.f32.partialorder %v2349, 8.507059e+37
  %v2351 = vand.u32 %v1816, 2147483648
  %v2352 = vor.u32 1.1754944e-38, %v2351
  %v2353 = vsel %vm2350, %v2352, %v2348
  %v2354 = vmul.f32 1.0, %v2353
  %v2355 = vrcp.pop %v1817
  %v2356 = vmul.f32 %v1817, %v2355
  %v2357 = vsub.f32 1.0, %v2356
  %v2358 = vmul.f32 %v2355, %v2357
  %v2359 = vadd.f32 %v2355, %v2358
  %vm2360 = vweird.f32 %v1817
  %vm2361 = vweird.f32 %v2355
  %vm2362 = vmor %vm2360, %vm2361
  %v2363 = vsel %vm2362, %v2355, %v2359
  %v2364 = vand.u32 2147483647, %v1817
  %vm2365 = vcmp.eq.f32.partialorder %v2364, 8.507059e+37
  %v2366 = vand.u32 %v1817, 2147483648
  %v2367 = vor.u32 1.1754944e-38, %v2366
  %v2368 = vsel %vm2365, %v2367, %v2363
  %v2369 = vmul.f32 1.0, %v2368
  %v2370 = vrcp.pop %v1818
  %v2371 = vmul.f32 %v1818, %v2370
  %v2372 = vsub.f32 1.0, %v2371
  %v2373 = vmul.f32 %v2370, %v2372
  %v2374 = vadd.f32 %v2370, %v2373
  %vm2375 = vweird.f32 %v1818
  %vm2376 = vweird.f32 %v2370
  %vm2377 = vmor %vm2375, %vm2376
  %v2378 = vsel %vm2377, %v2370, %v2374
  %v2379 = vand.u32 2147483647, %v1818
  %vm2380 = vcmp.eq.f32.partialorder %v2379, 8.507059e+37
  %v2381 = vand.u32 %v1818, 2147483648
  %v2382 = vor.u32 1.1754944e-38, %v2381
  %v2383 = vsel %vm2380, %v2382, %v2378
  %v2384 = vmul.f32 1.0, %v2383
  %v2385 = vrcp.pop %v1819
  %v2386 = vmul.f32 %v1819, %v2385
  %v2387 = vsub.f32 1.0, %v2386
  %v2388 = vmul.f32 %v2385, %v2387
  %v2389 = vadd.f32 %v2385, %v2388
  %vm2390 = vweird.f32 %v1819
  %vm2391 = vweird.f32 %v2385
  %vm2392 = vmor %vm2390, %vm2391
  %v2393 = vsel %vm2392, %v2385, %v2389
  %v2394 = vand.u32 2147483647, %v1819
  %vm2395 = vcmp.eq.f32.partialorder %v2394, 8.507059e+37
  %v2396 = vand.u32 %v1819, 2147483648
  %v2397 = vor.u32 1.1754944e-38, %v2396
  %v2398 = vsel %vm2395, %v2397, %v2393
  %v2399 = vmul.f32 1.0, %v2398
  %v2400 = vrcp.pop %v1820
  %v2401 = vmul.f32 %v1820, %v2400
  %v2402 = vsub.f32 1.0, %v2401
  %v2403 = vmul.f32 %v2400, %v2402
  %v2404 = vadd.f32 %v2400, %v2403
  %vm2405 = vweird.f32 %v1820
  %vm2406 = vweird.f32 %v2400
  %vm2407 = vmor %vm2405, %vm2406
  %v2408 = vsel %vm2407, %v2400, %v2404
  %v2409 = vand.u32 2147483647, %v1820
  %vm2410 = vcmp.eq.f32.partialorder %v2409, 8.507059e+37
  %v2411 = vand.u32 %v1820, 2147483648
  %v2412 = vor.u32 1.1754944e-38, %v2411
  %v2413 = vsel %vm2410, %v2412, %v2408
  %v2414 = vmul.f32 1.0, %v2413
  %v2415 = vrcp.pop %v1821
  %v2416 = vmul.f32 %v1821, %v2415
  %v2417 = vsub.f32 1.0, %v2416
  %v2418 = vmul.f32 %v2415, %v2417
  %v2419 = vadd.f32 %v2415, %v2418
  %vm2420 = vweird.f32 %v1821
  %vm2421 = vweird.f32 %v2415
  %vm2422 = vmor %vm2420, %vm2421
  %v2423 = vsel %vm2422, %v2415, %v2419
  %v2424 = vand.u32 2147483647, %v1821
  %vm2425 = vcmp.eq.f32.partialorder %v2424, 8.507059e+37
  %v2426 = vand.u32 %v1821, 2147483648
  %v2427 = vor.u32 1.1754944e-38, %v2426
  %v2428 = vsel %vm2425, %v2427, %v2423
  %v2429 = vmul.f32 1.0, %v2428
  %v2430 = vrcp.pop %v1822
  %v2431 = vmul.f32 %v1822, %v2430
  %v2432 = vsub.f32 1.0, %v2431
  %v2433 = vmul.f32 %v2430, %v2432
  %v2434 = vadd.f32 %v2430, %v2433
  %vm2435 = vweird.f32 %v1822
  %vm2436 = vweird.f32 %v2430
  %vm2437 = vmor %vm2435, %vm2436
  %v2438 = vsel %vm2437, %v2430, %v2434
  %v2439 = vand.u32 2147483647, %v1822
  %vm2440 = vcmp.eq.f32.partialorder %v2439, 8.507059e+37
  %v2441 = vand.u32 %v1822, 2147483648
  %v2442 = vor.u32 1.1754944e-38, %v2441
  %v2443 = vsel %vm2440, %v2442, %v2438
  %v2444 = vmul.f32 1.0, %v2443
  %v2445 = vrcp.pop %v1823
  %v2446 = vmul.f32 %v1823, %v2445
  %v2447 = vsub.f32 1.0, %v2446
  %v2448 = vmul.f32 %v2445, %v2447
  %v2449 = vadd.f32 %v2445, %v2448
  %vm2450 = vweird.f32 %v1823
  %vm2451 = vweird.f32 %v2445
  %vm2452 = vmor %vm2450, %vm2451
  %v2453 = vsel %vm2452, %v2445, %v2449
  %v2454 = vand.u32 2147483647, %v1823
  %vm2455 = vcmp.eq.f32.partialorder %v2454, 8.507059e+37
  %v2456 = vand.u32 %v1823, 2147483648
  %v2457 = vor.u32 1.1754944e-38, %v2456
  %v2458 = vsel %vm2455, %v2457, %v2453
  %v2459 = vmul.f32 1.0, %v2458
  %v2460 = vrcp.pop %v1824
  %v2461 = vmul.f32 %v1824, %v2460
  %v2462 = vsub.f32 1.0, %v2461
  %v2463 = vmul.f32 %v2460, %v2462
  %v2464 = vadd.f32 %v2460, %v2463
  %vm2465 = vweird.f32 %v1824
  %vm2466 = vweird.f32 %v2460
  %vm2467 = vmor %vm2465, %vm2466
  %v2468 = vsel %vm2467, %v2460, %v2464
  %v2469 = vand.u32 2147483647, %v1824
  %vm2470 = vcmp.eq.f32.partialorder %v2469, 8.507059e+37
  %v2471 = vand.u32 %v1824, 2147483648
  %v2472 = vor.u32 1.1754944e-38, %v2471
  %v2473 = vsel %vm2470, %v2472, %v2468
  %v2474 = vmul.f32 1.0, %v2473
  %v2475 = vrcp.pop %v1825
  %v2476 = vmul.f32 %v1825, %v2475
  %v2477 = vsub.f32 1.0, %v2476
  %v2478 = vmul.f32 %v2475, %v2477
  %v2479 = vadd.f32 %v2475, %v2478
  %vm2480 = vweird.f32 %v1825
  %vm2481 = vweird.f32 %v2475
  %vm2482 = vmor %vm2480, %vm2481
  %v2483 = vsel %vm2482, %v2475, %v2479
  %v2484 = vand.u32 2147483647, %v1825
  %vm2485 = vcmp.eq.f32.partialorder %v2484, 8.507059e+37
  %v2486 = vand.u32 %v1825, 2147483648
  %v2487 = vor.u32 1.1754944e-38, %v2486
  %v2488 = vsel %vm2485, %v2487, %v2483
  %v2489 = vmul.f32 1.0, %v2488
  %v2490 = vrcp.pop %v1826
  %v2491 = vmul.f32 %v1826, %v2490
  %v2492 = vsub.f32 1.0, %v2491
  %v2493 = vmul.f32 %v2490, %v2492
  %v2494 = vadd.f32 %v2490, %v2493
  %vm2495 = vweird.f32 %v1826
  %vm2496 = vweird.f32 %v2490
  %vm2497 = vmor %vm2495, %vm2496
  %v2498 = vsel %vm2497, %v2490, %v2494
  %v2499 = vand.u32 2147483647, %v1826
  %vm2500 = vcmp.eq.f32.partialorder %v2499, 8.507059e+37
  %v2501 = vand.u32 %v1826, 2147483648
  %v2502 = vor.u32 1.1754944e-38, %v2501
  %v2503 = vsel %vm2500, %v2502, %v2498
  %v2504 = vmul.f32 1.0, %v2503
  %v2505 = vrcp.pop %v1827
  %v2506 = vmul.f32 %v1827, %v2505
  %v2507 = vsub.f32 1.0, %v2506
  %v2508 = vmul.f32 %v2505, %v2507
  %v2509 = vadd.f32 %v2505, %v2508
  %vm2510 = vweird.f32 %v1827
  %vm2511 = vweird.f32 %v2505
  %vm2512 = vmor %vm2510, %vm2511
  %v2513 = vsel %vm2512, %v2505, %v2509
  %v2514 = vand.u32 2147483647, %v1827
  %vm2515 = vcmp.eq.f32.partialorder %v2514, 8.507059e+37
  %v2516 = vand.u32 %v1827, 2147483648
  %v2517 = vor.u32 1.1754944e-38, %v2516
  %v2518 = vsel %vm2515, %v2517, %v2513
  %v2519 = vmul.f32 1.0, %v2518
  %v2520 = vrcp.pop %v1828
  %v2521 = vmul.f32 %v1828, %v2520
  %v2522 = vsub.f32 1.0, %v2521
  %v2523 = vmul.f32 %v2520, %v2522
  %v2524 = vadd.f32 %v2520, %v2523
  %vm2525 = vweird.f32 %v1828
  %vm2526 = vweird.f32 %v2520
  %vm2527 = vmor %vm2525, %vm2526
  %v2528 = vsel %vm2527, %v2520, %v2524
  %v2529 = vand.u32 2147483647, %v1828
  %vm2530 = vcmp.eq.f32.partialorder %v2529, 8.507059e+37
  %v2531 = vand.u32 %v1828, 2147483648
  %v2532 = vor.u32 1.1754944e-38, %v2531
  %v2533 = vsel %vm2530, %v2532, %v2528
  %v2534 = vmul.f32 1.0, %v2533
  %v2535 = vrcp.pop %v1829
  %v2536 = vmul.f32 %v1829, %v2535
  %v2537 = vsub.f32 1.0, %v2536
  %v2538 = vmul.f32 %v2535, %v2537
  %v2539 = vadd.f32 %v2535, %v2538
  %vm2540 = vweird.f32 %v1829
  %vm2541 = vweird.f32 %v2535
  %vm2542 = vmor %vm2540, %vm2541
  %v2543 = vsel %vm2542, %v2535, %v2539
  %v2544 = vand.u32 2147483647, %v1829
  %vm2545 = vcmp.eq.f32.partialorder %v2544, 8.507059e+37
  %v2546 = vand.u32 %v1829, 2147483648
  %v2547 = vor.u32 1.1754944e-38, %v2546
  %v2548 = vsel %vm2545, %v2547, %v2543
  %v2549 = vmul.f32 1.0, %v2548
  %v2550 = vld [vmem:[%s7] sm:$0xff]
  %v2551 = vld [vmem:[%s7 + $0x8] sm:$0xff]
  %v2552 = vld [vmem:[%s7 + $0x10] sm:$0xff]
  %v2553 = vld [vmem:[%s7 + $0x18] sm:$0xff]
  %v2554 = vld [vmem:[%s7 + $0x20] sm:$0xff]
  %v2555 = vld [vmem:[%s7 + $0x28] sm:$0xff]
  %v2556 = vld [vmem:[%s7 + $0x30] sm:$0xff]
  %v2557 = vld [vmem:[%s7 + $0x38] sm:$0xff]
  %v2558 = vperm.slane %v54, 0
  %vm2559 = vcmask 523264
  %v2561 = vsel %vm2559, %v1844, 0
  %v2564 = vsel %vm2559, %v1859, 0
  %v2567 = vsel %vm2559, %v1874, 0
  %v2570 = vsel %vm2559, %v1889, 0
  %v2573 = vsel %vm2559, %v1904, 0
  %v2576 = vsel %vm2559, %v1919, 0
  %v2579 = vsel %vm2559, %v1934, 0
  %v2582 = vsel %vm2559, %v1949, 0
  %v2585 = vsel %vm2559, %v1964, 0
  %v2588 = vsel %vm2559, %v1979, 0
  %v2591 = vsel %vm2559, %v1994, 0
  %v2594 = vsel %vm2559, %v2009, 0
  %v2597 = vsel %vm2559, %v2024, 0
  %v2600 = vsel %vm2559, %v2039, 0
  %v2603 = vsel %vm2559, %v2054, 0
  %v2606 = vsel %vm2559, %v2069, 0
  %v2609 = vsel %vm2559, %v2084, 0
  %v2612 = vsel %vm2559, %v2099, 0
  %v2615 = vsel %vm2559, %v2114, 0
  %v2618 = vsel %vm2559, %v2129, 0
  %v2621 = vsel %vm2559, %v2144, 0
  %v2624 = vsel %vm2559, %v2159, 0
  %v2627 = vsel %vm2559, %v2174, 0
  %v2630 = vsel %vm2559, %v2189, 0
  %v2633 = vsel %vm2559, %v2204, 0
  %v2636 = vsel %vm2559, %v2219, 0
  %v2639 = vsel %vm2559, %v2234, 0
  %v2642 = vsel %vm2559, %v2249, 0
  %v2645 = vsel %vm2559, %v2264, 0
  %v2648 = vsel %vm2559, %v2279, 0
  %v2651 = vsel %vm2559, %v2294, 0
  %v2654 = vsel %vm2559, %v2309, 0
  %v2657 = vsel %vm2559, %v2324, 0
  %v2660 = vsel %vm2559, %v2339, 0
  %v2663 = vsel %vm2559, %v2354, 0
  %v2666 = vsel %vm2559, %v2369, 0
  %v2669 = vsel %vm2559, %v2384, 0
  %v2672 = vsel %vm2559, %v2399, 0
  %v2675 = vsel %vm2559, %v2414, 0
  %v2678 = vsel %vm2559, %v2429, 0
  %v2681 = vsel %vm2559, %v2444, 0
  %v2684 = vsel %vm2559, %v2459, 0
  %v2687 = vsel %vm2559, %v2474, 0
  %v2690 = vsel %vm2559, %v2489, 0
  %v2693 = vsel %vm2559, %v2504, 0
  %v2696 = vsel %vm2559, %v2519, 0
  %v2699 = vsel %vm2559, %v2534, 0
  %v2702 = vsel %vm2559, %v2549, 0
  %2704 = vmatpush.msra.mxu0 0.0
  %2705 = vmatpush.msra.mxu0 0.0
  %2706 = vmatpush.msra.mxu0 0.0
  %2707 = vmatpush.msra.mxu0 0.0
  %2708 = vmatpush.msra.mxu0 0.0
  %2709 = vmatpush.msra.mxu0 0.0
  %2710 = vmatpush.msra.mxu0 0.0
  %2711 = vmatpush.msra.mxu0 0.0
  %2712 = vmatpush.msra.mxu0 %v2557
  %2713 = vmatpush.msra.mxu0 %v2556
  %2714 = vmatpush.msra.mxu0 %v2555
  %2715 = vmatpush.msra.mxu0 %v2554
  %2716 = vmatpush.msra.mxu0 %v2553
  %2717 = vmatpush.msra.mxu0 %v2552
  %2718 = vmatpush.msra.mxu0 %v2551
  %2719 = vmatpush.msra.mxu0 %v2550
  %2720 = vmatmul.f32.gmra.mxu0 %v2561
  %v2721 = vpop.f32.mrf.mxu0
  %v2722 = vadd.f32 %v2558, %v2721
  %2723 = vmatmul.f32.gmra.mxu0 %v2564
  %v2724 = vpop.f32.mrf.mxu0
  %v2725 = vadd.f32 %v2558, %v2724
  %2726 = vmatmul.f32.gmra.mxu0 %v2567
  %v2727 = vpop.f32.mrf.mxu0
  %v2728 = vadd.f32 %v2558, %v2727
  %2729 = vmatmul.f32.gmra.mxu0 %v2570
  %v2730 = vpop.f32.mrf.mxu0
  %v2731 = vadd.f32 %v2558, %v2730
  %2732 = vmatmul.f32.gmra.mxu0 %v2573
  %v2733 = vpop.f32.mrf.mxu0
  %v2734 = vadd.f32 %v2558, %v2733
  %2735 = vmatmul.f32.gmra.mxu0 %v2576
  %v2736 = vpop.f32.mrf.mxu0
  %v2737 = vadd.f32 %v2558, %v2736
  %2738 = vmatmul.f32.gmra.mxu0 %v2579
  %v2739 = vpop.f32.mrf.mxu0
  %v2740 = vadd.f32 %v2558, %v2739
  %2741 = vmatmul.f32.gmra.mxu0 %v2582
  %v2742 = vpop.f32.mrf.mxu0
  %v2743 = vadd.f32 %v2558, %v2742
  %2744 = vmatmul.f32.gmra.mxu0 %v2585
  %v2745 = vpop.f32.mrf.mxu0
  %v2746 = vadd.f32 %v2558, %v2745
  %2747 = vmatmul.f32.gmra.mxu0 %v2588
  %v2748 = vpop.f32.mrf.mxu0
  %v2749 = vadd.f32 %v2558, %v2748
  %2750 = vmatmul.f32.gmra.mxu0 %v2591
  %v2751 = vpop.f32.mrf.mxu0
  %v2752 = vadd.f32 %v2558, %v2751
  %2753 = vmatmul.f32.gmra.mxu0 %v2594
  %v2754 = vpop.f32.mrf.mxu0
  %v2755 = vadd.f32 %v2558, %v2754
  %2756 = vmatmul.f32.gmra.mxu0 %v2597
  %v2757 = vpop.f32.mrf.mxu0
  %v2758 = vadd.f32 %v2558, %v2757
  %2759 = vmatmul.f32.gmra.mxu0 %v2600
  %v2760 = vpop.f32.mrf.mxu0
  %v2761 = vadd.f32 %v2558, %v2760
  %2762 = vmatmul.f32.gmra.mxu0 %v2603
  %v2763 = vpop.f32.mrf.mxu0
  %v2764 = vadd.f32 %v2558, %v2763
  %2765 = vmatmul.f32.gmra.mxu0 %v2606
  %v2766 = vpop.f32.mrf.mxu0
  %v2767 = vadd.f32 %v2558, %v2766
  %2768 = vmatmul.f32.gmra.mxu0 %v2609
  %v2769 = vpop.f32.mrf.mxu0
  %v2770 = vadd.f32 %v2558, %v2769
  %2771 = vmatmul.f32.gmra.mxu0 %v2612
  %v2772 = vpop.f32.mrf.mxu0
  %v2773 = vadd.f32 %v2558, %v2772
  %2774 = vmatmul.f32.gmra.mxu0 %v2615
  %v2775 = vpop.f32.mrf.mxu0
  %v2776 = vadd.f32 %v2558, %v2775
  %2777 = vmatmul.f32.gmra.mxu0 %v2618
  %v2778 = vpop.f32.mrf.mxu0
  %v2779 = vadd.f32 %v2558, %v2778
  %2780 = vmatmul.f32.gmra.mxu0 %v2621
  %v2781 = vpop.f32.mrf.mxu0
  %v2782 = vadd.f32 %v2558, %v2781
  %2783 = vmatmul.f32.gmra.mxu0 %v2624
  %v2784 = vpop.f32.mrf.mxu0
  %v2785 = vadd.f32 %v2558, %v2784
  %2786 = vmatmul.f32.gmra.mxu0 %v2627
  %v2787 = vpop.f32.mrf.mxu0
  %v2788 = vadd.f32 %v2558, %v2787
  %2789 = vmatmul.f32.gmra.mxu0 %v2630
  %v2790 = vpop.f32.mrf.mxu0
  %v2791 = vadd.f32 %v2558, %v2790
  %2792 = vmatmul.f32.gmra.mxu0 %v2633
  %v2793 = vpop.f32.mrf.mxu0
  %v2794 = vadd.f32 %v2558, %v2793
  %2795 = vmatmul.f32.gmra.mxu0 %v2636
  %v2796 = vpop.f32.mrf.mxu0
  %v2797 = vadd.f32 %v2558, %v2796
  %2798 = vmatmul.f32.gmra.mxu0 %v2639
  %v2799 = vpop.f32.mrf.mxu0
  %v2800 = vadd.f32 %v2558, %v2799
  %2801 = vmatmul.f32.gmra.mxu0 %v2642
  %v2802 = vpop.f32.mrf.mxu0
  %v2803 = vadd.f32 %v2558, %v2802
  %2804 = vmatmul.f32.gmra.mxu0 %v2645
  %v2805 = vpop.f32.mrf.mxu0
  %v2806 = vadd.f32 %v2558, %v2805
  %2807 = vmatmul.f32.gmra.mxu0 %v2648
  %v2808 = vpop.f32.mrf.mxu0
  %v2809 = vadd.f32 %v2558, %v2808
  %2810 = vmatmul.f32.gmra.mxu0 %v2651
  %v2811 = vpop.f32.mrf.mxu0
  %v2812 = vadd.f32 %v2558, %v2811
  %2813 = vmatmul.f32.gmra.mxu0 %v2654
  %v2814 = vpop.f32.mrf.mxu0
  %v2815 = vadd.f32 %v2558, %v2814
  %2816 = vmatmul.f32.gmra.mxu0 %v2657
  %v2817 = vpop.f32.mrf.mxu0
  %v2818 = vadd.f32 %v2558, %v2817
  %2819 = vmatmul.f32.gmra.mxu0 %v2660
  %v2820 = vpop.f32.mrf.mxu0
  %v2821 = vadd.f32 %v2558, %v2820
  %2822 = vmatmul.f32.gmra.mxu0 %v2663
  %v2823 = vpop.f32.mrf.mxu0
  %v2824 = vadd.f32 %v2558, %v2823
  %2825 = vmatmul.f32.gmra.mxu0 %v2666
  %v2826 = vpop.f32.mrf.mxu0
  %v2827 = vadd.f32 %v2558, %v2826
  %2828 = vmatmul.f32.gmra.mxu0 %v2669
  %v2829 = vpop.f32.mrf.mxu0
  %v2830 = vadd.f32 %v2558, %v2829
  %2831 = vmatmul.f32.gmra.mxu0 %v2672
  %v2832 = vpop.f32.mrf.mxu0
  %v2833 = vadd.f32 %v2558, %v2832
  %2834 = vmatmul.f32.gmra.mxu0 %v2675
  %v2835 = vpop.f32.mrf.mxu0
  %v2836 = vadd.f32 %v2558, %v2835
  %2837 = vmatmul.f32.gmra.mxu0 %v2678
  %v2838 = vpop.f32.mrf.mxu0
  %v2839 = vadd.f32 %v2558, %v2838
  %2840 = vmatmul.f32.gmra.mxu0 %v2681
  %v2841 = vpop.f32.mrf.mxu0
  %v2842 = vadd.f32 %v2558, %v2841
  %2843 = vmatmul.f32.gmra.mxu0 %v2684
  %v2844 = vpop.f32.mrf.mxu0
  %v2845 = vadd.f32 %v2558, %v2844
  %2846 = vmatmul.f32.gmra.mxu0 %v2687
  %v2847 = vpop.f32.mrf.mxu0
  %v2848 = vadd.f32 %v2558, %v2847
  %2849 = vmatmul.f32.gmra.mxu0 %v2690
  %v2850 = vpop.f32.mrf.mxu0
  %v2851 = vadd.f32 %v2558, %v2850
  %2852 = vmatmul.f32.gmra.mxu0 %v2693
  %v2853 = vpop.f32.mrf.mxu0
  %v2854 = vadd.f32 %v2558, %v2853
  %2855 = vmatmul.f32.gmra.mxu0 %v2696
  %v2856 = vpop.f32.mrf.mxu0
  %v2857 = vadd.f32 %v2558, %v2856
  %2858 = vmatmul.f32.gmra.mxu0 %v2699
  %v2859 = vpop.f32.mrf.mxu0
  %v2860 = vadd.f32 %v2558, %v2859
  %2861 = vmatmul.f32.gmra.mxu0 %v2702
  %v2862 = vpop.f32.mrf.mxu0
  %v2863 = vadd.f32 %v2558, %v2862
  %2864 = vdwg.mxu0
  %v2865 = vld [vmem:[%s2] sm:$0xff]
  %v2866 = vld [vmem:[%s2 + $0x8] sm:$0xff]
  %v2867 = vld [vmem:[%s2 + $0x10] sm:$0xff]
  %v2868 = vld [vmem:[%s2 + $0x18] sm:$0xff]
  %v2869 = vld [vmem:[%s2 + $0x20] sm:$0xff]
  %v2870 = vld [vmem:[%s2 + $0x28] sm:$0xff]
  %v2871 = vld [vmem:[%s2 + $0x30] sm:$0xff]
  %v2872 = vld [vmem:[%s2 + $0x38] sm:$0xff]
  %v2873 = vld [vmem:[%s2 + $0x40] sm:$0xff]
  %v2874 = vld [vmem:[%s2 + $0x48] sm:$0xff]
  %v2875 = vld [vmem:[%s2 + $0x50] sm:$0xff]
  %v2876 = vld [vmem:[%s2 + $0x58] sm:$0xff]
  %v2877 = vld [vmem:[%s2 + $0x60] sm:$0xff]
  %v2878 = vld [vmem:[%s2 + $0x68] sm:$0xff]
  %v2879 = vld [vmem:[%s2 + $0x70] sm:$0xff]
  %v2880 = vld [vmem:[%s2 + $0x78] sm:$0xff]
  %v2881 = vld [vmem:[%s2 + $0x80] sm:$0xff]
  %v2882 = vld [vmem:[%s2 + $0x88] sm:$0xff]
  %v2883 = vld [vmem:[%s2 + $0x90] sm:$0xff]
  %v2884 = vld [vmem:[%s2 + $0x98] sm:$0xff]
  %v2885 = vld [vmem:[%s2 + $0xa0] sm:$0xff]
  %v2886 = vld [vmem:[%s2 + $0xa8] sm:$0xff]
  %v2887 = vld [vmem:[%s2 + $0xb0] sm:$0xff]
  %v2888 = vld [vmem:[%s2 + $0xb8] sm:$0xff]
  %v2889 = vld [vmem:[%s2 + $0xc0] sm:$0xff]
  %v2890 = vld [vmem:[%s2 + $0xc8] sm:$0xff]
  %v2891 = vld [vmem:[%s2 + $0xd0] sm:$0xff]
  %v2892 = vld [vmem:[%s2 + $0xd8] sm:$0xff]
  %v2893 = vld [vmem:[%s2 + $0xe0] sm:$0xff]
  %v2894 = vld [vmem:[%s2 + $0xe8] sm:$0xff]
  %v2895 = vld [vmem:[%s2 + $0xf0] sm:$0xff]
  %v2896 = vld [vmem:[%s2 + $0xf8] sm:$0xff]
  %v2897 = vld [vmem:[%s2 + $0x100] sm:$0xff]
  %v2898 = vld [vmem:[%s2 + $0x108] sm:$0xff]
  %v2899 = vld [vmem:[%s2 + $0x110] sm:$0xff]
  %v2900 = vld [vmem:[%s2 + $0x118] sm:$0xff]
  %v2901 = vld [vmem:[%s2 + $0x120] sm:$0xff]
  %v2902 = vld [vmem:[%s2 + $0x128] sm:$0xff]
  %v2903 = vld [vmem:[%s2 + $0x130] sm:$0xff]
  %v2904 = vld [vmem:[%s2 + $0x138] sm:$0xff]
  %v2905 = vld [vmem:[%s2 + $0x140] sm:$0xff]
  %v2906 = vld [vmem:[%s2 + $0x148] sm:$0xff]
  %v2907 = vld [vmem:[%s2 + $0x150] sm:$0xff]
  %v2908 = vld [vmem:[%s2 + $0x158] sm:$0xff]
  %v2909 = vld [vmem:[%s2 + $0x160] sm:$0xff]
  %v2910 = vld [vmem:[%s2 + $0x168] sm:$0xff]
  %v2911 = vld [vmem:[%s2 + $0x170] sm:$0xff]
  %v2912 = vld [vmem:[%s2 + $0x178] sm:$0xff]
  %v2913 = vlaneseq
  %v2914 = vand.u32 %v2913, 127
  %2915 = vset.pattern.permute.xlu0 0
  %2916 = vperm.xlu0 %2915, %v2865
  %v2917 = vpop.permute.xlu0 %2916
  %2918 = vset.pattern.permute.xlu0 0
  %2919 = vperm.xlu0 %2918, %v2866
  %v2920 = vpop.permute.xlu0 %2919
  %2921 = vset.pattern.permute.xlu0 0
  %2922 = vperm.xlu0 %2921, %v2867
  %v2923 = vpop.permute.xlu0 %2922
  %2924 = vset.pattern.permute.xlu0 0
  %2925 = vperm.xlu0 %2924, %v2868
  %v2926 = vpop.permute.xlu0 %2925
  %2927 = vset.pattern.permute.xlu0 0
  %2928 = vperm.xlu0 %2927, %v2869
  %v2929 = vpop.permute.xlu0 %2928
  %2930 = vset.pattern.permute.xlu0 0
  %2931 = vperm.xlu0 %2930, %v2870
  %v2932 = vpop.permute.xlu0 %2931
  %2933 = vset.pattern.permute.xlu0 0
  %2934 = vperm.xlu0 %2933, %v2871
  %v2935 = vpop.permute.xlu0 %2934
  %2936 = vset.pattern.permute.xlu0 0
  %2937 = vperm.xlu0 %2936, %v2872
  %v2938 = vpop.permute.xlu0 %2937
  %2939 = vset.pattern.permute.xlu0 0
  %2940 = vperm.xlu0 %2939, %v2873
  %v2941 = vpop.permute.xlu0 %2940
  %2942 = vset.pattern.permute.xlu0 0
  %2943 = vperm.xlu0 %2942, %v2874
  %v2944 = vpop.permute.xlu0 %2943
  %2945 = vset.pattern.permute.xlu0 0
  %2946 = vperm.xlu0 %2945, %v2875
  %v2947 = vpop.permute.xlu0 %2946
  %2948 = vset.pattern.permute.xlu0 0
  %2949 = vperm.xlu0 %2948, %v2876
  %v2950 = vpop.permute.xlu0 %2949
  %2951 = vset.pattern.permute.xlu0 0
  %2952 = vperm.xlu0 %2951, %v2877
  %v2953 = vpop.permute.xlu0 %2952
  %2954 = vset.pattern.permute.xlu0 0
  %2955 = vperm.xlu0 %2954, %v2878
  %v2956 = vpop.permute.xlu0 %2955
  %2957 = vset.pattern.permute.xlu0 0
  %2958 = vperm.xlu0 %2957, %v2879
  %v2959 = vpop.permute.xlu0 %2958
  %2960 = vset.pattern.permute.xlu0 0
  %2961 = vperm.xlu0 %2960, %v2880
  %v2962 = vpop.permute.xlu0 %2961
  %2963 = vset.pattern.permute.xlu0 0
  %2964 = vperm.xlu0 %2963, %v2881
  %v2965 = vpop.permute.xlu0 %2964
  %2966 = vset.pattern.permute.xlu0 0
  %2967 = vperm.xlu0 %2966, %v2882
  %v2968 = vpop.permute.xlu0 %2967
  %2969 = vset.pattern.permute.xlu0 0
  %2970 = vperm.xlu0 %2969, %v2883
  %v2971 = vpop.permute.xlu0 %2970
  %2972 = vset.pattern.permute.xlu0 0
  %2973 = vperm.xlu0 %2972, %v2884
  %v2974 = vpop.permute.xlu0 %2973
  %2975 = vset.pattern.permute.xlu0 0
  %2976 = vperm.xlu0 %2975, %v2885
  %v2977 = vpop.permute.xlu0 %2976
  %2978 = vset.pattern.permute.xlu0 0
  %2979 = vperm.xlu0 %2978, %v2886
  %v2980 = vpop.permute.xlu0 %2979
  %2981 = vset.pattern.permute.xlu0 0
  %2982 = vperm.xlu0 %2981, %v2887
  %v2983 = vpop.permute.xlu0 %2982
  %2984 = vset.pattern.permute.xlu0 0
  %2985 = vperm.xlu0 %2984, %v2888
  %v2986 = vpop.permute.xlu0 %2985
  %2987 = vset.pattern.permute.xlu0 0
  %2988 = vperm.xlu0 %2987, %v2889
  %v2989 = vpop.permute.xlu0 %2988
  %2990 = vset.pattern.permute.xlu0 0
  %2991 = vperm.xlu0 %2990, %v2890
  %v2992 = vpop.permute.xlu0 %2991
  %2993 = vset.pattern.permute.xlu0 0
  %2994 = vperm.xlu0 %2993, %v2891
  %v2995 = vpop.permute.xlu0 %2994
  %2996 = vset.pattern.permute.xlu0 0
  %2997 = vperm.xlu0 %2996, %v2892
  %v2998 = vpop.permute.xlu0 %2997
  %2999 = vset.pattern.permute.xlu0 0
  %3000 = vperm.xlu0 %2999, %v2893
  %v3001 = vpop.permute.xlu0 %3000
  %3002 = vset.pattern.permute.xlu0 0
  %3003 = vperm.xlu0 %3002, %v2894
  %v3004 = vpop.permute.xlu0 %3003
  %3005 = vset.pattern.permute.xlu0 0
  %3006 = vperm.xlu0 %3005, %v2895
  %v3007 = vpop.permute.xlu0 %3006
  %3008 = vset.pattern.permute.xlu0 0
  %3009 = vperm.xlu0 %3008, %v2896
  %v3010 = vpop.permute.xlu0 %3009
  %3011 = vset.pattern.permute.xlu0 0
  %3012 = vperm.xlu0 %3011, %v2897
  %v3013 = vpop.permute.xlu0 %3012
  %3014 = vset.pattern.permute.xlu0 0
  %3015 = vperm.xlu0 %3014, %v2898
  %v3016 = vpop.permute.xlu0 %3015
  %3017 = vset.pattern.permute.xlu0 0
  %3018 = vperm.xlu0 %3017, %v2899
  %v3019 = vpop.permute.xlu0 %3018
  %3020 = vset.pattern.permute.xlu0 0
  %3021 = vperm.xlu0 %3020, %v2900
  %v3022 = vpop.permute.xlu0 %3021
  %3023 = vset.pattern.permute.xlu0 0
  %3024 = vperm.xlu0 %3023, %v2901
  %v3025 = vpop.permute.xlu0 %3024
  %3026 = vset.pattern.permute.xlu0 0
  %3027 = vperm.xlu0 %3026, %v2902
  %v3028 = vpop.permute.xlu0 %3027
  %3029 = vset.pattern.permute.xlu0 0
  %3030 = vperm.xlu0 %3029, %v2903
  %v3031 = vpop.permute.xlu0 %3030
  %3032 = vset.pattern.permute.xlu0 0
  %3033 = vperm.xlu0 %3032, %v2904
  %v3034 = vpop.permute.xlu0 %3033
  %3035 = vset.pattern.permute.xlu0 0
  %3036 = vperm.xlu0 %3035, %v2905
  %v3037 = vpop.permute.xlu0 %3036
  %3038 = vset.pattern.permute.xlu0 0
  %3039 = vperm.xlu0 %3038, %v2906
  %v3040 = vpop.permute.xlu0 %3039
  %3041 = vset.pattern.permute.xlu0 0
  %3042 = vperm.xlu0 %3041, %v2907
  %v3043 = vpop.permute.xlu0 %3042
  %3044 = vset.pattern.permute.xlu0 0
  %3045 = vperm.xlu0 %3044, %v2908
  %v3046 = vpop.permute.xlu0 %3045
  %3047 = vset.pattern.permute.xlu0 0
  %3048 = vperm.xlu0 %3047, %v2909
  %v3049 = vpop.permute.xlu0 %3048
  %3050 = vset.pattern.permute.xlu0 0
  %3051 = vperm.xlu0 %3050, %v2910
  %v3052 = vpop.permute.xlu0 %3051
  %3053 = vset.pattern.permute.xlu0 0
  %3054 = vperm.xlu0 %3053, %v2911
  %v3055 = vpop.permute.xlu0 %3054
  %3056 = vset.pattern.permute.xlu0 0
  %3057 = vperm.xlu0 %3056, %v2912
  %v3058 = vpop.permute.xlu0 %3057
  %vm3059 = vcmp.eq.s32.totalorder %v2914, %v2917
  %vm3060 = vcmp.eq.s32.totalorder %v2914, %v2920
  %vm3061 = vcmp.eq.s32.totalorder %v2914, %v2923
  %vm3062 = vcmp.eq.s32.totalorder %v2914, %v2926
  %vm3063 = vcmp.eq.s32.totalorder %v2914, %v2929
  %vm3064 = vcmp.eq.s32.totalorder %v2914, %v2932
  %vm3065 = vcmp.eq.s32.totalorder %v2914, %v2935
  %vm3066 = vcmp.eq.s32.totalorder %v2914, %v2938
  %vm3067 = vcmp.eq.s32.totalorder %v2914, %v2941
  %vm3068 = vcmp.eq.s32.totalorder %v2914, %v2944
  %vm3069 = vcmp.eq.s32.totalorder %v2914, %v2947
  %vm3070 = vcmp.eq.s32.totalorder %v2914, %v2950
  %vm3071 = vcmp.eq.s32.totalorder %v2914, %v2953
  %vm3072 = vcmp.eq.s32.totalorder %v2914, %v2956
  %vm3073 = vcmp.eq.s32.totalorder %v2914, %v2959
  %vm3074 = vcmp.eq.s32.totalorder %v2914, %v2962
  %vm3075 = vcmp.eq.s32.totalorder %v2914, %v2965
  %vm3076 = vcmp.eq.s32.totalorder %v2914, %v2968
  %vm3077 = vcmp.eq.s32.totalorder %v2914, %v2971
  %vm3078 = vcmp.eq.s32.totalorder %v2914, %v2974
  %vm3079 = vcmp.eq.s32.totalorder %v2914, %v2977
  %vm3080 = vcmp.eq.s32.totalorder %v2914, %v2980
  %vm3081 = vcmp.eq.s32.totalorder %v2914, %v2983
  %vm3082 = vcmp.eq.s32.totalorder %v2914, %v2986
  %vm3083 = vcmp.eq.s32.totalorder %v2914, %v2989
  %vm3084 = vcmp.eq.s32.totalorder %v2914, %v2992
  %vm3085 = vcmp.eq.s32.totalorder %v2914, %v2995
  %vm3086 = vcmp.eq.s32.totalorder %v2914, %v2998
  %vm3087 = vcmp.eq.s32.totalorder %v2914, %v3001
  %vm3088 = vcmp.eq.s32.totalorder %v2914, %v3004
  %vm3089 = vcmp.eq.s32.totalorder %v2914, %v3007
  %vm3090 = vcmp.eq.s32.totalorder %v2914, %v3010
  %vm3091 = vcmp.eq.s32.totalorder %v2914, %v3013
  %vm3092 = vcmp.eq.s32.totalorder %v2914, %v3016
  %vm3093 = vcmp.eq.s32.totalorder %v2914, %v3019
  %vm3094 = vcmp.eq.s32.totalorder %v2914, %v3022
  %vm3095 = vcmp.eq.s32.totalorder %v2914, %v3025
  %vm3096 = vcmp.eq.s32.totalorder %v2914, %v3028
  %vm3097 = vcmp.eq.s32.totalorder %v2914, %v3031
  %vm3098 = vcmp.eq.s32.totalorder %v2914, %v3034
  %vm3099 = vcmp.eq.s32.totalorder %v2914, %v3037
  %vm3100 = vcmp.eq.s32.totalorder %v2914, %v3040
  %vm3101 = vcmp.eq.s32.totalorder %v2914, %v3043
  %vm3102 = vcmp.eq.s32.totalorder %v2914, %v3046
  %vm3103 = vcmp.eq.s32.totalorder %v2914, %v3049
  %vm3104 = vcmp.eq.s32.totalorder %v2914, %v3052
  %vm3105 = vcmp.eq.s32.totalorder %v2914, %v3055
  %vm3106 = vcmp.eq.s32.totalorder %v2914, %v3058
  %v3107 = vsel %vm3059, 1, 0
  %v3108 = vsel %vm3060, 1, 0
  %v3109 = vsel %vm3061, 1, 0
  %v3110 = vsel %vm3062, 1, 0
  %v3111 = vsel %vm3063, 1, 0
  %v3112 = vsel %vm3064, 1, 0
  %v3113 = vsel %vm3065, 1, 0
  %v3114 = vsel %vm3066, 1, 0
  %v3115 = vsel %vm3067, 1, 0
  %v3116 = vsel %vm3068, 1, 0
  %v3117 = vsel %vm3069, 1, 0
  %v3118 = vsel %vm3070, 1, 0
  %v3119 = vsel %vm3071, 1, 0
  %v3120 = vsel %vm3072, 1, 0
  %v3121 = vsel %vm3073, 1, 0
  %v3122 = vsel %vm3074, 1, 0
  %v3123 = vsel %vm3075, 1, 0
  %v3124 = vsel %vm3076, 1, 0
  %v3125 = vsel %vm3077, 1, 0
  %v3126 = vsel %vm3078, 1, 0
  %v3127 = vsel %vm3079, 1, 0
  %v3128 = vsel %vm3080, 1, 0
  %v3129 = vsel %vm3081, 1, 0
  %v3130 = vsel %vm3082, 1, 0
  %v3131 = vsel %vm3083, 1, 0
  %v3132 = vsel %vm3084, 1, 0
  %v3133 = vsel %vm3085, 1, 0
  %v3134 = vsel %vm3086, 1, 0
  %v3135 = vsel %vm3087, 1, 0
  %v3136 = vsel %vm3088, 1, 0
  %v3137 = vsel %vm3089, 1, 0
  %v3138 = vsel %vm3090, 1, 0
  %v3139 = vsel %vm3091, 1, 0
  %v3140 = vsel %vm3092, 1, 0
  %v3141 = vsel %vm3093, 1, 0
  %v3142 = vsel %vm3094, 1, 0
  %v3143 = vsel %vm3095, 1, 0
  %v3144 = vsel %vm3096, 1, 0
  %v3145 = vsel %vm3097, 1, 0
  %v3146 = vsel %vm3098, 1, 0
  %v3147 = vsel %vm3099, 1, 0
  %v3148 = vsel %vm3100, 1, 0
  %v3149 = vsel %vm3101, 1, 0
  %v3150 = vsel %vm3102, 1, 0
  %v3151 = vsel %vm3103, 1, 0
  %v3152 = vsel %vm3104, 1, 0
  %v3153 = vsel %vm3105, 1, 0
  %v3154 = vsel %vm3106, 1, 0
  %v3155 = vcvt.s32.f32 %v3107
  %v3156 = vcvt.s32.f32 %v3108
  %v3157 = vcvt.s32.f32 %v3109
  %v3158 = vcvt.s32.f32 %v3110
  %v3159 = vcvt.s32.f32 %v3111
  %v3160 = vcvt.s32.f32 %v3112
  %v3161 = vcvt.s32.f32 %v3113
  %v3162 = vcvt.s32.f32 %v3114
  %v3163 = vcvt.s32.f32 %v3115
  %v3164 = vcvt.s32.f32 %v3116
  %v3165 = vcvt.s32.f32 %v3117
  %v3166 = vcvt.s32.f32 %v3118
  %v3167 = vcvt.s32.f32 %v3119
  %v3168 = vcvt.s32.f32 %v3120
  %v3169 = vcvt.s32.f32 %v3121
  %v3170 = vcvt.s32.f32 %v3122
  %v3171 = vcvt.s32.f32 %v3123
  %v3172 = vcvt.s32.f32 %v3124
  %v3173 = vcvt.s32.f32 %v3125
  %v3174 = vcvt.s32.f32 %v3126
  %v3175 = vcvt.s32.f32 %v3127
  %v3176 = vcvt.s32.f32 %v3128
  %v3177 = vcvt.s32.f32 %v3129
  %v3178 = vcvt.s32.f32 %v3130
  %v3179 = vcvt.s32.f32 %v3131
  %v3180 = vcvt.s32.f32 %v3132
  %v3181 = vcvt.s32.f32 %v3133
  %v3182 = vcvt.s32.f32 %v3134
  %v3183 = vcvt.s32.f32 %v3135
  %v3184 = vcvt.s32.f32 %v3136
  %v3185 = vcvt.s32.f32 %v3137
  %v3186 = vcvt.s32.f32 %v3138
  %v3187 = vcvt.s32.f32 %v3139
  %v3188 = vcvt.s32.f32 %v3140
  %v3189 = vcvt.s32.f32 %v3141
  %v3190 = vcvt.s32.f32 %v3142
  %v3191 = vcvt.s32.f32 %v3143
  %v3192 = vcvt.s32.f32 %v3144
  %v3193 = vcvt.s32.f32 %v3145
  %v3194 = vcvt.s32.f32 %v3146
  %v3195 = vcvt.s32.f32 %v3147
  %v3196 = vcvt.s32.f32 %v3148
  %v3197 = vcvt.s32.f32 %v3149
  %v3198 = vcvt.s32.f32 %v3150
  %v3199 = vcvt.s32.f32 %v3151
  %v3200 = vcvt.s32.f32 %v3152
  %v3201 = vcvt.s32.f32 %v3153
  %v3202 = vcvt.s32.f32 %v3154
  %v3203 = vld [vmem:[%s0] sm:$0xff]
  %v3204 = vld [vmem:[%s0 + $0x8] sm:$0xff]
  %v3205 = vld [vmem:[%s0 + $0x10] sm:$0xff]
  %v3206 = vld [vmem:[%s0 + $0x18] sm:$0xff]
  %v3208 = vsel %vm1332, %v3155, 0
  %v3211 = vsel %vm1332, %v3156, 0
  %v3214 = vsel %vm1332, %v3157, 0
  %v3217 = vsel %vm1332, %v3158, 0
  %v3220 = vsel %vm1332, %v3159, 0
  %v3223 = vsel %vm1332, %v3160, 0
  %v3226 = vsel %vm1332, %v3161, 0
  %v3229 = vsel %vm1332, %v3162, 0
  %v3232 = vsel %vm1332, %v3163, 0
  %v3235 = vsel %vm1332, %v3164, 0
  %v3238 = vsel %vm1332, %v3165, 0
  %v3241 = vsel %vm1332, %v3166, 0
  %v3244 = vsel %vm1332, %v3167, 0
  %v3247 = vsel %vm1332, %v3168, 0
  %v3250 = vsel %vm1332, %v3169, 0
  %v3253 = vsel %vm1332, %v3170, 0
  %v3256 = vsel %vm1332, %v3171, 0
  %v3259 = vsel %vm1332, %v3172, 0
  %v3262 = vsel %vm1332, %v3173, 0
  %v3265 = vsel %vm1332, %v3174, 0
  %v3268 = vsel %vm1332, %v3175, 0
  %v3271 = vsel %vm1332, %v3176, 0
  %v3274 = vsel %vm1332, %v3177, 0
  %v3277 = vsel %vm1332, %v3178, 0
  %v3280 = vsel %vm1332, %v3179, 0
  %v3283 = vsel %vm1332, %v3180, 0
  %v3286 = vsel %vm1332, %v3181, 0
  %v3289 = vsel %vm1332, %v3182, 0
  %v3292 = vsel %vm1332, %v3183, 0
  %v3295 = vsel %vm1332, %v3184, 0
  %v3298 = vsel %vm1332, %v3185, 0
  %v3301 = vsel %vm1332, %v3186, 0
  %v3304 = vsel %vm1332, %v3187, 0
  %v3307 = vsel %vm1332, %v3188, 0
  %v3310 = vsel %vm1332, %v3189, 0
  %v3313 = vsel %vm1332, %v3190, 0
  %v3316 = vsel %vm1332, %v3191, 0
  %v3319 = vsel %vm1332, %v3192, 0
  %v3322 = vsel %vm1332, %v3193, 0
  %v3325 = vsel %vm1332, %v3194, 0
  %v3328 = vsel %vm1332, %v3195, 0
  %v3331 = vsel %vm1332, %v3196, 0
  %v3334 = vsel %vm1332, %v3197, 0
  %v3337 = vsel %vm1332, %v3198, 0
  %v3340 = vsel %vm1332, %v3199, 0
  %v3343 = vsel %vm1332, %v3200, 0
  %v3346 = vsel %vm1332, %v3201, 0
  %v3349 = vsel %vm1332, %v3202, 0
  %3351 = vmatpush.msra.mxu0 0.0
  %3352 = vmatpush.msra.mxu0 0.0
  %3353 = vmatpush.msra.mxu0 0.0
  %3354 = vmatpush.msra.mxu0 0.0
  %3355 = vmatpush.msra.mxu0 0.0
  %3356 = vmatpush.msra.mxu0 0.0
  %3357 = vmatpush.msra.mxu0 0.0
  %3358 = vmatpush.msra.mxu0 0.0
  %3359 = vmatpush.msra.mxu0 0.0
  %3360 = vmatpush.msra.mxu0 0.0
  %3361 = vmatpush.msra.mxu0 0.0
  %3362 = vmatpush.msra.mxu0 0.0
  %3363 = vmatpush.msra.mxu0 %v3206
  %3364 = vmatpush.msra.mxu0 %v3205
  %3365 = vmatpush.msra.mxu0 %v3204
  %3366 = vmatpush.msra.mxu0 %v3203
  %3367 = vmatmul.f32.gmra.mxu0 %v3208
  %v3368 = vpop.f32.mrf.mxu0
  %v3369 = vadd.f32 0.0, %v3368
  %3370 = vmatmul.f32.gmra.mxu0 %v3211
  %v3371 = vpop.f32.mrf.mxu0
  %v3372 = vadd.f32 0.0, %v3371
  %3373 = vmatmul.f32.gmra.mxu0 %v3214
  %v3374 = vpop.f32.mrf.mxu0
  %v3375 = vadd.f32 0.0, %v3374
  %3376 = vmatmul.f32.gmra.mxu0 %v3217
  %v3377 = vpop.f32.mrf.mxu0
  %v3378 = vadd.f32 0.0, %v3377
  %3379 = vmatmul.f32.gmra.mxu0 %v3220
  %v3380 = vpop.f32.mrf.mxu0
  %v3381 = vadd.f32 0.0, %v3380
  %3382 = vmatmul.f32.gmra.mxu0 %v3223
  %v3383 = vpop.f32.mrf.mxu0
  %v3384 = vadd.f32 0.0, %v3383
  %3385 = vmatmul.f32.gmra.mxu0 %v3226
  %v3386 = vpop.f32.mrf.mxu0
  %v3387 = vadd.f32 0.0, %v3386
  %3388 = vmatmul.f32.gmra.mxu0 %v3229
  %v3389 = vpop.f32.mrf.mxu0
  %v3390 = vadd.f32 0.0, %v3389
  %3391 = vmatmul.f32.gmra.mxu0 %v3232
  %v3392 = vpop.f32.mrf.mxu0
  %v3393 = vadd.f32 0.0, %v3392
  %3394 = vmatmul.f32.gmra.mxu0 %v3235
  %v3395 = vpop.f32.mrf.mxu0
  %v3396 = vadd.f32 0.0, %v3395
  %3397 = vmatmul.f32.gmra.mxu0 %v3238
  %v3398 = vpop.f32.mrf.mxu0
  %v3399 = vadd.f32 0.0, %v3398
  %3400 = vmatmul.f32.gmra.mxu0 %v3241
  %v3401 = vpop.f32.mrf.mxu0
  %v3402 = vadd.f32 0.0, %v3401
  %3403 = vmatmul.f32.gmra.mxu0 %v3244
  %v3404 = vpop.f32.mrf.mxu0
  %v3405 = vadd.f32 0.0, %v3404
  %3406 = vmatmul.f32.gmra.mxu0 %v3247
  %v3407 = vpop.f32.mrf.mxu0
  %v3408 = vadd.f32 0.0, %v3407
  %3409 = vmatmul.f32.gmra.mxu0 %v3250
  %v3410 = vpop.f32.mrf.mxu0
  %v3411 = vadd.f32 0.0, %v3410
  %3412 = vmatmul.f32.gmra.mxu0 %v3253
  %v3413 = vpop.f32.mrf.mxu0
  %v3414 = vadd.f32 0.0, %v3413
  %3415 = vmatmul.f32.gmra.mxu0 %v3256
  %v3416 = vpop.f32.mrf.mxu0
  %v3417 = vadd.f32 0.0, %v3416
  %3418 = vmatmul.f32.gmra.mxu0 %v3259
  %v3419 = vpop.f32.mrf.mxu0
  %v3420 = vadd.f32 0.0, %v3419
  %3421 = vmatmul.f32.gmra.mxu0 %v3262
  %v3422 = vpop.f32.mrf.mxu0
  %v3423 = vadd.f32 0.0, %v3422
  %3424 = vmatmul.f32.gmra.mxu0 %v3265
  %v3425 = vpop.f32.mrf.mxu0
  %v3426 = vadd.f32 0.0, %v3425
  %3427 = vmatmul.f32.gmra.mxu0 %v3268
  %v3428 = vpop.f32.mrf.mxu0
  %v3429 = vadd.f32 0.0, %v3428
  %3430 = vmatmul.f32.gmra.mxu0 %v3271
  %v3431 = vpop.f32.mrf.mxu0
  %v3432 = vadd.f32 0.0, %v3431
  %3433 = vmatmul.f32.gmra.mxu0 %v3274
  %v3434 = vpop.f32.mrf.mxu0
  %v3435 = vadd.f32 0.0, %v3434
  %3436 = vmatmul.f32.gmra.mxu0 %v3277
  %v3437 = vpop.f32.mrf.mxu0
  %v3438 = vadd.f32 0.0, %v3437
  %3439 = vmatmul.f32.gmra.mxu0 %v3280
  %v3440 = vpop.f32.mrf.mxu0
  %v3441 = vadd.f32 0.0, %v3440
  %3442 = vmatmul.f32.gmra.mxu0 %v3283
  %v3443 = vpop.f32.mrf.mxu0
  %v3444 = vadd.f32 0.0, %v3443
  %3445 = vmatmul.f32.gmra.mxu0 %v3286
  %v3446 = vpop.f32.mrf.mxu0
  %v3447 = vadd.f32 0.0, %v3446
  %3448 = vmatmul.f32.gmra.mxu0 %v3289
  %v3449 = vpop.f32.mrf.mxu0
  %v3450 = vadd.f32 0.0, %v3449
  %3451 = vmatmul.f32.gmra.mxu0 %v3292
  %v3452 = vpop.f32.mrf.mxu0
  %v3453 = vadd.f32 0.0, %v3452
  %3454 = vmatmul.f32.gmra.mxu0 %v3295
  %v3455 = vpop.f32.mrf.mxu0
  %v3456 = vadd.f32 0.0, %v3455
  %3457 = vmatmul.f32.gmra.mxu0 %v3298
  %v3458 = vpop.f32.mrf.mxu0
  %v3459 = vadd.f32 0.0, %v3458
  %3460 = vmatmul.f32.gmra.mxu0 %v3301
  %v3461 = vpop.f32.mrf.mxu0
  %v3462 = vadd.f32 0.0, %v3461
  %3463 = vmatmul.f32.gmra.mxu0 %v3304
  %v3464 = vpop.f32.mrf.mxu0
  %v3465 = vadd.f32 0.0, %v3464
  %3466 = vmatmul.f32.gmra.mxu0 %v3307
  %v3467 = vpop.f32.mrf.mxu0
  %v3468 = vadd.f32 0.0, %v3467
  %3469 = vmatmul.f32.gmra.mxu0 %v3310
  %v3470 = vpop.f32.mrf.mxu0
  %v3471 = vadd.f32 0.0, %v3470
  %3472 = vmatmul.f32.gmra.mxu0 %v3313
  %v3473 = vpop.f32.mrf.mxu0
  %v3474 = vadd.f32 0.0, %v3473
  %3475 = vmatmul.f32.gmra.mxu0 %v3316
  %v3476 = vpop.f32.mrf.mxu0
  %v3477 = vadd.f32 0.0, %v3476
  %3478 = vmatmul.f32.gmra.mxu0 %v3319
  %v3479 = vpop.f32.mrf.mxu0
  %v3480 = vadd.f32 0.0, %v3479
  %3481 = vmatmul.f32.gmra.mxu0 %v3322
  %v3482 = vpop.f32.mrf.mxu0
  %v3483 = vadd.f32 0.0, %v3482
  %3484 = vmatmul.f32.gmra.mxu0 %v3325
  %v3485 = vpop.f32.mrf.mxu0
  %v3486 = vadd.f32 0.0, %v3485
  %3487 = vmatmul.f32.gmra.mxu0 %v3328
  %v3488 = vpop.f32.mrf.mxu0
  %v3489 = vadd.f32 0.0, %v3488
  %3490 = vmatmul.f32.gmra.mxu0 %v3331
  %v3491 = vpop.f32.mrf.mxu0
  %v3492 = vadd.f32 0.0, %v3491
  %3493 = vmatmul.f32.gmra.mxu0 %v3334
  %v3494 = vpop.f32.mrf.mxu0
  %v3495 = vadd.f32 0.0, %v3494
  %3496 = vmatmul.f32.gmra.mxu0 %v3337
  %v3497 = vpop.f32.mrf.mxu0
  %v3498 = vadd.f32 0.0, %v3497
  %3499 = vmatmul.f32.gmra.mxu0 %v3340
  %v3500 = vpop.f32.mrf.mxu0
  %v3501 = vadd.f32 0.0, %v3500
  %3502 = vmatmul.f32.gmra.mxu0 %v3343
  %v3503 = vpop.f32.mrf.mxu0
  %v3504 = vadd.f32 0.0, %v3503
  %3505 = vmatmul.f32.gmra.mxu0 %v3346
  %v3506 = vpop.f32.mrf.mxu0
  %v3507 = vadd.f32 0.0, %v3506
  %3508 = vmatmul.f32.gmra.mxu0 %v3349
  %v3509 = vpop.f32.mrf.mxu0
  %v3510 = vadd.f32 0.0, %v3509
  %3511 = vdwg.mxu0
  %v3512 = vmul.f32 %v3369, %v2722
  %v3513 = vmul.f32 %v3372, %v2725
  %v3514 = vmul.f32 %v3375, %v2728
  %v3515 = vmul.f32 %v3378, %v2731
  %v3516 = vmul.f32 %v3381, %v2734
  %v3517 = vmul.f32 %v3384, %v2737
  %v3518 = vmul.f32 %v3387, %v2740
  %v3519 = vmul.f32 %v3390, %v2743
  %v3520 = vmul.f32 %v3393, %v2746
  %v3521 = vmul.f32 %v3396, %v2749
  %v3522 = vmul.f32 %v3399, %v2752
  %v3523 = vmul.f32 %v3402, %v2755
  %v3524 = vmul.f32 %v3405, %v2758
  %v3525 = vmul.f32 %v3408, %v2761
  %v3526 = vmul.f32 %v3411, %v2764
  %v3527 = vmul.f32 %v3414, %v2767
  %v3528 = vmul.f32 %v3417, %v2770
  %v3529 = vmul.f32 %v3420, %v2773
  %v3530 = vmul.f32 %v3423, %v2776
  %v3531 = vmul.f32 %v3426, %v2779
  %v3532 = vmul.f32 %v3429, %v2782
  %v3533 = vmul.f32 %v3432, %v2785
  %v3534 = vmul.f32 %v3435, %v2788
  %v3535 = vmul.f32 %v3438, %v2791
  %v3536 = vmul.f32 %v3441, %v2794
  %v3537 = vmul.f32 %v3444, %v2797
  %v3538 = vmul.f32 %v3447, %v2800
  %v3539 = vmul.f32 %v3450, %v2803
  %v3540 = vmul.f32 %v3453, %v2806
  %v3541 = vmul.f32 %v3456, %v2809
  %v3542 = vmul.f32 %v3459, %v2812
  %v3543 = vmul.f32 %v3462, %v2815
  %v3544 = vmul.f32 %v3465, %v2818
  %v3545 = vmul.f32 %v3468, %v2821
  %v3546 = vmul.f32 %v3471, %v2824
  %v3547 = vmul.f32 %v3474, %v2827
  %v3548 = vmul.f32 %v3477, %v2830
  %v3549 = vmul.f32 %v3480, %v2833
  %v3550 = vmul.f32 %v3483, %v2836
  %v3551 = vmul.f32 %v3486, %v2839
  %v3552 = vmul.f32 %v3489, %v2842
  %v3553 = vmul.f32 %v3492, %v2845
  %v3554 = vmul.f32 %v3495, %v2848
  %v3555 = vmul.f32 %v3498, %v2851
  %v3556 = vmul.f32 %v3501, %v2854
  %v3557 = vmul.f32 %v3504, %v2857
  %v3558 = vmul.f32 %v3507, %v2860
  %v3559 = vmul.f32 %v3510, %v2863
  %v3560 = vld [vmem:[%s9] sm:$0xff]
  %v3561 = vld [vmem:[%s9 + $0x8] sm:$0xff]
  %v3562 = vld [vmem:[%s9 + $0x10] sm:$0xff]
  %v3563 = vld [vmem:[%s9 + $0x18] sm:$0xff]
  %v3565 = vsel %vm1332, %v3512, 0
  %v3568 = vsel %vm1332, %v3513, 0
  %v3571 = vsel %vm1332, %v3514, 0
  %v3574 = vsel %vm1332, %v3515, 0
  %v3577 = vsel %vm1332, %v3516, 0
  %v3580 = vsel %vm1332, %v3517, 0
  %v3583 = vsel %vm1332, %v3518, 0
  %v3586 = vsel %vm1332, %v3519, 0
  %v3589 = vsel %vm1332, %v3520, 0
  %v3592 = vsel %vm1332, %v3521, 0
  %v3595 = vsel %vm1332, %v3522, 0
  %v3598 = vsel %vm1332, %v3523, 0
  %v3601 = vsel %vm1332, %v3524, 0
  %v3604 = vsel %vm1332, %v3525, 0
  %v3607 = vsel %vm1332, %v3526, 0
  %v3610 = vsel %vm1332, %v3527, 0
  %v3613 = vsel %vm1332, %v3528, 0
  %v3616 = vsel %vm1332, %v3529, 0
  %v3619 = vsel %vm1332, %v3530, 0
  %v3622 = vsel %vm1332, %v3531, 0
  %v3625 = vsel %vm1332, %v3532, 0
  %v3628 = vsel %vm1332, %v3533, 0
  %v3631 = vsel %vm1332, %v3534, 0
  %v3634 = vsel %vm1332, %v3535, 0
  %v3637 = vsel %vm1332, %v3536, 0
  %v3640 = vsel %vm1332, %v3537, 0
  %v3643 = vsel %vm1332, %v3538, 0
  %v3646 = vsel %vm1332, %v3539, 0
  %v3649 = vsel %vm1332, %v3540, 0
  %v3652 = vsel %vm1332, %v3541, 0
  %v3655 = vsel %vm1332, %v3542, 0
  %v3658 = vsel %vm1332, %v3543, 0
  %v3661 = vsel %vm1332, %v3544, 0
  %v3664 = vsel %vm1332, %v3545, 0
  %v3667 = vsel %vm1332, %v3546, 0
  %v3670 = vsel %vm1332, %v3547, 0
  %v3673 = vsel %vm1332, %v3548, 0
  %v3676 = vsel %vm1332, %v3549, 0
  %v3679 = vsel %vm1332, %v3550, 0
  %v3682 = vsel %vm1332, %v3551, 0
  %v3685 = vsel %vm1332, %v3552, 0
  %v3688 = vsel %vm1332, %v3553, 0
  %v3691 = vsel %vm1332, %v3554, 0
  %v3694 = vsel %vm1332, %v3555, 0
  %v3697 = vsel %vm1332, %v3556, 0
  %v3700 = vsel %vm1332, %v3557, 0
  %v3703 = vsel %vm1332, %v3558, 0
  %v3706 = vsel %vm1332, %v3559, 0
  %3708 = vmatpush.msra.mxu0 0.0
  %3709 = vmatpush.msra.mxu0 0.0
  %3710 = vmatpush.msra.mxu0 0.0
  %3711 = vmatpush.msra.mxu0 0.0
  %3712 = vmatpush.msra.mxu0 0.0
  %3713 = vmatpush.msra.mxu0 0.0
  %3714 = vmatpush.msra.mxu0 0.0
  %3715 = vmatpush.msra.mxu0 0.0
  %3716 = vmatpush.msra.mxu0 0.0
  %3717 = vmatpush.msra.mxu0 0.0
  %3718 = vmatpush.msra.mxu0 0.0
  %3719 = vmatpush.msra.mxu0 0.0
  %3720 = vmatpush.msra.mxu0 %v3563
  %3721 = vmatpush.msra.mxu0 %v3562
  %3722 = vmatpush.msra.mxu0 %v3561
  %3723 = vmatpush.msra.mxu0 %v3560
  %3724 = vmatmul.f32.gmra.mxu0 %v3565
  %v3725 = vpop.f32.mrf.mxu0
  %v3726 = vadd.f32 0.0, %v3725
  %3727 = vmatmul.f32.gmra.mxu0 %v3568
  %v3728 = vpop.f32.mrf.mxu0
  %v3729 = vadd.f32 0.0, %v3728
  %3730 = vmatmul.f32.gmra.mxu0 %v3571
  %v3731 = vpop.f32.mrf.mxu0
  %v3732 = vadd.f32 0.0, %v3731
  %3733 = vmatmul.f32.gmra.mxu0 %v3574
  %v3734 = vpop.f32.mrf.mxu0
  %v3735 = vadd.f32 0.0, %v3734
  %3736 = vmatmul.f32.gmra.mxu0 %v3577
  %v3737 = vpop.f32.mrf.mxu0
  %v3738 = vadd.f32 0.0, %v3737
  %3739 = vmatmul.f32.gmra.mxu0 %v3580
  %v3740 = vpop.f32.mrf.mxu0
  %v3741 = vadd.f32 0.0, %v3740
  %3742 = vmatmul.f32.gmra.mxu0 %v3583
  %v3743 = vpop.f32.mrf.mxu0
  %v3744 = vadd.f32 0.0, %v3743
  %3745 = vmatmul.f32.gmra.mxu0 %v3586
  %v3746 = vpop.f32.mrf.mxu0
  %v3747 = vadd.f32 0.0, %v3746
  %3748 = vmatmul.f32.gmra.mxu0 %v3589
  %v3749 = vpop.f32.mrf.mxu0
  %v3750 = vadd.f32 0.0, %v3749
  %3751 = vmatmul.f32.gmra.mxu0 %v3592
  %v3752 = vpop.f32.mrf.mxu0
  %v3753 = vadd.f32 0.0, %v3752
  %3754 = vmatmul.f32.gmra.mxu0 %v3595
  %v3755 = vpop.f32.mrf.mxu0
  %v3756 = vadd.f32 0.0, %v3755
  %3757 = vmatmul.f32.gmra.mxu0 %v3598
  %v3758 = vpop.f32.mrf.mxu0
  %v3759 = vadd.f32 0.0, %v3758
  %3760 = vmatmul.f32.gmra.mxu0 %v3601
  %v3761 = vpop.f32.mrf.mxu0
  %v3762 = vadd.f32 0.0, %v3761
  %3763 = vmatmul.f32.gmra.mxu0 %v3604
  %v3764 = vpop.f32.mrf.mxu0
  %v3765 = vadd.f32 0.0, %v3764
  %3766 = vmatmul.f32.gmra.mxu0 %v3607
  %v3767 = vpop.f32.mrf.mxu0
  %v3768 = vadd.f32 0.0, %v3767
  %3769 = vmatmul.f32.gmra.mxu0 %v3610
  %v3770 = vpop.f32.mrf.mxu0
  %v3771 = vadd.f32 0.0, %v3770
  %3772 = vmatmul.f32.gmra.mxu0 %v3613
  %v3773 = vpop.f32.mrf.mxu0
  %v3774 = vadd.f32 0.0, %v3773
  %3775 = vmatmul.f32.gmra.mxu0 %v3616
  %v3776 = vpop.f32.mrf.mxu0
  %v3777 = vadd.f32 0.0, %v3776
  %3778 = vmatmul.f32.gmra.mxu0 %v3619
  %v3779 = vpop.f32.mrf.mxu0
  %v3780 = vadd.f32 0.0, %v3779
  %3781 = vmatmul.f32.gmra.mxu0 %v3622
  %v3782 = vpop.f32.mrf.mxu0
  %v3783 = vadd.f32 0.0, %v3782
  %3784 = vmatmul.f32.gmra.mxu0 %v3625
  %v3785 = vpop.f32.mrf.mxu0
  %v3786 = vadd.f32 0.0, %v3785
  %3787 = vmatmul.f32.gmra.mxu0 %v3628
  %v3788 = vpop.f32.mrf.mxu0
  %v3789 = vadd.f32 0.0, %v3788
  %3790 = vmatmul.f32.gmra.mxu0 %v3631
  %v3791 = vpop.f32.mrf.mxu0
  %v3792 = vadd.f32 0.0, %v3791
  %3793 = vmatmul.f32.gmra.mxu0 %v3634
  %v3794 = vpop.f32.mrf.mxu0
  %v3795 = vadd.f32 0.0, %v3794
  %3796 = vmatmul.f32.gmra.mxu0 %v3637
  %v3797 = vpop.f32.mrf.mxu0
  %v3798 = vadd.f32 0.0, %v3797
  %3799 = vmatmul.f32.gmra.mxu0 %v3640
  %v3800 = vpop.f32.mrf.mxu0
  %v3801 = vadd.f32 0.0, %v3800
  %3802 = vmatmul.f32.gmra.mxu0 %v3643
  %v3803 = vpop.f32.mrf.mxu0
  %v3804 = vadd.f32 0.0, %v3803
  %3805 = vmatmul.f32.gmra.mxu0 %v3646
  %v3806 = vpop.f32.mrf.mxu0
  %v3807 = vadd.f32 0.0, %v3806
  %3808 = vmatmul.f32.gmra.mxu0 %v3649
  %v3809 = vpop.f32.mrf.mxu0
  %v3810 = vadd.f32 0.0, %v3809
  %3811 = vmatmul.f32.gmra.mxu0 %v3652
  %v3812 = vpop.f32.mrf.mxu0
  %v3813 = vadd.f32 0.0, %v3812
  %3814 = vmatmul.f32.gmra.mxu0 %v3655
  %v3815 = vpop.f32.mrf.mxu0
  %v3816 = vadd.f32 0.0, %v3815
  %3817 = vmatmul.f32.gmra.mxu0 %v3658
  %v3818 = vpop.f32.mrf.mxu0
  %v3819 = vadd.f32 0.0, %v3818
  %3820 = vmatmul.f32.gmra.mxu0 %v3661
  %v3821 = vpop.f32.mrf.mxu0
  %v3822 = vadd.f32 0.0, %v3821
  %3823 = vmatmul.f32.gmra.mxu0 %v3664
  %v3824 = vpop.f32.mrf.mxu0
  %v3825 = vadd.f32 0.0, %v3824
  %3826 = vmatmul.f32.gmra.mxu0 %v3667
  %v3827 = vpop.f32.mrf.mxu0
  %v3828 = vadd.f32 0.0, %v3827
  %3829 = vmatmul.f32.gmra.mxu0 %v3670
  %v3830 = vpop.f32.mrf.mxu0
  %v3831 = vadd.f32 0.0, %v3830
  %3832 = vmatmul.f32.gmra.mxu0 %v3673
  %v3833 = vpop.f32.mrf.mxu0
  %v3834 = vadd.f32 0.0, %v3833
  %3835 = vmatmul.f32.gmra.mxu0 %v3676
  %v3836 = vpop.f32.mrf.mxu0
  %v3837 = vadd.f32 0.0, %v3836
  %3838 = vmatmul.f32.gmra.mxu0 %v3679
  %v3839 = vpop.f32.mrf.mxu0
  %v3840 = vadd.f32 0.0, %v3839
  %3841 = vmatmul.f32.gmra.mxu0 %v3682
  %v3842 = vpop.f32.mrf.mxu0
  %v3843 = vadd.f32 0.0, %v3842
  %3844 = vmatmul.f32.gmra.mxu0 %v3685
  %v3845 = vpop.f32.mrf.mxu0
  %v3846 = vadd.f32 0.0, %v3845
  %3847 = vmatmul.f32.gmra.mxu0 %v3688
  %v3848 = vpop.f32.mrf.mxu0
  %v3849 = vadd.f32 0.0, %v3848
  %3850 = vmatmul.f32.gmra.mxu0 %v3691
  %v3851 = vpop.f32.mrf.mxu0
  %v3852 = vadd.f32 0.0, %v3851
  %3853 = vmatmul.f32.gmra.mxu0 %v3694
  %v3854 = vpop.f32.mrf.mxu0
  %v3855 = vadd.f32 0.0, %v3854
  %3856 = vmatmul.f32.gmra.mxu0 %v3697
  %v3857 = vpop.f32.mrf.mxu0
  %v3858 = vadd.f32 0.0, %v3857
  %3859 = vmatmul.f32.gmra.mxu0 %v3700
  %v3860 = vpop.f32.mrf.mxu0
  %v3861 = vadd.f32 0.0, %v3860
  %3862 = vmatmul.f32.gmra.mxu0 %v3703
  %v3863 = vpop.f32.mrf.mxu0
  %v3864 = vadd.f32 0.0, %v3863
  %3865 = vmatmul.f32.gmra.mxu0 %v3706
  %v3866 = vpop.f32.mrf.mxu0
  %v3867 = vadd.f32 0.0, %v3866
  %3868 = vdwg.mxu0
  %v3869 = vld [vmem:[%s3] sm:$0x7]
  %v3870 = vlaneseq
  %v3871 = vshrl.u32 %v3870, 7
  %v3872 = vadd.s32 %v3871, 8
  %v3873 = vadd.s32 %v3871, 16
  %v3874 = vadd.s32 %v3871, 24
  %v3875 = vperm.slane %v3869, 0
  %v3876 = vperm.slane %v3869, 1
  %v3877 = vperm.slane %v3869, 2
  %vm3878 = vcmp.eq.s32.totalorder %v3871, %v3875
  %vm3879 = vcmp.eq.s32.totalorder %v3871, %v3876
  %vm3880 = vcmp.eq.s32.totalorder %v3871, %v3877
  %vm3881 = vcmp.eq.s32.totalorder %v3872, %v3875
  %vm3882 = vcmp.eq.s32.totalorder %v3872, %v3876
  %vm3883 = vcmp.eq.s32.totalorder %v3872, %v3877
  %vm3884 = vcmp.eq.s32.totalorder %v3873, %v3875
  %vm3885 = vcmp.eq.s32.totalorder %v3873, %v3876
  %vm3886 = vcmp.eq.s32.totalorder %v3873, %v3877
  %vm3887 = vcmp.eq.s32.totalorder %v3874, %v3875
  %vm3888 = vcmp.eq.s32.totalorder %v3874, %v3876
  %vm3889 = vcmp.eq.s32.totalorder %v3874, %v3877
  %v3890 = vld [vmem:[#allocation2] sm:$0xff]
  %v3891 = vld [vmem:[#allocation2 + $0x8] sm:$0xff]
  %v3892 = vld [vmem:[#allocation2 + $0x10] sm:$0xff]
  %v3893 = vld [vmem:[#allocation2 + $0x18] sm:$0xff]
  %v3894 = vsel %vm3878, 1, 0
  %v3895 = vsel %vm3879, 1, 0
  %v3896 = vsel %vm3880, 1, 0
  %v3897 = vsel %vm3881, 1, 0
  %v3898 = vsel %vm3882, 1, 0
  %v3899 = vsel %vm3883, 1, 0
  %v3900 = vsel %vm3884, 1, 0
  %v3901 = vsel %vm3885, 1, 0
  %v3902 = vsel %vm3886, 1, 0
  %v3903 = vsel %vm3887, 1, 0
  %v3904 = vsel %vm3888, 1, 0
  %v3905 = vsel %vm3889, 1, 0
  %v3906 = vcvt.s32.f32 %v3894
  %v3907 = vcvt.s32.f32 %v3895
  %v3908 = vcvt.s32.f32 %v3896
  %v3909 = vcvt.s32.f32 %v3897
  %v3910 = vcvt.s32.f32 %v3898
  %v3911 = vcvt.s32.f32 %v3899
  %v3912 = vcvt.s32.f32 %v3900
  %v3913 = vcvt.s32.f32 %v3901
  %v3914 = vcvt.s32.f32 %v3902
  %v3915 = vcvt.s32.f32 %v3903
  %v3916 = vcvt.s32.f32 %v3904
  %v3917 = vcvt.s32.f32 %v3905
  %3918 = vmatpush.msra.mxu0 %v3771
  %3919 = vmatpush.msra.mxu0 %v3768
  %3920 = vmatpush.msra.mxu0 %v3765
  %3921 = vmatpush.msra.mxu0 %v3762
  %3922 = vmatpush.msra.mxu0 %v3759
  %3923 = vmatpush.msra.mxu0 %v3756
  %3924 = vmatpush.msra.mxu0 %v3753
  %3925 = vmatpush.msra.mxu0 %v3750
  %3926 = vmatpush.msra.mxu0 %v3747
  %3927 = vmatpush.msra.mxu0 %v3744
  %3928 = vmatpush.msra.mxu0 %v3741
  %3929 = vmatpush.msra.mxu0 %v3738
  %3930 = vmatpush.msra.mxu0 %v3735
  %3931 = vmatpush.msra.mxu0 %v3732
  %3932 = vmatpush.msra.mxu0 %v3729
  %3933 = vmatpush.msra.mxu0 %v3726
  %3934 = vmatmul.f32.gmra.mxu0 %v3906
  %v3935 = vpop.f32.mrf.mxu0
  %v3936 = vadd.f32 0.0, %v3935
  %3937 = vmatmul.f32.gmra.mxu0 %v3909
  %v3938 = vpop.f32.mrf.mxu0
  %v3939 = vadd.f32 0.0, %v3938
  %3940 = vmatmul.f32.gmra.mxu0 %v3912
  %v3941 = vpop.f32.mrf.mxu0
  %v3942 = vadd.f32 0.0, %v3941
  %3943 = vmatmul.f32.gmra.mxu0 %v3915
  %v3944 = vpop.f32.mrf.mxu0
  %v3945 = vadd.f32 0.0, %v3944
  %3946 = vdwg.mxu0
  %3947 = vmatpush.msra.mxu0 %v3819
  %3948 = vmatpush.msra.mxu0 %v3816
  %3949 = vmatpush.msra.mxu0 %v3813
  %3950 = vmatpush.msra.mxu0 %v3810
  %3951 = vmatpush.msra.mxu0 %v3807
  %3952 = vmatpush.msra.mxu0 %v3804
  %3953 = vmatpush.msra.mxu0 %v3801
  %3954 = vmatpush.msra.mxu0 %v3798
  %3955 = vmatpush.msra.mxu0 %v3795
  %3956 = vmatpush.msra.mxu0 %v3792
  %3957 = vmatpush.msra.mxu0 %v3789
  %3958 = vmatpush.msra.mxu0 %v3786
  %3959 = vmatpush.msra.mxu0 %v3783
  %3960 = vmatpush.msra.mxu0 %v3780
  %3961 = vmatpush.msra.mxu0 %v3777
  %3962 = vmatpush.msra.mxu0 %v3774
  %3963 = vmatmul.f32.gmra.mxu0 %v3907
  %v3964 = vpop.f32.mrf.mxu0
  %v3965 = vadd.f32 %v3936, %v3964
  %3966 = vmatmul.f32.gmra.mxu0 %v3910
  %v3967 = vpop.f32.mrf.mxu0
  %v3968 = vadd.f32 %v3939, %v3967
  %3969 = vmatmul.f32.gmra.mxu0 %v3913
  %v3970 = vpop.f32.mrf.mxu0
  %v3971 = vadd.f32 %v3942, %v3970
  %3972 = vmatmul.f32.gmra.mxu0 %v3916
  %v3973 = vpop.f32.mrf.mxu0
  %v3974 = vadd.f32 %v3945, %v3973
  %3975 = vdwg.mxu0
  %3976 = vmatpush.msra.mxu0 %v3867
  %3977 = vmatpush.msra.mxu0 %v3864
  %3978 = vmatpush.msra.mxu0 %v3861
  %3979 = vmatpush.msra.mxu0 %v3858
  %3980 = vmatpush.msra.mxu0 %v3855
  %3981 = vmatpush.msra.mxu0 %v3852
  %3982 = vmatpush.msra.mxu0 %v3849
  %3983 = vmatpush.msra.mxu0 %v3846
  %3984 = vmatpush.msra.mxu0 %v3843
  %3985 = vmatpush.msra.mxu0 %v3840
  %3986 = vmatpush.msra.mxu0 %v3837
  %3987 = vmatpush.msra.mxu0 %v3834
  %3988 = vmatpush.msra.mxu0 %v3831
  %3989 = vmatpush.msra.mxu0 %v3828
  %3990 = vmatpush.msra.mxu0 %v3825
  %3991 = vmatpush.msra.mxu0 %v3822
  %3992 = vmatmul.f32.gmra.mxu0 %v3908
  %v3993 = vpop.f32.mrf.mxu0
  %v3994 = vadd.f32 %v3965, %v3993
  %3995 = vmatmul.f32.gmra.mxu0 %v3911
  %v3996 = vpop.f32.mrf.mxu0
  %v3997 = vadd.f32 %v3968, %v3996
  %3998 = vmatmul.f32.gmra.mxu0 %v3914
  %v3999 = vpop.f32.mrf.mxu0
  %v4000 = vadd.f32 %v3971, %v3999
  %4001 = vmatmul.f32.gmra.mxu0 %v3917
  %v4002 = vpop.f32.mrf.mxu0
  %v4003 = vadd.f32 %v3974, %v4002
  %4004 = vdwg.mxu0
  %v4005 = vadd.f32 %v3890, %v3994
  %v4006 = vadd.f32 %v3891, %v3997
  %v4007 = vadd.f32 %v3892, %v4000
  %v4008 = vadd.f32 %v3893, %v4003
  %vm4009 = vcmask 64512
  %4010 = vst.msk [vmem:[#allocation2] sm:$0xff] %vm4009, %v4005
  %4011 = vst.msk [vmem:[#allocation2 + $0x8] sm:$0xff] %vm4009, %v4006
  %4012 = vst.msk [vmem:[#allocation2 + $0x10] sm:$0xff] %vm4009, %v4007
  %4013 = vst.msk [vmem:[#allocation2 + $0x18] sm:$0xff] %vm4009, %v4008
  %v4014 = vld [vmem:[#allocation3] sm:$0xff]
  %v4015 = vld [vmem:[#allocation3 + $0x8] sm:$0xff]
  %v4016 = vld [vmem:[#allocation3 + $0x10] sm:$0xff]
  %v4017 = vld [vmem:[#allocation3 + $0x18] sm:$0xff]
  %v4018 = vadd.f32 %v3906, %v3907
  %v4019 = vadd.f32 %v4018, %v3908
  %4020 = vadd.xlane.f32.xlu0 %v4019
  %v4021 = vpop.xlane.xlu0 %4020
  %v4022 = vadd.f32 %v3909, %v3910
  %v4023 = vadd.f32 %v4022, %v3911
  %4024 = vadd.xlane.f32.xlu0 %v4023
  %v4025 = vpop.xlane.xlu0 %4024
  %v4026 = vadd.f32 %v3912, %v3913
  %v4027 = vadd.f32 %v4026, %v3914
  %4028 = vadd.xlane.f32.xlu0 %v4027
  %v4029 = vpop.xlane.xlu0 %4028
  %v4030 = vadd.f32 %v3915, %v3916
  %v4031 = vadd.f32 %v4030, %v3917
  %4032 = vadd.xlane.f32.xlu0 %v4031
  %v4033 = vpop.xlane.xlu0 %4032
  %v4034 = vadd.f32 %v4014, %v4021
  %v4035 = vadd.f32 %v4015, %v4025
  %v4036 = vadd.f32 %v4016, %v4029
  %v4037 = vadd.f32 %v4017, %v4033
  %vm4038 = vcmask 7168
  %4039 = vst.msk [vmem:[#allocation3] sm:$0xff] %vm4038, %v4034
  %4040 = vst.msk [vmem:[#allocation3 + $0x8] sm:$0xff] %vm4038, %v4035
  %4041 = vst.msk [vmem:[#allocation3 + $0x10] sm:$0xff] %vm4038, %v4036
  %4042 = vst.msk [vmem:[#allocation3 + $0x18] sm:$0xff] %vm4038, %v4037
  // Predicated region
  $region50: #{tpu_custom_call.1} parent=0 // pred_check
    %p4043 = pneg %p38
  $region51: #{tpu_custom_call.1} parent=0 // pred_check_branch
    %4045 = sbr.rel (%p4043) target = $region53
  $region52: #{tpu_custom_call.1} parent=0 // pred_region
    %v4046 = vld [vmem:[%s10 + $0x3] sm:$0x1]
    %v4047 = vld [vmem:[%s10 + $0x4] sm:$0x1]
    %v4048 = vld [vmem:[%s10 + $0x5] sm:$0x1]
    %v4049 = vld [vmem:[#allocation3] sm:$0xff]
    %v4050 = vld [vmem:[#allocation3 + $0x8] sm:$0xff]
    %v4051 = vld [vmem:[#allocation3 + $0x10] sm:$0xff]
    %v4052 = vld [vmem:[#allocation3 + $0x18] sm:$0xff]
    %v4053 = vmax.f32 %v4049, 1.0
    %v4054 = vmax.f32 %v4050, 1.0
    %v4055 = vmax.f32 %v4051, 1.0
    %v4056 = vmax.f32 %v4052, 1.0
    %v4057 = vrcp.pop %v4053
    %v4058 = vmul.f32 %v4053, %v4057
    %v4059 = vsub.f32 1.0, %v4058
    %v4060 = vmul.f32 %v4057, %v4059
    %v4061 = vadd.f32 %v4057, %v4060
    %vm4062 = vweird.f32 %v4053
    %vm4063 = vweird.f32 %v4057
    %vm4064 = vmor %vm4062, %vm4063
    %v4065 = vsel %vm4064, %v4057, %v4061
    %v4066 = vand.u32 2147483647, %v4053
    %vm4067 = vcmp.eq.f32.partialorder %v4066, 8.507059e+37
    %v4068 = vand.u32 %v4053, 2147483648
    %v4069 = vor.u32 1.1754944e-38, %v4068
    %v4070 = vsel %vm4067, %v4069, %v4065
    %v4071 = vmul.f32 1.0, %v4070
    %v4072 = vrcp.pop %v4054
    %v4073 = vmul.f32 %v4054, %v4072
    %v4074 = vsub.f32 1.0, %v4073
    %v4075 = vmul.f32 %v4072, %v4074
    %v4076 = vadd.f32 %v4072, %v4075
    %vm4077 = vweird.f32 %v4054
    %vm4078 = vweird.f32 %v4072
    %vm4079 = vmor %vm4077, %vm4078
    %v4080 = vsel %vm4079, %v4072, %v4076
    %v4081 = vand.u32 2147483647, %v4054
    %vm4082 = vcmp.eq.f32.partialorder %v4081, 8.507059e+37
    %v4083 = vand.u32 %v4054, 2147483648
    %v4084 = vor.u32 1.1754944e-38, %v4083
    %v4085 = vsel %vm4082, %v4084, %v4080
    %v4086 = vmul.f32 1.0, %v4085
    %v4087 = vrcp.pop %v4055
    %v4088 = vmul.f32 %v4055, %v4087
    %v4089 = vsub.f32 1.0, %v4088
    %v4090 = vmul.f32 %v4087, %v4089
    %v4091 = vadd.f32 %v4087, %v4090
    %vm4092 = vweird.f32 %v4055
    %vm4093 = vweird.f32 %v4087
    %vm4094 = vmor %vm4092, %vm4093
    %v4095 = vsel %vm4094, %v4087, %v4091
    %v4096 = vand.u32 2147483647, %v4055
    %vm4097 = vcmp.eq.f32.partialorder %v4096, 8.507059e+37
    %v4098 = vand.u32 %v4055, 2147483648
    %v4099 = vor.u32 1.1754944e-38, %v4098
    %v4100 = vsel %vm4097, %v4099, %v4095
    %v4101 = vmul.f32 1.0, %v4100
    %v4102 = vrcp.pop %v4056
    %v4103 = vmul.f32 %v4056, %v4102
    %v4104 = vsub.f32 1.0, %v4103
    %v4105 = vmul.f32 %v4102, %v4104
    %v4106 = vadd.f32 %v4102, %v4105
    %vm4107 = vweird.f32 %v4056
    %vm4108 = vweird.f32 %v4102
    %vm4109 = vmor %vm4107, %vm4108
    %v4110 = vsel %vm4109, %v4102, %v4106
    %v4111 = vand.u32 2147483647, %v4056
    %vm4112 = vcmp.eq.f32.partialorder %v4111, 8.507059e+37
    %v4113 = vand.u32 %v4056, 2147483648
    %v4114 = vor.u32 1.1754944e-38, %v4113
    %v4115 = vsel %vm4112, %v4114, %v4110
    %v4116 = vmul.f32 1.0, %v4115
    %v4117 = vld [vmem:[#allocation2] sm:$0xff]
    %v4118 = vld [vmem:[#allocation2 + $0x8] sm:$0xff]
    %v4119 = vld [vmem:[#allocation2 + $0x10] sm:$0xff]
    %v4120 = vld [vmem:[#allocation2 + $0x18] sm:$0xff]
    %4122 = vset.pattern.permute.xlu0 0
    %4123 = vperm.xlu0 %4122, %v4071
    %v4124 = vpop.permute.xlu0 %4123
    %4127 = vset.pattern.permute.xlu0 0
    %4128 = vperm.xlu0 %4127, %v4086
    %v4129 = vpop.permute.xlu0 %4128
    %4132 = vset.pattern.permute.xlu0 0
    %4133 = vperm.xlu0 %4132, %v4101
    %v4134 = vpop.permute.xlu0 %4133
    %4137 = vset.pattern.permute.xlu0 0
    %4138 = vperm.xlu0 %4137, %v4116
    %v4139 = vpop.permute.xlu0 %4138
    %v4141 = vmul.f32 %v4117, %v4124
    %v4142 = vmul.f32 %v4118, %v4129
    %v4143 = vmul.f32 %v4119, %v4134
    %v4144 = vmul.f32 %v4120, %v4139
    %v4145 = vld [vmem:[%s1] sm:$0xff]
    %v4146 = vld [vmem:[%s1 + $0x8] sm:$0xff]
    %v4147 = vld [vmem:[%s1 + $0x10] sm:$0xff]
    %v4148 = vld [vmem:[%s1 + $0x18] sm:$0xff]
    %v4149 = vld [vmem:[%s8] sm:$0xf]
    %vm4150 = vcmask 31744
    %v4152 = vsel %vm4150, %v4145, 0
    %v4155 = vsel %vm4150, %v4146, 0
    %v4158 = vsel %vm4150, %v4147, 0
    %v4161 = vsel %vm4150, %v4148, 0
    %vm4163 = vcmask 1043456
    %v4165 = vsel %vm4163, %v4149, 0
    %4167 = vmatpush.msra.mxu0 0.0
    %4168 = vmatpush.msra.mxu0 0.0
    %4169 = vmatpush.msra.mxu0 0.0
    %4170 = vmatpush.msra.mxu0 0.0
    %4171 = vmatpush.msra.mxu0 0.0
    %4172 = vmatpush.msra.mxu0 0.0
    %4173 = vmatpush.msra.mxu0 0.0
    %4174 = vmatpush.msra.mxu0 0.0
    %4175 = vmatpush.msra.mxu0 0.0
    %4176 = vmatpush.msra.mxu0 0.0
    %4177 = vmatpush.msra.mxu0 0.0
    %4178 = vmatpush.msra.mxu0 0.0
    %4179 = vmatpush.msra.mxu0 0.0
    %4180 = vmatpush.msra.mxu0 0.0
    %4181 = vmatpush.msra.mxu0 0.0
    %4182 = vmatpush.msra.mxu0 %v4165
    %4183 = vmatmul.f32.gmra.mxu0 %v4152
    %v4184 = vpop.f32.mrf.mxu0
    %v4185 = vadd.f32 0.0, %v4184
    %4186 = vmatmul.f32.gmra.mxu0 %v4155
    %v4187 = vpop.f32.mrf.mxu0
    %v4188 = vadd.f32 0.0, %v4187
    %4189 = vmatmul.f32.gmra.mxu0 %v4158
    %v4190 = vpop.f32.mrf.mxu0
    %v4191 = vadd.f32 0.0, %v4190
    %4192 = vmatmul.f32.gmra.mxu0 %v4161
    %v4193 = vpop.f32.mrf.mxu0
    %v4194 = vadd.f32 0.0, %v4193
    %4195 = vdwg.mxu0
    %v4196 = vadd.f32 %v4141, %v4185
    %v4197 = vadd.f32 %v4142, %v4188
    %v4198 = vadd.f32 %v4143, %v4191
    %v4199 = vadd.f32 %v4144, %v4194
    %v4200 = vperm.slane %v4046, 0
    %v4201 = vadd.f32 %v4196, %v4200
    %v4202 = vadd.f32 %v4197, %v4200
    %v4203 = vadd.f32 %v4198, %v4200
    %v4204 = vadd.f32 %v4199, %v4200
    %vm4205 = vcmp.ge.f32.partialorder %v4201, 0.0
    %vm4206 = vcmp.ge.f32.partialorder %v4202, 0.0
    %vm4207 = vcmp.ge.f32.partialorder %v4203, 0.0
    %vm4208 = vcmp.ge.f32.partialorder %v4204, 0.0
    %v4209 = vmul.f32 %v4201, 0.01
    %v4210 = vmul.f32 %v4202, 0.01
    %v4211 = vmul.f32 %v4203, 0.01
    %v4212 = vmul.f32 %v4204, 0.01
    %v4213 = vsel %vm4205, %v4201, %v4209
    %v4214 = vsel %vm4206, %v4202, %v4210
    %v4215 = vsel %vm4207, %v4203, %v4211
    %v4216 = vsel %vm4208, %v4204, %v4212
    %v4217 = vsel %vm4009, %v4213, 0.0
    %v4218 = vsel %vm4009, %v4214, 0.0
    %v4219 = vadd.f32 %v4217, %v4218
    %v4220 = vsel %vm4009, %v4215, 0.0
    %v4221 = vadd.f32 %v4219, %v4220
    %v4222 = vsel %vm4009, %v4216, 0.0
    %v4223 = vadd.f32 %v4221, %v4222
    %v4224 = vrot.slane %v4223, 4
    %v4225 = vadd.f32 %v4223, %v4224
    %v4226 = vrot.slane %v4225, 2
    %v4227 = vadd.f32 %v4225, %v4226
    %v4228 = vrot.slane %v4227, 1
    %v4229 = vadd.f32 %v4227, %v4228
    %v4230 = vmul.f32 %v4229, 0.03125
    %v4231 = vmul.f32 %v4213, %v4213
    %v4232 = vmul.f32 %v4214, %v4214
    %v4233 = vmul.f32 %v4215, %v4215
    %v4234 = vmul.f32 %v4216, %v4216
    %v4235 = vsel %vm4009, %v4231, 0.0
    %v4236 = vsel %vm4009, %v4232, 0.0
    %v4237 = vadd.f32 %v4235, %v4236
    %v4238 = vsel %vm4009, %v4233, 0.0
    %v4239 = vadd.f32 %v4237, %v4238
    %v4240 = vsel %vm4009, %v4234, 0.0
    %v4241 = vadd.f32 %v4239, %v4240
    %v4242 = vrot.slane %v4241, 4
    %v4243 = vadd.f32 %v4241, %v4242
    %v4244 = vrot.slane %v4243, 2
    %v4245 = vadd.f32 %v4243, %v4244
    %v4246 = vrot.slane %v4245, 1
    %v4247 = vadd.f32 %v4245, %v4246
    %v4248 = vmul.f32 %v4247, 0.03125
    %v4249 = vmul.f32 %v4230, %v4230
    %v4250 = vsub.f32 %v4248, %v4249
    %v4251 = vsub.f32 %v4213, %v4230
    %v4252 = vsub.f32 %v4214, %v4230
    %v4253 = vsub.f32 %v4215, %v4230
    %v4254 = vsub.f32 %v4216, %v4230
    %v4255 = vadd.f32 %v4250, 1e-05
    %v4256 = vrsqrt.pop %v4255
    %v4257 = vmul.f32 %v4256, %v4255
    %v4258 = vmul.f32 %v4257, %v4256
    %v4259 = vmul.f32 0.5, %v4258
    %v4260 = vsub.f32 1.5, %v4259
    %v4261 = vmul.f32 %v4256, %v4260
    %vm4262 = vweird.f32 %v4255
    %vm4263 = vweird.f32 %v4256
    %vm4264 = vmor %vm4262, %vm4263
    %v4265 = vsel %vm4264, %v4256, %v4261
    %v4266 = vmul.f32 %v4251, %v4265
    %v4267 = vmul.f32 %v4252, %v4265
    %v4268 = vmul.f32 %v4253, %v4265
    %v4269 = vmul.f32 %v4254, %v4265
    %v4270 = vperm.slane %v4047, 0
    %v4271 = vmul.f32 %v4266, %v4270
    %v4272 = vmul.f32 %v4267, %v4270
    %v4273 = vmul.f32 %v4268, %v4270
    %v4274 = vmul.f32 %v4269, %v4270
    %v4275 = vperm.slane %v4048, 0
    %v4276 = vadd.f32 %v4271, %v4275
    %v4277 = vadd.f32 %v4272, %v4275
    %v4278 = vadd.f32 %v4273, %v4275
    %v4279 = vadd.f32 %v4274, %v4275
    %4280 = vst.msk [vmem:[%s11] sm:$0xff] %vm4009, %v4276
    %4281 = vst.msk [vmem:[%s11 + $0x8] sm:$0xff] %vm4009, %v4277
    %4282 = vst.msk [vmem:[%s11 + $0x10] sm:$0xff] %vm4009, %v4278
    %4283 = vst.msk [vmem:[%s11 + $0x18] sm:$0xff] %vm4009, %v4279
  $region53: #{tpu_custom_call.1} parent=0 // pred_fallthru
    _
  // Predicated region
  $region54: #{tpu_custom_call.1} parent=0 // pred_check
    _
  $region55: #{tpu_custom_call.1} parent=0 // pred_check_branch
    %4285 = sbr.rel (0) target = $region57
  $region56: #{tpu_custom_call.1} parent=0 // pred_region
    _
  $region57: #{tpu_custom_call.1} parent=0 // pred_fallthru
    _
  // Predicated region
  $region58: #{tpu_custom_call.1} parent=0 // pred_check
    _
  $region59: #{tpu_custom_call.1} parent=0 // pred_check_branch
    %4287 = sbr.rel (0) target = $region61
  $region60: #{tpu_custom_call.1} parent=0 // pred_region
    _
  $region61: #{tpu_custom_call.1} parent=0 // pred_fallthru
    _

</llo_original>
